<compile_context>
chip_gen: v7x
topology: tpu7x:2x2x1
jax: 0.10.0
libtpu: 0.0.40
codegen_flags: <defaults>
</compile_context>

<pallas_src>
import numpy as np

import jax
import jax.numpy as jnp
from jax.experimental import pallas as pl
from jax.experimental.pallas import tpu as pltpu


# ---------------------------------------------------------------------------
# Static layout of the single packed weight slab (row offsets, K rows, N cols)
# ---------------------------------------------------------------------------
_SLAB_LAYOUT = (
    ("w1",  5 * 128, 168),   # conv1 wide-K banded weights  (K = 5 taps x 128 lanes)
    ("p1e", 168, 128),       # pool1 width-selection, even wo
    ("p1o", 168, 128),       # pool1 width-selection, odd  wo
    ("w2",  5 * 128, 160),   # conv2 wide-K banded weights
    ("p2e", 160, 128),       # pool2 width-selection, even wo
    ("p2o", 160, 128),       # pool2 width-selection, odd  wo
    ("f1",  5 * 128, 128),   # fc1 (PyTorch flatten order folded in)
    ("f2",  128, 128),       # fc2
    ("f3",  128, 128),       # fc3
)
_SLAB_OFF = {}
_off = 0
for _name, _k, _n in _SLAB_LAYOUT:
    _SLAB_OFF[_name] = (_off, _k, _n)
    _off += _k
_SLAB_ROWS = _off            # 2832  (every offset is a multiple of 8)
_SLAB_COLS = 168

B_TILE = 8                   # images per grid step; must be a multiple of 8


# ---------------------------------------------------------------------------
# Host-side weight packing (done once, outside the jitted forward)
# ---------------------------------------------------------------------------
def _conv_band_wide(w_oihw, w_in, k_pad):
    """Wide-K banded conv weights, shape (KH*k_pad, w_out*OC).

    For an activation slab a[row, l] with lane l = w*IC + ic, a VALID stride-1
    conv over the 5 kernel rows is the single matmul
        LHS[row, i*k_pad + l] = a[row shifted by +i in h, l]
        y = LHS @ band
    with y lanes laid out as wo*OC + oc."""
    oc_n, ic_n, kh, kw = w_oihw.shape
    w_out = w_in - kw + 1
    band = np.zeros((kh, k_pad, w_out * oc_n), np.float32)
    for i in range(kh):
        for j in range(kw):
            blk = np.asarray(w_oihw[:, :, i, j], np.float32).T       # (IC, OC)
            for wo in range(w_out):
                r0 = (wo + j) * ic_n
                c0 = wo * oc_n
                band[i, r0:r0 + ic_n, c0:c0 + oc_n] = blk
    return band.reshape(kh * k_pad, w_out * oc_n)


def _pool_w_sel(w_in, c):
    """0/1 right-multiply (even, odd) matrices of shape (w_in*c, 128) selecting
    even / odd width positions of a (w, c)-flattened lane dim (c fastest)."""
    w_out = w_in // 2
    e = np.zeros((w_in * c, 128), np.float32)
    o = np.zeros((w_in * c, 128), np.float32)
    for wp in range(w_out):
        for ch in range(c):
            e[(2 * wp) * c + ch, wp * c + ch] = 1.0
            o[(2 * wp + 1) * c + ch, wp * c + ch] = 1.0
    return e, o


def pack_params(params):
    """One-time host-side packing of PyTorch-layout params into 2 operands."""
    mats = {
        "w1": _conv_band_wide(np.asarray(params["conv1_w"], np.float32), 32, 128),
        "w2": _conv_band_wide(np.asarray(params["conv2_w"], np.float32), 14, 128),
    }
    mats["p1e"], mats["p1o"] = _pool_w_sel(28, 6)
    mats["p2e"], mats["p2o"] = _pool_w_sel(10, 16)

    # fc1: fold the PyTorch (C,H,W) flatten into the packed layout
    # lane of fc1-LHS = h*128 + wp*16 + c   ->   feature index c*25 + h*5 + wp
    f1w = np.asarray(params["fc1_w"], np.float32).reshape(120, 16, 5, 5)
    f1 = np.zeros((5, 128, 128), np.float32)
    f1[:, :80, :120] = np.transpose(f1w, (2, 3, 1, 0)).reshape(5, 80, 120)
    mats["f1"] = f1.reshape(640, 128)

    f2 = np.zeros((128, 128), np.float32)
    f2[:120, :84] = np.asarray(params["fc2_w"], np.float32).T
    mats["f2"] = f2
    f3 = np.zeros((128, 128), np.float32)
    f3[:84, :10] = np.asarray(params["fc3_w"], np.float32).T
    mats["f3"] = f3

    slab = np.zeros((_SLAB_ROWS, _SLAB_COLS), np.float32)
    for name, (off, k, n) in _SLAB_OFF.items():
        m = mats[name]
        assert m.shape[0] == k and m.shape[1] == n, (name, m.shape)
        slab[off:off + k, :n] = m

    bias = np.zeros((8, _SLAB_COLS), np.float32)
    bias[0, :168] = np.tile(np.asarray(params["conv1_b"], np.float32), 28)
    bias[1, :160] = np.tile(np.asarray(params["conv2_b"], np.float32), 10)
    bias[2, :120] = np.asarray(params["fc1_b"], np.float32)
    bias[3, :84] = np.asarray(params["fc2_b"], np.float32)
    bias[4, :10] = np.asarray(params["fc3_b"], np.float32)

    return {"wslab": jnp.asarray(slab), "bias": jnp.asarray(bias)}


# ---------------------------------------------------------------------------
# The fused Pallas kernel: B_TILE images -> (B_TILE, 128) logits rows
# Activation layout throughout: row = h*B + b (h-major, batch-minor),
# lanes = (w, channel) flattened with channel fastest, zero-padded to 128.
# ---------------------------------------------------------------------------
def _lenet_kernel(x_ref, w_ref, b_ref, o_ref):
    f32 = jnp.float32
    B = x_ref.shape[1]

    def mm(a, bmat):
        return jnp.dot(a, bmat, preferred_element_type=f32)

    def wmat(name):
        off, k, n = _SLAB_OFF[name]
        v = w_ref[pl.ds(off, k), :]
        return v if n == _SLAB_COLS else v[:, :n]

    def bvec(row, n):
        v = b_ref[pl.ds(row, 1), :]
        return v if n == _SLAB_COLS else v[:, :n]

    x = x_ref[...].reshape(32 * B, 128)                               # row = h*B + b

    # ---- conv1 (5x5, 3->6, VALID): wide-K im2col over the 5 kernel rows ----
    lhs1 = jnp.concatenate([x[i * B:(i + 28) * B, :] for i in range(5)], axis=-1)
    y1 = jnp.maximum(mm(lhs1, wmat("w1")) + bvec(0, 168), 0.0)        # (28B, 168)

    # ---- 2x2 max-pool #1: H by aligned block-max, W by 0/1 selection matmuls ----
    y1 = y1.reshape(14, 2 * B, 168)
    h1 = jnp.maximum(y1[:, :B, :], y1[:, B:, :]).reshape(14 * B, 168)
    p1 = jnp.maximum(mm(h1, wmat("p1e")), mm(h1, wmat("p1o")))        # (14B, 128)

    # ---- conv2 (5x5, 6->16, VALID) ----
    lhs2 = jnp.concatenate([p1[i * B:(i + 10) * B, :] for i in range(5)], axis=-1)
    y2 = jnp.maximum(mm(lhs2, wmat("w2")) + bvec(1, 160), 0.0)        # (10B, 160)

    # ---- 2x2 max-pool #2 ----
    y2 = y2.reshape(5, 2 * B, 160)
    h2 = jnp.maximum(y2[:, :B, :], y2[:, B:, :]).reshape(5 * B, 160)
    p2 = jnp.maximum(mm(h2, wmat("p2e")), mm(h2, wmat("p2o")))        # (5B, 128)

    # ---- fc1 (flatten folded into packed weights), fc2, fc3 (M = B) ----
    fl = jnp.concatenate([p2[h * B:(h + 1) * B, :] for h in range(5)], axis=-1)  # (B, 640)
    z1 = jnp.maximum(mm(fl, wmat("f1")) + bvec(2, 128), 0.0)          # (B, 128)
    z2 = jnp.maximum(mm(z1, wmat("f2")) + bvec(3, 128), 0.0)          # (B, 128)
    o_ref[...] = mm(z2, wmat("f3")) + bvec(4, 128)                    # (B, 128)


def _forward_pallas(x_slab, wslab, bias):
    # x_slab: (32, n_pad, 128) with n_pad a multiple of B_TILE
    n_pad = x_slab.shape[1]
    n_tiles = n_pad // B_TILE
    return pl.pallas_call(
        _lenet_kernel,
        out_shape=jax.ShapeDtypeStruct((n_pad, 128), jnp.float32),
        grid_spec=pltpu.PrefetchScalarGridSpec(
            num_scalar_prefetch=0,
            grid=(n_tiles,),
            in_specs=[
                pl.BlockSpec((32, B_TILE, 128), lambda g: (0, g, 0)),
                pl.BlockSpec((_SLAB_ROWS, _SLAB_COLS), lambda g: (0, 0)),
                pl.BlockSpec((8, _SLAB_COLS), lambda g: (0, 0)),
            ],
            out_specs=pl.BlockSpec((B_TILE, 128), lambda g: (g, 0)),
        ),
        compiler_params=pltpu.CompilerParams(
            dimension_semantics=("parallel",),
            vmem_limit_bytes=32 * 1024 * 1024,
        ),
    )(x_slab, wslab, bias)


@jax.jit
def net_forward(packed, x_nchw):
    n = x_nchw.shape[0]
    n_pad = ((n + B_TILE - 1) // B_TILE) * B_TILE
    # NCHW -> (H, N, W*C) slab (channel fastest in lanes), lane-padded 96 -> 128.
    x_slab = jnp.transpose(x_nchw, (2, 0, 3, 1)).reshape(32, n, 96)
    x_slab = jnp.pad(x_slab, ((0, 0), (0, n_pad - n), (0, 128 - 96)))
    out = _forward_pallas(x_slab, packed["wslab"], packed["bias"])
    return out[:n, :10]


# ---------------------------------------------------------------------------
# Parameters (deterministic, PyTorch-style uniform(-1/sqrt(fan_in), 1/sqrt(fan_in)))
# ---------------------------------------------------------------------------
def init_params(key):
    def uni(k, shape, fan_in):
        bound = 1.0 / (fan_in ** 0.5)
        return jax.random.uniform(k, shape, jnp.float32, -bound, bound)

    ks = jax.random.split(key, 10)
    return {
        "conv1_w": uni(ks[0], (6, 3, 5, 5), 3 * 5 * 5),
        "conv1_b": uni(ks[1], (6,), 3 * 5 * 5),
        "conv2_w": uni(ks[2], (16, 6, 5, 5), 6 * 5 * 5),
        "conv2_b": uni(ks[3], (16,), 6 * 5 * 5),
        "fc1_w": uni(ks[4], (120, 16 * 5 * 5), 16 * 5 * 5),
        "fc1_b": uni(ks[5], (120,), 16 * 5 * 5),
        "fc2_w": uni(ks[6], (84, 120), 120),
        "fc2_b": uni(ks[7], (84,), 120),
        "fc3_w": uni(ks[8], (10, 84), 84),
        "fc3_b": uni(ks[9], (10,), 84),
    }


# Pure-JAX reference (mirrors PyTorch Net.forward) for correctness checking.
def ref_forward(params, x_nchw):
    def conv(x, w, b):
        y = jax.lax.conv_general_dilated(
            x, w, (1, 1), "VALID", dimension_numbers=("NCHW", "OIHW", "NCHW"))
        return jax.nn.relu(y + b.reshape(1, -1, 1, 1))

    def pool(x):
        return jax.lax.reduce_window(x, -jnp.inf, jax.lax.max,
                                     (1, 1, 2, 2), (1, 1, 2, 2), "VALID")

    x = pool(conv(x_nchw, params["conv1_w"], params["conv1_b"]))
    x = pool(conv(x, params["conv2_w"], params["conv2_b"]))
    x = x.reshape(x.shape[0], -1)
    x = jax.nn.relu(x @ params["fc1_w"].T + params["fc1_b"])
    x = jax.nn.relu(x @ params["fc2_w"].T + params["fc2_b"])
    return x @ params["fc3_w"].T + params["fc3_b"]


if __name__ == "__main__":
    key = jax.random.PRNGKey(0)
    pkey, xkey = jax.random.split(key)
    params = init_params(pkey)
    packed = pack_params(params)          # one-time host-side packing

    # forward requires 32x32 spatial input so that flatten yields 16*5*5.
    # batch=20 -> padded to 24 -> 3 grid steps of 8 images.
    x = jax.random.normal(xkey, (20, 3, 32, 32), jnp.float32)

    out = net_forward(packed, x)
    jax.block_until_ready(out)

    ref = ref_forward(params, x)
    assert out.shape == (20, 10), out.shape
    err = float(jnp.max(jnp.abs(out - ref)))
    assert jnp.allclose(out, ref, atol=2e-4, rtol=2e-4), err
    print("KERNEL_OK")
</pallas_src>

<mosaic_0001>
module attributes {stable_mosaic.version = 11 : i64} {
  func.func @_lenet_kernel(%arg0: i32, %arg1: memref<32x8x128xf32, #tpu.memory_space<vmem>>, %arg2: memref<2832x168xf32, #tpu.memory_space<vmem>>, %arg3: memref<8x168xf32, #tpu.memory_space<vmem>>, %arg4: memref<8x128xf32, #tpu.memory_space<vmem>>) attributes {dimension_semantics = [#tpu.dimension_semantics<parallel>], iteration_bounds = array<i64: 3>, scalar_prefetch = 0 : i64, scratch_operands = 0 : i64, tpu.core_type = #tpu.core_type<tc>, window_params = [{transform_indices = @transform_0, window_bounds = array<i64: 32, 8, 128>}, {pipeline_mode = #tpu.pipeline_mode<synchronous>, transform_indices = @transform_1, window_bounds = array<i64: 2832, 168>}, {pipeline_mode = #tpu.pipeline_mode<synchronous>, transform_indices = @transform_2, window_bounds = array<i64: 8, 168>}, {transform_indices = @transform_3, window_bounds = array<i64: 8, 128>}]} {
    %c0 = arith.constant 0 : index
    %c0_0 = arith.constant 0 : index
    %c0_1 = arith.constant 0 : index
    %0 = vector.load %arg1[%c0, %c0_0, %c0_1] : memref<32x8x128xf32, #tpu.memory_space<vmem>>, vector<32x8x128xf32>
    %1 = vector.shape_cast %0 : vector<32x8x128xf32> to vector<256x128xf32>
    %2 = vector.extract_strided_slice %1 {offsets = [0, 0], sizes = [224, 128], strides = [1, 1]} : vector<256x128xf32> to vector<224x128xf32>
    %3 = vector.extract_strided_slice %1 {offsets = [8, 0], sizes = [224, 128], strides = [1, 1]} : vector<256x128xf32> to vector<224x128xf32>
    %4 = vector.extract_strided_slice %1 {offsets = [16, 0], sizes = [224, 128], strides = [1, 1]} : vector<256x128xf32> to vector<224x128xf32>
    %5 = vector.extract_strided_slice %1 {offsets = [24, 0], sizes = [224, 128], strides = [1, 1]} : vector<256x128xf32> to vector<224x128xf32>
    %6 = vector.extract_strided_slice %1 {offsets = [32, 0], sizes = [224, 128], strides = [1, 1]} : vector<256x128xf32> to vector<224x128xf32>
    %7 = tpu.concatenate %2, %3, %4, %5, %6 in 1 : vector<224x128xf32>, vector<224x128xf32>, vector<224x128xf32>, vector<224x128xf32>, vector<224x128xf32> -> vector<224x640xf32>
    %c0_2 = arith.constant 0 : index
    %c0_3 = arith.constant 0 : index
    %8 = vector.load %arg2[%c0_2, %c0_3] : memref<2832x168xf32, #tpu.memory_space<vmem>>, vector<640x168xf32>
    %cst = arith.constant dense<0.000000e+00> : vector<224x168xf32>
    %9 = tpu.matmul %7, %8, %cst {dimension_numbers = #tpu.dot_dimension_numbers<[1], [0], [0], [1], [0, 0, 1, 1], [], []>} : vector<224x640xf32>, vector<640x168xf32>, vector<224x168xf32> -> vector<224x168xf32>
    %c0_4 = arith.constant 0 : index
    %c0_5 = arith.constant 0 : index
    %10 = vector.load %arg3[%c0_4, %c0_5] : memref<8x168xf32, #tpu.memory_space<vmem>>, vector<1x168xf32>
    %11 = vector.broadcast %10 : vector<1x168xf32> to vector<224x168xf32>
    %12 = arith.addf %9, %11 : vector<224x168xf32>
    %cst_6 = arith.constant 0.000000e+00 : f32
    %13 = vector.broadcast %cst_6 : f32 to vector<224x168xf32>
    %14 = arith.maximumf %12, %13 : vector<224x168xf32>
    %15 = vector.shape_cast %14 : vector<224x168xf32> to vector<14x16x168xf32>
    %16 = vector.extract_strided_slice %15 {offsets = [0, 0, 0], sizes = [14, 8, 168], strides = [1, 1, 1]} : vector<14x16x168xf32> to vector<14x8x168xf32>
    %17 = vector.extract_strided_slice %15 {offsets = [0, 8, 0], sizes = [14, 8, 168], strides = [1, 1, 1]} : vector<14x16x168xf32> to vector<14x8x168xf32>
    %18 = arith.maximumf %16, %17 : vector<14x8x168xf32>
    %19 = vector.shape_cast %18 : vector<14x8x168xf32> to vector<112x168xf32>
    %c640 = arith.constant 640 : index
    %c0_7 = arith.constant 0 : index
    %20 = vector.load %arg2[%c640, %c0_7] : memref<2832x168xf32, #tpu.memory_space<vmem>>, vector<168x168xf32>
    %21 = vector.extract_strided_slice %20 {offsets = [0, 0], sizes = [168, 128], strides = [1, 1]} : vector<168x168xf32> to vector<168x128xf32>
    %cst_8 = arith.constant dense<0.000000e+00> : vector<112x128xf32>
    %22 = tpu.matmul %19, %21, %cst_8 {dimension_numbers = #tpu.dot_dimension_numbers<[1], [0], [0], [1], [0, 0, 1, 1], [], []>} : vector<112x168xf32>, vector<168x128xf32>, vector<112x128xf32> -> vector<112x128xf32>
    %c808 = arith.constant 808 : index
    %c0_9 = arith.constant 0 : index
    %23 = vector.load %arg2[%c808, %c0_9] : memref<2832x168xf32, #tpu.memory_space<vmem>>, vector<168x168xf32>
    %24 = vector.extract_strided_slice %23 {offsets = [0, 0], sizes = [168, 128], strides = [1, 1]} : vector<168x168xf32> to vector<168x128xf32>
    %cst_10 = arith.constant dense<0.000000e+00> : vector<112x128xf32>
    %25 = tpu.matmul %19, %24, %cst_10 {dimension_numbers = #tpu.dot_dimension_numbers<[1], [0], [0], [1], [0, 0, 1, 1], [], []>} : vector<112x168xf32>, vector<168x128xf32>, vector<112x128xf32> -> vector<112x128xf32>
    %26 = arith.maximumf %22, %25 : vector<112x128xf32>
    %27 = vector.extract_strided_slice %26 {offsets = [0, 0], sizes = [80, 128], strides = [1, 1]} : vector<112x128xf32> to vector<80x128xf32>
    %28 = vector.extract_strided_slice %26 {offsets = [8, 0], sizes = [80, 128], strides = [1, 1]} : vector<112x128xf32> to vector<80x128xf32>
    %29 = vector.extract_strided_slice %26 {offsets = [16, 0], sizes = [80, 128], strides = [1, 1]} : vector<112x128xf32> to vector<80x128xf32>
    %30 = vector.extract_strided_slice %26 {offsets = [24, 0], sizes = [80, 128], strides = [1, 1]} : vector<112x128xf32> to vector<80x128xf32>
    %31 = vector.extract_strided_slice %26 {offsets = [32, 0], sizes = [80, 128], strides = [1, 1]} : vector<112x128xf32> to vector<80x128xf32>
    %32 = tpu.concatenate %27, %28, %29, %30, %31 in 1 : vector<80x128xf32>, vector<80x128xf32>, vector<80x128xf32>, vector<80x128xf32>, vector<80x128xf32> -> vector<80x640xf32>
    %c976 = arith.constant 976 : index
    %c0_11 = arith.constant 0 : index
    %33 = vector.load %arg2[%c976, %c0_11] : memref<2832x168xf32, #tpu.memory_space<vmem>>, vector<640x168xf32>
    %34 = vector.extract_strided_slice %33 {offsets = [0, 0], sizes = [640, 160], strides = [1, 1]} : vector<640x168xf32> to vector<640x160xf32>
    %cst_12 = arith.constant dense<0.000000e+00> : vector<80x160xf32>
    %35 = tpu.matmul %32, %34, %cst_12 {dimension_numbers = #tpu.dot_dimension_numbers<[1], [0], [0], [1], [0, 0, 1, 1], [], []>} : vector<80x640xf32>, vector<640x160xf32>, vector<80x160xf32> -> vector<80x160xf32>
    %c1 = arith.constant 1 : index
    %c0_13 = arith.constant 0 : index
    %36 = vector.load %arg3[%c1, %c0_13] : memref<8x168xf32, #tpu.memory_space<vmem>>, vector<1x168xf32>
    %37 = vector.extract_strided_slice %36 {offsets = [0, 0], sizes = [1, 160], strides = [1, 1]} : vector<1x168xf32> to vector<1x160xf32>
    %38 = vector.broadcast %37 : vector<1x160xf32> to vector<80x160xf32>
    %39 = arith.addf %35, %38 : vector<80x160xf32>
    %cst_14 = arith.constant 0.000000e+00 : f32
    %40 = vector.broadcast %cst_14 : f32 to vector<80x160xf32>
    %41 = arith.maximumf %39, %40 : vector<80x160xf32>
    %42 = vector.shape_cast %41 : vector<80x160xf32> to vector<5x16x160xf32>
    %43 = vector.extract_strided_slice %42 {offsets = [0, 0, 0], sizes = [5, 8, 160], strides = [1, 1, 1]} : vector<5x16x160xf32> to vector<5x8x160xf32>
    %44 = vector.extract_strided_slice %42 {offsets = [0, 8, 0], sizes = [5, 8, 160], strides = [1, 1, 1]} : vector<5x16x160xf32> to vector<5x8x160xf32>
    %45 = arith.maximumf %43, %44 : vector<5x8x160xf32>
    %46 = vector.shape_cast %45 : vector<5x8x160xf32> to vector<40x160xf32>
    %c1616 = arith.constant 1616 : index
    %c0_15 = arith.constant 0 : index
    %47 = vector.load %arg2[%c1616, %c0_15] : memref<2832x168xf32, #tpu.memory_space<vmem>>, vector<160x168xf32>
    %48 = vector.extract_strided_slice %47 {offsets = [0, 0], sizes = [160, 128], strides = [1, 1]} : vector<160x168xf32> to vector<160x128xf32>
    %cst_16 = arith.constant dense<0.000000e+00> : vector<40x128xf32>
    %49 = tpu.matmul %46, %48, %cst_16 {dimension_numbers = #tpu.dot_dimension_numbers<[1], [0], [0], [1], [0, 0, 1, 1], [], []>} : vector<40x160xf32>, vector<160x128xf32>, vector<40x128xf32> -> vector<40x128xf32>
    %c1776 = arith.constant 1776 : index
    %c0_17 = arith.constant 0 : index
    %50 = vector.load %arg2[%c1776, %c0_17] : memref<2832x168xf32, #tpu.memory_space<vmem>>, vector<160x168xf32>
    %51 = vector.extract_strided_slice %50 {offsets = [0, 0], sizes = [160, 128], strides = [1, 1]} : vector<160x168xf32> to vector<160x128xf32>
    %cst_18 = arith.constant dense<0.000000e+00> : vector<40x128xf32>
    %52 = tpu.matmul %46, %51, %cst_18 {dimension_numbers = #tpu.dot_dimension_numbers<[1], [0], [0], [1], [0, 0, 1, 1], [], []>} : vector<40x160xf32>, vector<160x128xf32>, vector<40x128xf32> -> vector<40x128xf32>
    %53 = arith.maximumf %49, %52 : vector<40x128xf32>
    %54 = vector.extract_strided_slice %53 {offsets = [0, 0], sizes = [8, 128], strides = [1, 1]} : vector<40x128xf32> to vector<8x128xf32>
    %55 = vector.extract_strided_slice %53 {offsets = [8, 0], sizes = [8, 128], strides = [1, 1]} : vector<40x128xf32> to vector<8x128xf32>
    %56 = vector.extract_strided_slice %53 {offsets = [16, 0], sizes = [8, 128], strides = [1, 1]} : vector<40x128xf32> to vector<8x128xf32>
    %57 = vector.extract_strided_slice %53 {offsets = [24, 0], sizes = [8, 128], strides = [1, 1]} : vector<40x128xf32> to vector<8x128xf32>
    %58 = vector.extract_strided_slice %53 {offsets = [32, 0], sizes = [8, 128], strides = [1, 1]} : vector<40x128xf32> to vector<8x128xf32>
    %59 = tpu.concatenate %54, %55, %56, %57, %58 in 1 : vector<8x128xf32>, vector<8x128xf32>, vector<8x128xf32>, vector<8x128xf32>, vector<8x128xf32> -> vector<8x640xf32>
    %c1936 = arith.constant 1936 : index
    %c0_19 = arith.constant 0 : index
    %60 = vector.load %arg2[%c1936, %c0_19] : memref<2832x168xf32, #tpu.memory_space<vmem>>, vector<640x168xf32>
    %61 = vector.extract_strided_slice %60 {offsets = [0, 0], sizes = [640, 128], strides = [1, 1]} : vector<640x168xf32> to vector<640x128xf32>
    %cst_20 = arith.constant dense<0.000000e+00> : vector<8x128xf32>
    %62 = tpu.matmul %59, %61, %cst_20 {dimension_numbers = #tpu.dot_dimension_numbers<[1], [0], [0], [1], [0, 0, 1, 1], [], []>} : vector<8x640xf32>, vector<640x128xf32>, vector<8x128xf32> -> vector<8x128xf32>
    %c2 = arith.constant 2 : index
    %c0_21 = arith.constant 0 : index
    %63 = vector.load %arg3[%c2, %c0_21] : memref<8x168xf32, #tpu.memory_space<vmem>>, vector<1x168xf32>
    %64 = vector.extract_strided_slice %63 {offsets = [0, 0], sizes = [1, 128], strides = [1, 1]} : vector<1x168xf32> to vector<1x128xf32>
    %65 = vector.broadcast %64 : vector<1x128xf32> to vector<8x128xf32>
    %66 = arith.addf %62, %65 : vector<8x128xf32>
    %cst_22 = arith.constant 0.000000e+00 : f32
    %67 = vector.broadcast %cst_22 : f32 to vector<8x128xf32>
    %68 = arith.maximumf %66, %67 : vector<8x128xf32>
    %c2576 = arith.constant 2576 : index
    %c0_23 = arith.constant 0 : index
    %69 = vector.load %arg2[%c2576, %c0_23] : memref<2832x168xf32, #tpu.memory_space<vmem>>, vector<128x168xf32>
    %70 = vector.extract_strided_slice %69 {offsets = [0, 0], sizes = [128, 128], strides = [1, 1]} : vector<128x168xf32> to vector<128x128xf32>
    %cst_24 = arith.constant dense<0.000000e+00> : vector<8x128xf32>
    %71 = tpu.matmul %68, %70, %cst_24 {dimension_numbers = #tpu.dot_dimension_numbers<[1], [0], [0], [1], [0, 0, 1, 1], [], []>} : vector<8x128xf32>, vector<128x128xf32>, vector<8x128xf32> -> vector<8x128xf32>
    %c3 = arith.constant 3 : index
    %c0_25 = arith.constant 0 : index
    %72 = vector.load %arg3[%c3, %c0_25] : memref<8x168xf32, #tpu.memory_space<vmem>>, vector<1x168xf32>
    %73 = vector.extract_strided_slice %72 {offsets = [0, 0], sizes = [1, 128], strides = [1, 1]} : vector<1x168xf32> to vector<1x128xf32>
    %74 = vector.broadcast %73 : vector<1x128xf32> to vector<8x128xf32>
    %75 = arith.addf %71, %74 : vector<8x128xf32>
    %cst_26 = arith.constant 0.000000e+00 : f32
    %76 = vector.broadcast %cst_26 : f32 to vector<8x128xf32>
    %77 = arith.maximumf %75, %76 : vector<8x128xf32>
    %c2704 = arith.constant 2704 : index
    %c0_27 = arith.constant 0 : index
    %78 = vector.load %arg2[%c2704, %c0_27] : memref<2832x168xf32, #tpu.memory_space<vmem>>, vector<128x168xf32>
    %79 = vector.extract_strided_slice %78 {offsets = [0, 0], sizes = [128, 128], strides = [1, 1]} : vector<128x168xf32> to vector<128x128xf32>
    %cst_28 = arith.constant dense<0.000000e+00> : vector<8x128xf32>
    %80 = tpu.matmul %77, %79, %cst_28 {dimension_numbers = #tpu.dot_dimension_numbers<[1], [0], [0], [1], [0, 0, 1, 1], [], []>} : vector<8x128xf32>, vector<128x128xf32>, vector<8x128xf32> -> vector<8x128xf32>
    %c4 = arith.constant 4 : index
    %c0_29 = arith.constant 0 : index
    %81 = vector.load %arg3[%c4, %c0_29] : memref<8x168xf32, #tpu.memory_space<vmem>>, vector<1x168xf32>
    %82 = vector.extract_strided_slice %81 {offsets = [0, 0], sizes = [1, 128], strides = [1, 1]} : vector<1x168xf32> to vector<1x128xf32>
    %83 = vector.broadcast %82 : vector<1x128xf32> to vector<8x128xf32>
    %84 = arith.addf %80, %83 : vector<8x128xf32>
    %c0_30 = arith.constant 0 : index
    %c0_31 = arith.constant 0 : index
    %85 = vector.load %arg4[%c0_30, %c0_31] : memref<8x128xf32, #tpu.memory_space<vmem>>, vector<8x128xf32>
    tpu.vector_store %arg4[%c0_30, %c0_31], %84 {strides = array<i32>} : memref<8x128xf32, #tpu.memory_space<vmem>>, vector<8x128xf32>,
    return
  }
  func.func @transform_0(%arg0: i32) -> (i32, i32, i32) {
    %c0_i32 = arith.constant 0 : i32
    %c0_i32_0 = arith.constant 0 : i32
    %c0_i32_1 = arith.constant 0 : i32
    return %c0_i32, %arg0, %c0_i32_0 : i32, i32, i32
  }
  func.func @transform_1(%arg0: i32) -> (i32, i32) {
    %c0_i32 = arith.constant 0 : i32
    %c0_i32_0 = arith.constant 0 : i32
    %c0_i32_1 = arith.constant 0 : i32
    return %c0_i32, %c0_i32_0 : i32, i32
  }
  func.func @transform_2(%arg0: i32) -> (i32, i32) {
    %c0_i32 = arith.constant 0 : i32
    %c0_i32_0 = arith.constant 0 : i32
    %c0_i32_1 = arith.constant 0 : i32
    return %c0_i32, %c0_i32_0 : i32, i32
  }
  func.func @transform_3(%arg0: i32) -> (i32, i32) {
    %c0_i32 = arith.constant 0 : i32
    %c0_i32_0 = arith.constant 0 : i32
    return %arg0, %c0_i32 : i32, i32
  }
}

</mosaic_0001>

<llo_original>
// kernel: net_forward.1
$region0: #{net_forward.1}
  #allocation0 [shape = 'u32[]', space=smem, size = 0x4, offset = 0x4, fixed_abs, tag = 'smem constant byte address 0x4 - core index']
  #allocation1 [shape = 'u32[144,128]{1,0:T(1,128)}', space=vmem, size = 0x12000, scoped, tag = 'internal scratch']
  %s0 = inlined_call_operand.vmem [shape: f32[32,24,128], index: 0, kind: input, shape index: {}]
  %s1 = inlined_call_operand.vmem [shape: f32[2832,168], index: 1, kind: input, shape index: {}]
  %s2 = inlined_call_operand.vmem [shape: f32[8,168], index: 2, kind: input, shape index: {}]
  %s3 = inlined_call_operand.vmem [shape: f32[24,128], index: 3, kind: output, shape index: {}]
  %s4 = sld [smem:[#allocation0]]
  $region83: #{net_forward.1} parent=0
    _
  %s6 = ssub.s32 1, %s4
  %s7 = scalar_select 0, %s6, %s4
  $region1: #{net_forward.1} parent=0
    #allocation2 [shape = 'u8[262144]{0}', space=vmem, size = 0x40000, scoped, tag = 'input window, operand 0']
    loop: start=0, step=1, limit=5
    $region2: #{net_forward.1} parent=1 // loop_pre_header
      _
    $region3: #{net_forward.1} parent=1 // loop_header
      %s9 = sphi 0, %s13
      %p10 = scmp.ge.s32.totalorder %s9, 5
      %s19 = sphi 0, %s21
      %s22 = sphi 0, %s19
      %s23 = sphi 0, %s22
      %s39 = sphi 0, %s23
      %s43 = sphi 0, %s43
      %s45 = sphi 0, %s43
      %s46 = sphi 0, %s45
      %s60 = sphi 0, %s46
      %s64 = sphi 0, %s64
      %s66 = sphi 0, %s64
      %s67 = sphi 0, %s66
      %s81 = sphi 0, %s67
      %s87 = sphi 0, %s89
      %s90 = sphi 0, %s87
      %s91 = sphi 0, %s90
      %s107 = sphi 0, %s91
    $region4: #{net_forward.1} parent=1 // loop_header_branch
      %12 = sbr.rel (%p10) target = $region8
    $region5: #{net_forward.1} parent=1 // loop_body
      %s14 = ssub.s32 %s9, 1
      %s15 = ssub.s32 %s9, 2
      %s16 = sadd.s32 %s9, 1
      %s17 = ssub.s32 %s9, %s16
      %p18 = scmp.eq.s32.totalorder %s17, 0
      %s20 = sadd.s32 %s19, 1
      %s21 = scalar_select %p18, %s19, %s20
      %p24 = pneg %p18
      %p25 = scmp.eq.s32.totalorder %s9, 2
      %p26 = por %p24, %p25
      %p27 = scmp.ne.s32.totalorder %s19, %s22
      %p28 = scmp.eq.s32.totalorder %s9, 0
      %p29 = por %p27, %p28
      %p30 = scmp.ne.s32.totalorder %s19, %s22
      %p31 = scmp.eq.s32.totalorder %s14, 2
      %p32 = por %p30, %p31
      %p33 = scmp.ne.s32.totalorder %s22, %s23
      %p34 = scmp.eq.s32.totalorder %s14, 0
      %p35 = por %p33, %p34
      %p36 = scmp.ne.s32.totalorder %s22, %s23
      %p37 = scmp.eq.s32.totalorder %s15, 2
      %p38 = por %p36, %p37
      %p40 = scmp.ne.s32.totalorder %s23, %s39
      %p41 = scmp.eq.s32.totalorder %s15, 0
      %p42 = por %p40, %p41
      %s44 = sadd.s32 %s43, 1
      %p47 = scmp.eq.s32.totalorder %s9, 2
      %p48 = scmp.ne.s32.totalorder %s43, %s45
      %p49 = scmp.eq.s32.totalorder %s9, 0
      %p50 = por %p48, %p49
      %p51 = scmp.ne.s32.totalorder %s43, %s45
      %p52 = scmp.eq.s32.totalorder %s14, 2
      %p53 = por %p51, %p52
      %p54 = scmp.ne.s32.totalorder %s45, %s46
      %p55 = scmp.eq.s32.totalorder %s14, 0
      %p56 = por %p54, %p55
      %p57 = scmp.ne.s32.totalorder %s45, %s46
      %p58 = scmp.eq.s32.totalorder %s15, 2
      %p59 = por %p57, %p58
      %p61 = scmp.ne.s32.totalorder %s46, %s60
      %p62 = scmp.eq.s32.totalorder %s15, 0
      %p63 = por %p61, %p62
      %s65 = sadd.s32 %s64, 1
      %p68 = scmp.eq.s32.totalorder %s9, 2
      %p69 = scmp.ne.s32.totalorder %s64, %s66
      %p70 = scmp.eq.s32.totalorder %s9, 0
      %p71 = por %p69, %p70
      %p72 = scmp.ne.s32.totalorder %s64, %s66
      %p73 = scmp.eq.s32.totalorder %s14, 2
      %p74 = por %p72, %p73
      %p75 = scmp.ne.s32.totalorder %s66, %s67
      %p76 = scmp.eq.s32.totalorder %s14, 0
      %p77 = por %p75, %p76
      %p78 = scmp.ne.s32.totalorder %s66, %s67
      %p79 = scmp.eq.s32.totalorder %s15, 2
      %p80 = por %p78, %p79
      %p82 = scmp.ne.s32.totalorder %s67, %s81
      %p83 = scmp.eq.s32.totalorder %s15, 0
      %p84 = por %p82, %p83
      %s85 = ssub.s32 %s9, %s16
      %p86 = scmp.eq.s32.totalorder %s85, 0
      %s88 = sadd.s32 %s87, 1
      %s89 = scalar_select %p86, %s87, %s88
      %p92 = pneg %p86
      %p93 = scmp.eq.s32.totalorder %s9, 2
      %p94 = por %p92, %p93
      %p95 = scmp.ne.s32.totalorder %s87, %s90
      %p96 = scmp.eq.s32.totalorder %s9, 0
      %p97 = por %p95, %p96
      %p98 = scmp.ne.s32.totalorder %s87, %s90
      %p99 = scmp.eq.s32.totalorder %s14, 2
      %p100 = por %p98, %p99
      %p101 = scmp.ne.s32.totalorder %s90, %s91
      %p102 = scmp.eq.s32.totalorder %s14, 0
      %p103 = por %p101, %p102
      %p104 = scmp.ne.s32.totalorder %s90, %s91
      %p105 = scmp.eq.s32.totalorder %s15, 2
      %p106 = por %p104, %p105
      %p108 = scmp.ne.s32.totalorder %s91, %s107
      %p109 = scmp.eq.s32.totalorder %s15, 0
      %p110 = por %p108, %p109
      %p111 = scmp.le.s32.totalorder 1, %s9
      %p112 = scmp.lt.s32.totalorder %s9, 4
      %p113 = pnand %p111, %p112
      %p114 = pneg %p113
      // Predicated region
      $region9: #{net_forward.1} parent=5 // pred_check
        _
      $region10: #{net_forward.1} parent=5 // pred_check_branch
        %116 = sbr.rel (%p113) target = $region12
      $region11: #{net_forward.1} parent=5 // pred_region
        %s117 = ssub.s32 %s9, 1
        // Predicated region
        $region13: #{net_forward.1} parent=11 // pred_check
          %p118 = pneg %p56
        $region14: #{net_forward.1} parent=11 // pred_check_branch
          %120 = sbr.rel (%p118) target = $region16
        $region15: #{net_forward.1} parent=11 // pred_region
          _
        $region16: #{net_forward.1} parent=11 // pred_fallthru
          _
        // Predicated region
        $region17: #{net_forward.1} parent=11 // pred_check
          %p121 = pneg %p77
        $region18: #{net_forward.1} parent=11 // pred_check_branch
          %123 = sbr.rel (%p121) target = $region20
        $region19: #{net_forward.1} parent=11 // pred_region
          _
        $region20: #{net_forward.1} parent=11 // pred_fallthru
          _
      $region12: #{net_forward.1} parent=5 // pred_fallthru
        _
      %p124 = scmp.lt.s32.totalorder %s9, 3
      // Predicated region
      $region21: #{net_forward.1} parent=5 // pred_check
        %p125 = pneg %p124
      $region22: #{net_forward.1} parent=5 // pred_check_branch
        %127 = sbr.rel (%p125) target = $region24
      $region23: #{net_forward.1} parent=5 // pred_region
        // Predicated region
        $region25: #{net_forward.1} parent=23 // pred_check
          %p128 = pneg %p29
        $region26: #{net_forward.1} parent=23 // pred_check_branch
          %130 = sbr.rel (%p128) target = $region28
        $region27: #{net_forward.1} parent=23 // pred_region
          %s131 = sand.u32 %s19, 1
          %s132 = sand.u32 %s19, 1
          %s133 = smul.addr %s132, 256
          %s134 = scalar_lea.vmem [#allocation2], %s133
          %s135 = smul.addr %s9, 8
          %s136 = scalar_lea.vmem %s0, %s135
          // Predicated region
          $region29: #{net_forward.1} parent=27 // pred_check
            _
          $region30: #{net_forward.1} parent=27 // pred_check_branch
            %138 = sbr.rel (0) target = $region32
          $region31: #{net_forward.1} parent=27 // pred_region
            // Predicated region
            $region33: #{net_forward.1} parent=31 // pred_check
              _
            $region34: #{net_forward.1} parent=31 // pred_check_branch
              %140 = sbr.rel (0) target = $region36
            $region35: #{net_forward.1} parent=31 // pred_region
              // Predicated region
              $region48: #{net_forward.1} parent=35 // pred_check
                _
              $region49: #{net_forward.1} parent=35 // pred_check_branch
                %217 = sbr.rel (0) target = $region51
              $region50: #{net_forward.1} parent=35 // pred_region
                loop: start=0, step=1, limit=1
                $region52: #{net_forward.1} parent=50 // loop_pre_header
                  _
                $region53: #{net_forward.1} parent=50 // loop_header
                  %s219 = sphi 0, %s223
                  %p220 = scmp.ge.s32.totalorder %s219, 1
                  %s224 = sphi %s136, %s136
                  %s225 = sphi %s134, %s134
                $region54: #{net_forward.1} parent=50 // loop_header_branch
                  %222 = sbr.rel (%p220) target = $region58
                $region55: #{net_forward.1} parent=50 // loop_body
                  %v226 = vld [vmem:[%s224] sm:$0xff]
                  %227 = vst [vmem:[%s225] sm:$0xff] %v226
                  %v228 = vld [vmem:[%s224 + $0x18] sm:$0xff]
                  %229 = vst [vmem:[%s225 + $0x8] sm:$0xff] %v228
                  %v230 = vld [vmem:[%s224 + $0x30] sm:$0xff]
                  %231 = vst [vmem:[%s225 + $0x10] sm:$0xff] %v230
                  %v232 = vld [vmem:[%s224 + $0x48] sm:$0xff]
                  %233 = vst [vmem:[%s225 + $0x18] sm:$0xff] %v232
                  %v234 = vld [vmem:[%s224 + $0x60] sm:$0xff]
                  %235 = vst [vmem:[%s225 + $0x20] sm:$0xff] %v234
                  %v236 = vld [vmem:[%s224 + $0x78] sm:$0xff]
                  %237 = vst [vmem:[%s225 + $0x28] sm:$0xff] %v236
                  %v238 = vld [vmem:[%s224 + $0x90] sm:$0xff]
                  %239 = vst [vmem:[%s225 + $0x30] sm:$0xff] %v238
                  %v240 = vld [vmem:[%s224 + $0xa8] sm:$0xff]
                  %241 = vst [vmem:[%s225 + $0x38] sm:$0xff] %v240
                  %v242 = vld [vmem:[%s224 + $0xc0] sm:$0xff]
                  %243 = vst [vmem:[%s225 + $0x40] sm:$0xff] %v242
                  %v244 = vld [vmem:[%s224 + $0xd8] sm:$0xff]
                  %245 = vst [vmem:[%s225 + $0x48] sm:$0xff] %v244
                  %v246 = vld [vmem:[%s224 + $0xf0] sm:$0xff]
                  %247 = vst [vmem:[%s225 + $0x50] sm:$0xff] %v246
                  %v248 = vld [vmem:[%s224 + $0x108] sm:$0xff]
                  %249 = vst [vmem:[%s225 + $0x58] sm:$0xff] %v248
                  %v250 = vld [vmem:[%s224 + $0x120] sm:$0xff]
                  %251 = vst [vmem:[%s225 + $0x60] sm:$0xff] %v250
                  %v252 = vld [vmem:[%s224 + $0x138] sm:$0xff]
                  %253 = vst [vmem:[%s225 + $0x68] sm:$0xff] %v252
                  %v254 = vld [vmem:[%s224 + $0x150] sm:$0xff]
                  %255 = vst [vmem:[%s225 + $0x70] sm:$0xff] %v254
                  %v256 = vld [vmem:[%s224 + $0x168] sm:$0xff]
                  %257 = vst [vmem:[%s225 + $0x78] sm:$0xff] %v256
                  %v258 = vld [vmem:[%s224 + $0x180] sm:$0xff]
                  %259 = vst [vmem:[%s225 + $0x80] sm:$0xff] %v258
                  %v260 = vld [vmem:[%s224 + $0x198] sm:$0xff]
                  %261 = vst [vmem:[%s225 + $0x88] sm:$0xff] %v260
                  %v262 = vld [vmem:[%s224 + $0x1b0] sm:$0xff]
                  %263 = vst [vmem:[%s225 + $0x90] sm:$0xff] %v262
                  %v264 = vld [vmem:[%s224 + $0x1c8] sm:$0xff]
                  %265 = vst [vmem:[%s225 + $0x98] sm:$0xff] %v264
                  %v266 = vld [vmem:[%s224 + $0x1e0] sm:$0xff]
                  %267 = vst [vmem:[%s225 + $0xa0] sm:$0xff] %v266
                  %v268 = vld [vmem:[%s224 + $0x1f8] sm:$0xff]
                  %269 = vst [vmem:[%s225 + $0xa8] sm:$0xff] %v268
                  %v270 = vld [vmem:[%s224 + $0x210] sm:$0xff]
                  %271 = vst [vmem:[%s225 + $0xb0] sm:$0xff] %v270
                  %v272 = vld [vmem:[%s224 + $0x228] sm:$0xff]
                  %273 = vst [vmem:[%s225 + $0xb8] sm:$0xff] %v272
                  %v274 = vld [vmem:[%s224 + $0x240] sm:$0xff]
                  %275 = vst [vmem:[%s225 + $0xc0] sm:$0xff] %v274
                  %v276 = vld [vmem:[%s224 + $0x258] sm:$0xff]
                  %277 = vst [vmem:[%s225 + $0xc8] sm:$0xff] %v276
                  %v278 = vld [vmem:[%s224 + $0x270] sm:$0xff]
                  %279 = vst [vmem:[%s225 + $0xd0] sm:$0xff] %v278
                  %v280 = vld [vmem:[%s224 + $0x288] sm:$0xff]
                  %281 = vst [vmem:[%s225 + $0xd8] sm:$0xff] %v280
                  %v282 = vld [vmem:[%s224 + $0x2a0] sm:$0xff]
                  %283 = vst [vmem:[%s225 + $0xe0] sm:$0xff] %v282
                  %v284 = vld [vmem:[%s224 + $0x2b8] sm:$0xff]
                  %285 = vst [vmem:[%s225 + $0xe8] sm:$0xff] %v284
                  %v286 = vld [vmem:[%s224 + $0x2d0] sm:$0xff]
                  %287 = vst [vmem:[%s225 + $0xf0] sm:$0xff] %v286
                  %v288 = vld [vmem:[%s224 + $0x2e8] sm:$0xff]
                  %289 = vst [vmem:[%s225 + $0xf8] sm:$0xff] %v288
                $region56: #{net_forward.1} parent=50 // loop_footer
                  %s223 = sadd.s32 1, %s219
                $region57: #{net_forward.1} parent=50 // loop_footer_branch
                  %218 = sbr.rel target = $region53
                $region58: #{net_forward.1} parent=50 // loop_exit
                  _
              $region51: #{net_forward.1} parent=35 // pred_fallthru
                _
              // Predicated region
              $region59: #{net_forward.1} parent=35 // pred_check
                _
              $region60: #{net_forward.1} parent=35 // pred_check_branch
                %291 = sbr.rel target = $region62
              $region61: #{net_forward.1} parent=35 // pred_region
                _
              $region62: #{net_forward.1} parent=35 // pred_fallthru
                _
            $region36: #{net_forward.1} parent=31 // pred_fallthru
              _
            // Predicated region
            $region37: #{net_forward.1} parent=31 // pred_check
              _
            $region38: #{net_forward.1} parent=31 // pred_check_branch
              %142 = sbr.rel target = $region40
            $region39: #{net_forward.1} parent=31 // pred_region
              loop: start=0, step=1, limit=1
              $region41: #{net_forward.1} parent=39 // loop_pre_header
                _
              $region42: #{net_forward.1} parent=39 // loop_header
                %s145 = sphi 0, %s149
                %p146 = scmp.ge.s32.totalorder %s145, 1
                %s150 = sphi %s136, %s136
                %s151 = sphi %s134, %s134
              $region43: #{net_forward.1} parent=39 // loop_header_branch
                %148 = sbr.rel (%p146) target = $region47
              $region44: #{net_forward.1} parent=39 // loop_body
                %v152 = vld [vmem:[%s150] sm:$0xff]
                %153 = vst [vmem:[%s151] sm:$0xff] %v152
                %v154 = vld [vmem:[%s150 + $0x18] sm:$0xff]
                %155 = vst [vmem:[%s151 + $0x8] sm:$0xff] %v154
                %v156 = vld [vmem:[%s150 + $0x30] sm:$0xff]
                %157 = vst [vmem:[%s151 + $0x10] sm:$0xff] %v156
                %v158 = vld [vmem:[%s150 + $0x48] sm:$0xff]
                %159 = vst [vmem:[%s151 + $0x18] sm:$0xff] %v158
                %v160 = vld [vmem:[%s150 + $0x60] sm:$0xff]
                %161 = vst [vmem:[%s151 + $0x20] sm:$0xff] %v160
                %v162 = vld [vmem:[%s150 + $0x78] sm:$0xff]
                %163 = vst [vmem:[%s151 + $0x28] sm:$0xff] %v162
                %v164 = vld [vmem:[%s150 + $0x90] sm:$0xff]
                %165 = vst [vmem:[%s151 + $0x30] sm:$0xff] %v164
                %v166 = vld [vmem:[%s150 + $0xa8] sm:$0xff]
                %167 = vst [vmem:[%s151 + $0x38] sm:$0xff] %v166
                %v168 = vld [vmem:[%s150 + $0xc0] sm:$0xff]
                %169 = vst [vmem:[%s151 + $0x40] sm:$0xff] %v168
                %v170 = vld [vmem:[%s150 + $0xd8] sm:$0xff]
                %171 = vst [vmem:[%s151 + $0x48] sm:$0xff] %v170
                %v172 = vld [vmem:[%s150 + $0xf0] sm:$0xff]
                %173 = vst [vmem:[%s151 + $0x50] sm:$0xff] %v172
                %v174 = vld [vmem:[%s150 + $0x108] sm:$0xff]
                %175 = vst [vmem:[%s151 + $0x58] sm:$0xff] %v174
                %v176 = vld [vmem:[%s150 + $0x120] sm:$0xff]
                %177 = vst [vmem:[%s151 + $0x60] sm:$0xff] %v176
                %v178 = vld [vmem:[%s150 + $0x138] sm:$0xff]
                %179 = vst [vmem:[%s151 + $0x68] sm:$0xff] %v178
                %v180 = vld [vmem:[%s150 + $0x150] sm:$0xff]
                %181 = vst [vmem:[%s151 + $0x70] sm:$0xff] %v180
                %v182 = vld [vmem:[%s150 + $0x168] sm:$0xff]
                %183 = vst [vmem:[%s151 + $0x78] sm:$0xff] %v182
                %v184 = vld [vmem:[%s150 + $0x180] sm:$0xff]
                %185 = vst [vmem:[%s151 + $0x80] sm:$0xff] %v184
                %v186 = vld [vmem:[%s150 + $0x198] sm:$0xff]
                %187 = vst [vmem:[%s151 + $0x88] sm:$0xff] %v186
                %v188 = vld [vmem:[%s150 + $0x1b0] sm:$0xff]
                %189 = vst [vmem:[%s151 + $0x90] sm:$0xff] %v188
                %v190 = vld [vmem:[%s150 + $0x1c8] sm:$0xff]
                %191 = vst [vmem:[%s151 + $0x98] sm:$0xff] %v190
                %v192 = vld [vmem:[%s150 + $0x1e0] sm:$0xff]
                %193 = vst [vmem:[%s151 + $0xa0] sm:$0xff] %v192
                %v194 = vld [vmem:[%s150 + $0x1f8] sm:$0xff]
                %195 = vst [vmem:[%s151 + $0xa8] sm:$0xff] %v194
                %v196 = vld [vmem:[%s150 + $0x210] sm:$0xff]
                %197 = vst [vmem:[%s151 + $0xb0] sm:$0xff] %v196
                %v198 = vld [vmem:[%s150 + $0x228] sm:$0xff]
                %199 = vst [vmem:[%s151 + $0xb8] sm:$0xff] %v198
                %v200 = vld [vmem:[%s150 + $0x240] sm:$0xff]
                %201 = vst [vmem:[%s151 + $0xc0] sm:$0xff] %v200
                %v202 = vld [vmem:[%s150 + $0x258] sm:$0xff]
                %203 = vst [vmem:[%s151 + $0xc8] sm:$0xff] %v202
                %v204 = vld [vmem:[%s150 + $0x270] sm:$0xff]
                %205 = vst [vmem:[%s151 + $0xd0] sm:$0xff] %v204
                %v206 = vld [vmem:[%s150 + $0x288] sm:$0xff]
                %207 = vst [vmem:[%s151 + $0xd8] sm:$0xff] %v206
                %v208 = vld [vmem:[%s150 + $0x2a0] sm:$0xff]
                %209 = vst [vmem:[%s151 + $0xe0] sm:$0xff] %v208
                %v210 = vld [vmem:[%s150 + $0x2b8] sm:$0xff]
                %211 = vst [vmem:[%s151 + $0xe8] sm:$0xff] %v210
                %v212 = vld [vmem:[%s150 + $0x2d0] sm:$0xff]
                %213 = vst [vmem:[%s151 + $0xf0] sm:$0xff] %v212
                %v214 = vld [vmem:[%s150 + $0x2e8] sm:$0xff]
                %215 = vst [vmem:[%s151 + $0xf8] sm:$0xff] %v214
              $region45: #{net_forward.1} parent=39 // loop_footer
                %s149 = sadd.s32 1, %s145
              $region46: #{net_forward.1} parent=39 // loop_footer_branch
                %144 = sbr.rel target = $region42
              $region47: #{net_forward.1} parent=39 // loop_exit
                _
            $region40: #{net_forward.1} parent=31 // pred_fallthru
              _
          $region32: #{net_forward.1} parent=27 // pred_fallthru
            _
          %292 = vnop
        $region28: #{net_forward.1} parent=23 // pred_fallthru
          _
      $region24: #{net_forward.1} parent=5 // pred_fallthru
        _
      %p293 = scmp.le.s32.totalorder 1, %s9
      %p294 = scmp.lt.s32.totalorder %s9, 4
      %p295 = pnand %p293, %p294
      %p296 = pneg %p295
      // Predicated region
      $region63: #{net_forward.1} parent=5 // pred_check
        _
      $region64: #{net_forward.1} parent=5 // pred_check_branch
        %298 = sbr.rel (%p295) target = $region66
      $region65: #{net_forward.1} parent=5 // pred_region
        %s299 = ssub.s32 %s9, 1
        %s300 = sand.u32 %s22, 1
        %s301 = sand.u32 %s22, 1
        %s302 = smul.addr %s301, 256
        %s303 = scalar_lea.vmem [#allocation2], %s302
        // Predicated region
        $region67: #{net_forward.1} parent=65 // pred_check
          %p304 = pneg %p35
        $region68: #{net_forward.1} parent=65 // pred_check_branch
          %306 = sbr.rel (%p304) target = $region70
        $region69: #{net_forward.1} parent=65 // pred_region
          _
        $region70: #{net_forward.1} parent=65 // pred_fallthru
          _
        %s307 = sand.u32 %s22, 1
        %s308 = sand.u32 %s22, 1
        %s309 = smul.addr %s308, 256
        %s310 = scalar_lea.vmem [#allocation2], %s309
        %p311 = pneg %p35
        %p312 = pneg %p32
        %p313 = pneg %p56
        %p314 = pneg %p53
        %p315 = pneg %p77
        %p316 = pneg %p74
        %p317 = pneg %p103
        %p318 = pneg %p100
        %p319 = scmp.lt.s32.totalorder %s14, 2
        %s320 = scalar_select %p319, %s14, 2
        %s321 = smul.addr %s320, 8
        %s322 = scalar_lea.vmem %s3, %s321
        %p323 = scmp.lt.s32.totalorder %s14, 2
        %s324 = scalar_select %p323, %s14, 2
        %s325 = smul.addr %s324, 8
        %s326 = scalar_lea.vmem %s3, %s325
        %v327 = vld [vmem:[%s303] sm:$0xff]
        %v328 = vld [vmem:[%s303 + $0x8] sm:$0xff]
        %v329 = vld [vmem:[%s303 + $0x10] sm:$0xff]
        %v330 = vld [vmem:[%s303 + $0x18] sm:$0xff]
        %v331 = vld [vmem:[%s303 + $0x20] sm:$0xff]
        %v332 = vld [vmem:[%s303 + $0x28] sm:$0xff]
        %v333 = vld [vmem:[%s303 + $0x30] sm:$0xff]
        %v334 = vld [vmem:[%s303 + $0x38] sm:$0xff]
        %v335 = vld [vmem:[%s303 + $0x40] sm:$0xff]
        %v336 = vld [vmem:[%s303 + $0x48] sm:$0xff]
        %v337 = vld [vmem:[%s303 + $0x50] sm:$0xff]
        %v338 = vld [vmem:[%s303 + $0x58] sm:$0xff]
        %v339 = vld [vmem:[%s303 + $0x60] sm:$0xff]
        %v340 = vld [vmem:[%s303 + $0x68] sm:$0xff]
        %v341 = vld [vmem:[%s303 + $0x70] sm:$0xff]
        %v342 = vld [vmem:[%s303 + $0x78] sm:$0xff]
        %v343 = vld [vmem:[%s303 + $0x80] sm:$0xff]
        %v344 = vld [vmem:[%s303 + $0x88] sm:$0xff]
        %v345 = vld [vmem:[%s303 + $0x90] sm:$0xff]
        %v346 = vld [vmem:[%s303 + $0x98] sm:$0xff]
        %v347 = vld [vmem:[%s303 + $0xa0] sm:$0xff]
        %v348 = vld [vmem:[%s303 + $0xa8] sm:$0xff]
        %v349 = vld [vmem:[%s303 + $0xb0] sm:$0xff]
        %v350 = vld [vmem:[%s303 + $0xb8] sm:$0xff]
        %v351 = vld [vmem:[%s303 + $0xc0] sm:$0xff]
        %v352 = vld [vmem:[%s303 + $0xc8] sm:$0xff]
        %v353 = vld [vmem:[%s303 + $0xd0] sm:$0xff]
        %v354 = vld [vmem:[%s303 + $0xd8] sm:$0xff]
        %v355 = vld [vmem:[%s303 + $0xe0] sm:$0xff]
        %v356 = vld [vmem:[%s303 + $0xe8] sm:$0xff]
        %v357 = vld [vmem:[%s303 + $0xf0] sm:$0xff]
        %v358 = vld [vmem:[%s303 + $0xf8] sm:$0xff]
        %v359 = vld [vmem:[%s1] sm:$0xff]
        %v360 = vld [vmem:[%s1 + $0x8] sm:$0xff]
        %v361 = vld [vmem:[%s1 + $0x10] sm:$0xff]
        %v362 = vld [vmem:[%s1 + $0x18] sm:$0xff]
        %v363 = vld [vmem:[%s1 + $0x20] sm:$0xff]
        %v364 = vld [vmem:[%s1 + $0x28] sm:$0xff]
        %v365 = vld [vmem:[%s1 + $0x30] sm:$0xff]
        %v366 = vld [vmem:[%s1 + $0x38] sm:$0xff]
        %v367 = vld [vmem:[%s1 + $0x40] sm:$0xff]
        %v368 = vld [vmem:[%s1 + $0x48] sm:$0xff]
        %v369 = vld [vmem:[%s1 + $0x50] sm:$0xff]
        %v370 = vld [vmem:[%s1 + $0x58] sm:$0xff]
        %v371 = vld [vmem:[%s1 + $0x60] sm:$0xff]
        %v372 = vld [vmem:[%s1 + $0x68] sm:$0xff]
        %v373 = vld [vmem:[%s1 + $0x70] sm:$0xff]
        %v374 = vld [vmem:[%s1 + $0x78] sm:$0xff]
        %v375 = vld [vmem:[%s1 + $0x80] sm:$0xff]
        %v376 = vld [vmem:[%s1 + $0x88] sm:$0xff]
        %v377 = vld [vmem:[%s1 + $0x90] sm:$0xff]
        %v378 = vld [vmem:[%s1 + $0x98] sm:$0xff]
        %v379 = vld [vmem:[%s1 + $0xa0] sm:$0xff]
        %v380 = vld [vmem:[%s1 + $0xa8] sm:$0xff]
        %v381 = vld [vmem:[%s1 + $0xb0] sm:$0xff]
        %v382 = vld [vmem:[%s1 + $0xb8] sm:$0xff]
        %v383 = vld [vmem:[%s1 + $0xc0] sm:$0xff]
        %v384 = vld [vmem:[%s1 + $0xc8] sm:$0xff]
        %v385 = vld [vmem:[%s1 + $0xd0] sm:$0xff]
        %v386 = vld [vmem:[%s1 + $0xd8] sm:$0xff]
        %v387 = vld [vmem:[%s1 + $0xe0] sm:$0xff]
        %v388 = vld [vmem:[%s1 + $0xe8] sm:$0xff]
        %v389 = vld [vmem:[%s1 + $0xf0] sm:$0xff]
        %v390 = vld [vmem:[%s1 + $0xf8] sm:$0xff]
        %v391 = vld [vmem:[%s1 + $0x100] sm:$0xff]
        %v392 = vld [vmem:[%s1 + $0x108] sm:$0xff]
        %v393 = vld [vmem:[%s1 + $0x110] sm:$0xff]
        %v394 = vld [vmem:[%s1 + $0x118] sm:$0xff]
        %v395 = vld [vmem:[%s1 + $0x120] sm:$0xff]
        %v396 = vld [vmem:[%s1 + $0x128] sm:$0xff]
        %v397 = vld [vmem:[%s1 + $0x130] sm:$0xff]
        %v398 = vld [vmem:[%s1 + $0x138] sm:$0xff]
        %v399 = vld [vmem:[%s1 + $0x140] sm:$0xff]
        %v400 = vld [vmem:[%s1 + $0x148] sm:$0xff]
        %v401 = vld [vmem:[%s1 + $0x150] sm:$0xff]
        %v402 = vld [vmem:[%s1 + $0x158] sm:$0xff]
        %v403 = vld [vmem:[%s1 + $0x160] sm:$0xff]
        %v404 = vld [vmem:[%s1 + $0x168] sm:$0xff]
        %v405 = vld [vmem:[%s1 + $0x170] sm:$0xff]
        %v406 = vld [vmem:[%s1 + $0x178] sm:$0xff]
        %v407 = vld [vmem:[%s1 + $0x180] sm:$0xff]
        %v408 = vld [vmem:[%s1 + $0x188] sm:$0xff]
        %v409 = vld [vmem:[%s1 + $0x190] sm:$0xff]
        %v410 = vld [vmem:[%s1 + $0x198] sm:$0xff]
        %v411 = vld [vmem:[%s1 + $0x1a0] sm:$0xff]
        %v412 = vld [vmem:[%s1 + $0x1a8] sm:$0xff]
        %v413 = vld [vmem:[%s1 + $0x1b0] sm:$0xff]
        %v414 = vld [vmem:[%s1 + $0x1b8] sm:$0xff]
        %v415 = vld [vmem:[%s1 + $0x1c0] sm:$0xff]
        %v416 = vld [vmem:[%s1 + $0x1c8] sm:$0xff]
        %v417 = vld [vmem:[%s1 + $0x1d0] sm:$0xff]
        %v418 = vld [vmem:[%s1 + $0x1d8] sm:$0xff]
        %v419 = vld [vmem:[%s1 + $0x1e0] sm:$0xff]
        %v420 = vld [vmem:[%s1 + $0x1e8] sm:$0xff]
        %v421 = vld [vmem:[%s1 + $0x1f0] sm:$0xff]
        %v422 = vld [vmem:[%s1 + $0x1f8] sm:$0xff]
        %v423 = vld [vmem:[%s1 + $0x200] sm:$0xff]
        %v424 = vld [vmem:[%s1 + $0x208] sm:$0xff]
        %v425 = vld [vmem:[%s1 + $0x210] sm:$0xff]
        %v426 = vld [vmem:[%s1 + $0x218] sm:$0xff]
        %v427 = vld [vmem:[%s1 + $0x220] sm:$0xff]
        %v428 = vld [vmem:[%s1 + $0x228] sm:$0xff]
        %v429 = vld [vmem:[%s1 + $0x230] sm:$0xff]
        %v430 = vld [vmem:[%s1 + $0x238] sm:$0xff]
        %v431 = vld [vmem:[%s1 + $0x240] sm:$0xff]
        %v432 = vld [vmem:[%s1 + $0x248] sm:$0xff]
        %v433 = vld [vmem:[%s1 + $0x250] sm:$0xff]
        %v434 = vld [vmem:[%s1 + $0x258] sm:$0xff]
        %v435 = vld [vmem:[%s1 + $0x260] sm:$0xff]
        %v436 = vld [vmem:[%s1 + $0x268] sm:$0xff]
        %v437 = vld [vmem:[%s1 + $0x270] sm:$0xff]
        %v438 = vld [vmem:[%s1 + $0x278] sm:$0xff]
        %v439 = vld [vmem:[%s1 + $0x280] sm:$0xff]
        %v440 = vld [vmem:[%s1 + $0x288] sm:$0xff]
        %v441 = vld [vmem:[%s1 + $0x290] sm:$0xff]
        %v442 = vld [vmem:[%s1 + $0x298] sm:$0xff]
        %v443 = vld [vmem:[%s1 + $0x2a0] sm:$0xff]
        %v444 = vld [vmem:[%s1 + $0x2a8] sm:$0xff]
        %v445 = vld [vmem:[%s1 + $0x2b0] sm:$0xff]
        %v446 = vld [vmem:[%s1 + $0x2b8] sm:$0xff]
        %v447 = vld [vmem:[%s1 + $0x2c0] sm:$0xff]
        %v448 = vld [vmem:[%s1 + $0x2c8] sm:$0xff]
        %v449 = vld [vmem:[%s1 + $0x2d0] sm:$0xff]
        %v450 = vld [vmem:[%s1 + $0x2d8] sm:$0xff]
        %v451 = vld [vmem:[%s1 + $0x2e0] sm:$0xff]
        %v452 = vld [vmem:[%s1 + $0x2e8] sm:$0xff]
        %v453 = vld [vmem:[%s1 + $0x2f0] sm:$0xff]
        %v454 = vld [vmem:[%s1 + $0x2f8] sm:$0xff]
        %v455 = vld [vmem:[%s1 + $0x300] sm:$0xff]
        %v456 = vld [vmem:[%s1 + $0x308] sm:$0xff]
        %v457 = vld [vmem:[%s1 + $0x310] sm:$0xff]
        %v458 = vld [vmem:[%s1 + $0x318] sm:$0xff]
        %v459 = vld [vmem:[%s1 + $0x320] sm:$0xff]
        %v460 = vld [vmem:[%s1 + $0x328] sm:$0xff]
        %v461 = vld [vmem:[%s1 + $0x330] sm:$0xff]
        %v462 = vld [vmem:[%s1 + $0x338] sm:$0xff]
        %v463 = vld [vmem:[%s1 + $0x340] sm:$0xff]
        %v464 = vld [vmem:[%s1 + $0x348] sm:$0xff]
        %v465 = vld [vmem:[%s1 + $0x350] sm:$0xff]
        %v466 = vld [vmem:[%s1 + $0x358] sm:$0xff]
        %v467 = vld [vmem:[%s1 + $0x360] sm:$0xff]
        %v468 = vld [vmem:[%s1 + $0x368] sm:$0xff]
        %v469 = vld [vmem:[%s1 + $0x370] sm:$0xff]
        %v470 = vld [vmem:[%s1 + $0x378] sm:$0xff]
        %v471 = vld [vmem:[%s1 + $0x380] sm:$0xff]
        %v472 = vld [vmem:[%s1 + $0x388] sm:$0xff]
        %v473 = vld [vmem:[%s1 + $0x390] sm:$0xff]
        %v474 = vld [vmem:[%s1 + $0x398] sm:$0xff]
        %v475 = vld [vmem:[%s1 + $0x3a0] sm:$0xff]
        %v476 = vld [vmem:[%s1 + $0x3a8] sm:$0xff]
        %v477 = vld [vmem:[%s1 + $0x3b0] sm:$0xff]
        %v478 = vld [vmem:[%s1 + $0x3b8] sm:$0xff]
        %v479 = vld [vmem:[%s1 + $0x3c0] sm:$0xff]
        %v480 = vld [vmem:[%s1 + $0x3c8] sm:$0xff]
        %v481 = vld [vmem:[%s1 + $0x3d0] sm:$0xff]
        %v482 = vld [vmem:[%s1 + $0x3d8] sm:$0xff]
        %v483 = vld [vmem:[%s1 + $0x3e0] sm:$0xff]
        %v484 = vld [vmem:[%s1 + $0x3e8] sm:$0xff]
        %v485 = vld [vmem:[%s1 + $0x3f0] sm:$0xff]
        %v486 = vld [vmem:[%s1 + $0x3f8] sm:$0xff]
        %v487 = vld [vmem:[%s1 + $0x400] sm:$0xff]
        %v488 = vld [vmem:[%s1 + $0x408] sm:$0xff]
        %v489 = vld [vmem:[%s1 + $0x410] sm:$0xff]
        %v490 = vld [vmem:[%s1 + $0x418] sm:$0xff]
        %v491 = vld [vmem:[%s1 + $0x420] sm:$0xff]
        %v492 = vld [vmem:[%s1 + $0x428] sm:$0xff]
        %v493 = vld [vmem:[%s1 + $0x430] sm:$0xff]
        %v494 = vld [vmem:[%s1 + $0x438] sm:$0xff]
        %v495 = vld [vmem:[%s1 + $0x440] sm:$0xff]
        %v496 = vld [vmem:[%s1 + $0x448] sm:$0xff]
        %v497 = vld [vmem:[%s1 + $0x450] sm:$0xff]
        %v498 = vld [vmem:[%s1 + $0x458] sm:$0xff]
        %v499 = vld [vmem:[%s1 + $0x460] sm:$0xff]
        %v500 = vld [vmem:[%s1 + $0x468] sm:$0xff]
        %v501 = vld [vmem:[%s1 + $0x470] sm:$0xff]
        %v502 = vld [vmem:[%s1 + $0x478] sm:$0xff]
        %v503 = vld [vmem:[%s1 + $0x480] sm:$0xff]
        %v504 = vld [vmem:[%s1 + $0x488] sm:$0xff]
        %v505 = vld [vmem:[%s1 + $0x490] sm:$0xff]
        %v506 = vld [vmem:[%s1 + $0x498] sm:$0xff]
        %v507 = vld [vmem:[%s1 + $0x4a0] sm:$0xff]
        %v508 = vld [vmem:[%s1 + $0x4a8] sm:$0xff]
        %v509 = vld [vmem:[%s1 + $0x4b0] sm:$0xff]
        %v510 = vld [vmem:[%s1 + $0x4b8] sm:$0xff]
        %v511 = vld [vmem:[%s1 + $0x4c0] sm:$0xff]
        %v512 = vld [vmem:[%s1 + $0x4c8] sm:$0xff]
        %v513 = vld [vmem:[%s1 + $0x4d0] sm:$0xff]
        %v514 = vld [vmem:[%s1 + $0x4d8] sm:$0xff]
        %v515 = vld [vmem:[%s1 + $0x4e0] sm:$0xff]
        %v516 = vld [vmem:[%s1 + $0x4e8] sm:$0xff]
        %v517 = vld [vmem:[%s1 + $0x4f0] sm:$0xff]
        %v518 = vld [vmem:[%s1 + $0x4f8] sm:$0xff]
        %v519 = vld [vmem:[%s2] ss:$8 sm:$0x3]
        %v521 = vlaneseq
        %v522 = vshrl.u32 %v521, 7
        %v523 = vsub.s32 0, %v522
        %v524 = vrot.slane %v519, %v523
        %v525 = vlaneseq
        %v526 = vshrl.u32 %v525, 7
        %v527 = vsub.s32 1, %v526
        %v528 = vrot.slane %v519, %v527
        %531 = vmatprep.subr.mxu0 %v360
        %532 = vmatpush1.msra.mxu0 %v359
        %533 = vmatprep.subr.mxu0 %v362
        %534 = vmatpush1.msra.mxu0 %v361
        %535 = vmatprep.subr.mxu0 %v364
        %536 = vmatpush1.msra.mxu0 %v363
        %537 = vmatprep.subr.mxu0 %v366
        %538 = vmatpush1.msra.mxu0 %v365
        %539 = vmatprep.subr.mxu0 %v368
        %540 = vmatpush1.msra.mxu0 %v367
        %541 = vmatprep.subr.mxu0 %v370
        %542 = vmatpush1.msra.mxu0 %v369
        %543 = vmatprep.subr.mxu0 %v372
        %544 = vmatpush1.msra.mxu0 %v371
        %545 = vmatprep.subr.mxu0 %v374
        %546 = vmatpush1.msra.mxu0 %v373
        %547 = vmatprep.subr.mxu0 %v376
        %548 = vmatpush1.msra.mxu0 %v375
        %549 = vmatprep.subr.mxu0 %v378
        %550 = vmatpush1.msra.mxu0 %v377
        %551 = vmatprep.subr.mxu0 %v380
        %552 = vmatpush1.msra.mxu0 %v379
        %553 = vmatprep.subr.mxu0 %v382
        %554 = vmatpush1.msra.mxu0 %v381
        %555 = vmatprep.subr.mxu0 %v384
        %556 = vmatpush1.msra.mxu0 %v383
        %557 = vmatprep.subr.mxu0 %v386
        %558 = vmatpush1.msra.mxu0 %v385
        %559 = vmatprep.subr.mxu0 %v388
        %560 = vmatpush1.msra.mxu0 %v387
        %561 = vmatprep.subr.mxu0 %v390
        %562 = vmatpush1.msra.mxu0 %v389
        %563 = vmatprep.subr.mxu0 %v392
        %564 = vmatpush1.msra.mxu0 %v391
        %565 = vmatprep.subr.mxu0 %v394
        %566 = vmatpush1.msra.mxu0 %v393
        %567 = vmatprep.subr.mxu0 %v396
        %568 = vmatpush1.msra.mxu0 %v395
        %569 = vmatprep.subr.mxu0 %v398
        %570 = vmatpush1.msra.mxu0 %v397
        %571 = vmatprep.subr.mxu0 %v400
        %572 = vmatpush1.msra.mxu0 %v399
        %573 = vmatprep.subr.mxu0 %v402
        %574 = vmatpush1.msra.mxu0 %v401
        %575 = vmatprep.subr.mxu0 %v404
        %576 = vmatpush1.msra.mxu0 %v403
        %577 = vmatprep.subr.mxu0 %v406
        %578 = vmatpush1.msra.mxu0 %v405
        %579 = vmatprep.subr.mxu0 %v408
        %580 = vmatpush1.msra.mxu0 %v407
        %581 = vmatprep.subr.mxu0 %v410
        %582 = vmatpush1.msra.mxu0 %v409
        %583 = vmatprep.subr.mxu0 %v412
        %584 = vmatpush1.msra.mxu0 %v411
        %585 = vmatprep.subr.mxu0 %v414
        %586 = vmatpush1.msra.mxu0 %v413
        %587 = vmatprep.subr.mxu0 %v416
        %588 = vmatpush1.msra.mxu0 %v415
        %589 = vmatprep.subr.mxu0 %v418
        %590 = vmatpush1.msra.mxu0 %v417
        %591 = vmatprep.subr.mxu0 %v420
        %592 = vmatpush1.msra.mxu0 %v419
        %593 = vmatprep.subr.mxu0 %v422
        %594 = vmatpush1.msra.mxu0 %v421
        %595 = vmatprep.mubr.f32.mxu0 %v328
        %596 = vmatmul.mubr.f32.gmra.mrb[0].mxu0 %v327
        %v597 = vpop.f32.mrb[0].mxu0
        %v598 = vadd.f32 %v524, %v597
        %v599 = vpop.f32.mrb[0].mxu0
        %v600 = vadd.f32 %v528, %v599
        %601 = vmatprep.mubr.f32.mxu0 %v329
        %602 = vmatmul.mubr.f32.gmra.mrb[0].mxu0 %v328
        %v603 = vpop.f32.mrb[0].mxu0
        %v604 = vadd.f32 %v524, %v603
        %v605 = vpop.f32.mrb[0].mxu0
        %v606 = vadd.f32 %v528, %v605
        %607 = vmatprep.mubr.f32.mxu0 %v330
        %608 = vmatmul.mubr.f32.gmra.mrb[0].mxu0 %v329
        %v609 = vpop.f32.mrb[0].mxu0
        %v610 = vadd.f32 %v524, %v609
        %v611 = vpop.f32.mrb[0].mxu0
        %v612 = vadd.f32 %v528, %v611
        %613 = vmatprep.mubr.f32.mxu0 %v331
        %614 = vmatmul.mubr.f32.gmra.mrb[0].mxu0 %v330
        %v615 = vpop.f32.mrb[0].mxu0
        %v616 = vadd.f32 %v524, %v615
        %v617 = vpop.f32.mrb[0].mxu0
        %v618 = vadd.f32 %v528, %v617
        %619 = vmatprep.mubr.f32.mxu0 %v332
        %620 = vmatmul.mubr.f32.gmra.mrb[0].mxu0 %v331
        %v621 = vpop.f32.mrb[0].mxu0
        %v622 = vadd.f32 %v524, %v621
        %v623 = vpop.f32.mrb[0].mxu0
        %v624 = vadd.f32 %v528, %v623
        %625 = vmatprep.mubr.f32.mxu0 %v333
        %626 = vmatmul.mubr.f32.gmra.mrb[0].mxu0 %v332
        %v627 = vpop.f32.mrb[0].mxu0
        %v628 = vadd.f32 %v524, %v627
        %v629 = vpop.f32.mrb[0].mxu0
        %v630 = vadd.f32 %v528, %v629
        %631 = vmatprep.mubr.f32.mxu0 %v334
        %632 = vmatmul.mubr.f32.gmra.mrb[0].mxu0 %v333
        %v633 = vpop.f32.mrb[0].mxu0
        %v634 = vadd.f32 %v524, %v633
        %v635 = vpop.f32.mrb[0].mxu0
        %v636 = vadd.f32 %v528, %v635
        %637 = vmatprep.mubr.f32.mxu0 %v335
        %638 = vmatmul.mubr.f32.gmra.mrb[0].mxu0 %v334
        %v639 = vpop.f32.mrb[0].mxu0
        %v640 = vadd.f32 %v524, %v639
        %v641 = vpop.f32.mrb[0].mxu0
        %v642 = vadd.f32 %v528, %v641
        %643 = vmatprep.mubr.f32.mxu0 %v336
        %644 = vmatmul.mubr.f32.gmra.mrb[0].mxu0 %v335
        %v645 = vpop.f32.mrb[0].mxu0
        %v646 = vadd.f32 %v524, %v645
        %v647 = vpop.f32.mrb[0].mxu0
        %v648 = vadd.f32 %v528, %v647
        %649 = vmatprep.mubr.f32.mxu0 %v337
        %650 = vmatmul.mubr.f32.gmra.mrb[0].mxu0 %v336
        %v651 = vpop.f32.mrb[0].mxu0
        %v652 = vadd.f32 %v524, %v651
        %v653 = vpop.f32.mrb[0].mxu0
        %v654 = vadd.f32 %v528, %v653
        %655 = vmatprep.mubr.f32.mxu0 %v338
        %656 = vmatmul.mubr.f32.gmra.mrb[0].mxu0 %v337
        %v657 = vpop.f32.mrb[0].mxu0
        %v658 = vadd.f32 %v524, %v657
        %v659 = vpop.f32.mrb[0].mxu0
        %v660 = vadd.f32 %v528, %v659
        %661 = vmatprep.mubr.f32.mxu0 %v339
        %662 = vmatmul.mubr.f32.gmra.mrb[0].mxu0 %v338
        %v663 = vpop.f32.mrb[0].mxu0
        %v664 = vadd.f32 %v524, %v663
        %v665 = vpop.f32.mrb[0].mxu0
        %v666 = vadd.f32 %v528, %v665
        %667 = vmatprep.mubr.f32.mxu0 %v340
        %668 = vmatmul.mubr.f32.gmra.mrb[0].mxu0 %v339
        %v669 = vpop.f32.mrb[0].mxu0
        %v670 = vadd.f32 %v524, %v669
        %v671 = vpop.f32.mrb[0].mxu0
        %v672 = vadd.f32 %v528, %v671
        %673 = vmatprep.mubr.f32.mxu0 %v341
        %674 = vmatmul.mubr.f32.gmra.mrb[0].mxu0 %v340
        %v675 = vpop.f32.mrb[0].mxu0
        %v676 = vadd.f32 %v524, %v675
        %v677 = vpop.f32.mrb[0].mxu0
        %v678 = vadd.f32 %v528, %v677
        %679 = vmatprep.mubr.f32.mxu0 %v342
        %680 = vmatmul.mubr.f32.gmra.mrb[0].mxu0 %v341
        %v681 = vpop.f32.mrb[0].mxu0
        %v682 = vadd.f32 %v524, %v681
        %v683 = vpop.f32.mrb[0].mxu0
        %v684 = vadd.f32 %v528, %v683
        %685 = vmatprep.mubr.f32.mxu0 %v343
        %686 = vmatmul.mubr.f32.gmra.mrb[0].mxu0 %v342
        %v687 = vpop.f32.mrb[0].mxu0
        %v688 = vadd.f32 %v524, %v687
        %v689 = vpop.f32.mrb[0].mxu0
        %v690 = vadd.f32 %v528, %v689
        %691 = vmatprep.mubr.f32.mxu0 %v344
        %692 = vmatmul.mubr.f32.gmra.mrb[0].mxu0 %v343
        %v693 = vpop.f32.mrb[0].mxu0
        %v694 = vadd.f32 %v524, %v693
        %v695 = vpop.f32.mrb[0].mxu0
        %v696 = vadd.f32 %v528, %v695
        %697 = vmatprep.mubr.f32.mxu0 %v345
        %698 = vmatmul.mubr.f32.gmra.mrb[0].mxu0 %v344
        %v699 = vpop.f32.mrb[0].mxu0
        %v700 = vadd.f32 %v524, %v699
        %v701 = vpop.f32.mrb[0].mxu0
        %v702 = vadd.f32 %v528, %v701
        %703 = vmatprep.mubr.f32.mxu0 %v346
        %704 = vmatmul.mubr.f32.gmra.mrb[0].mxu0 %v345
        %v705 = vpop.f32.mrb[0].mxu0
        %v706 = vadd.f32 %v524, %v705
        %v707 = vpop.f32.mrb[0].mxu0
        %v708 = vadd.f32 %v528, %v707
        %709 = vmatprep.mubr.f32.mxu0 %v347
        %710 = vmatmul.mubr.f32.gmra.mrb[0].mxu0 %v346
        %v711 = vpop.f32.mrb[0].mxu0
        %v712 = vadd.f32 %v524, %v711
        %v713 = vpop.f32.mrb[0].mxu0
        %v714 = vadd.f32 %v528, %v713
        %715 = vmatprep.mubr.f32.mxu0 %v348
        %716 = vmatmul.mubr.f32.gmra.mrb[0].mxu0 %v347
        %v717 = vpop.f32.mrb[0].mxu0
        %v718 = vadd.f32 %v524, %v717
        %v719 = vpop.f32.mrb[0].mxu0
        %v720 = vadd.f32 %v528, %v719
        %721 = vmatprep.mubr.f32.mxu0 %v349
        %722 = vmatmul.mubr.f32.gmra.mrb[0].mxu0 %v348
        %v723 = vpop.f32.mrb[0].mxu0
        %v724 = vadd.f32 %v524, %v723
        %v725 = vpop.f32.mrb[0].mxu0
        %v726 = vadd.f32 %v528, %v725
        %727 = vmatprep.mubr.f32.mxu0 %v350
        %728 = vmatmul.mubr.f32.gmra.mrb[0].mxu0 %v349
        %v729 = vpop.f32.mrb[0].mxu0
        %v730 = vadd.f32 %v524, %v729
        %v731 = vpop.f32.mrb[0].mxu0
        %v732 = vadd.f32 %v528, %v731
        %733 = vmatprep.mubr.f32.mxu0 %v351
        %734 = vmatmul.mubr.f32.gmra.mrb[0].mxu0 %v350
        %v735 = vpop.f32.mrb[0].mxu0
        %v736 = vadd.f32 %v524, %v735
        %v737 = vpop.f32.mrb[0].mxu0
        %v738 = vadd.f32 %v528, %v737
        %739 = vmatprep.mubr.f32.mxu0 %v352
        %740 = vmatmul.mubr.f32.gmra.mrb[0].mxu0 %v351
        %v741 = vpop.f32.mrb[0].mxu0
        %v742 = vadd.f32 %v524, %v741
        %v743 = vpop.f32.mrb[0].mxu0
        %v744 = vadd.f32 %v528, %v743
        %745 = vmatprep.mubr.f32.mxu0 %v353
        %746 = vmatmul.mubr.f32.gmra.mrb[0].mxu0 %v352
        %v747 = vpop.f32.mrb[0].mxu0
        %v748 = vadd.f32 %v524, %v747
        %v749 = vpop.f32.mrb[0].mxu0
        %v750 = vadd.f32 %v528, %v749
        %751 = vmatprep.mubr.f32.mxu0 %v354
        %752 = vmatmul.mubr.f32.gmra.mrb[0].mxu0 %v353
        %v753 = vpop.f32.mrb[0].mxu0
        %v754 = vadd.f32 %v524, %v753
        %v755 = vpop.f32.mrb[0].mxu0
        %v756 = vadd.f32 %v528, %v755
        %757 = vmatprep.mubr.f32.mxu0 %v355
        %758 = vmatmul.mubr.f32.gmra.mrb[0].mxu0 %v354
        %v759 = vpop.f32.mrb[0].mxu0
        %v760 = vadd.f32 %v524, %v759
        %v761 = vpop.f32.mrb[0].mxu0
        %v762 = vadd.f32 %v528, %v761
        %763 = vdwg.mxu0
        %764 = vmatprep.subr.mxu0 %v424
        %765 = vmatpush1.msra.mxu0 %v423
        %766 = vmatprep.subr.mxu0 %v426
        %767 = vmatpush1.msra.mxu0 %v425
        %768 = vmatprep.subr.mxu0 %v428
        %769 = vmatpush1.msra.mxu0 %v427
        %770 = vmatprep.subr.mxu0 %v430
        %771 = vmatpush1.msra.mxu0 %v429
        %772 = vmatprep.subr.mxu0 %v432
        %773 = vmatpush1.msra.mxu0 %v431
        %774 = vmatprep.subr.mxu0 %v434
        %775 = vmatpush1.msra.mxu0 %v433
        %776 = vmatprep.subr.mxu0 %v436
        %777 = vmatpush1.msra.mxu0 %v435
        %778 = vmatprep.subr.mxu0 %v438
        %779 = vmatpush1.msra.mxu0 %v437
        %780 = vmatprep.subr.mxu0 %v440
        %781 = vmatpush1.msra.mxu0 %v439
        %782 = vmatprep.subr.mxu0 %v442
        %783 = vmatpush1.msra.mxu0 %v441
        %784 = vmatprep.subr.mxu0 %v444
        %785 = vmatpush1.msra.mxu0 %v443
        %786 = vmatprep.subr.mxu0 %v446
        %787 = vmatpush1.msra.mxu0 %v445
        %788 = vmatprep.subr.mxu0 %v448
        %789 = vmatpush1.msra.mxu0 %v447
        %790 = vmatprep.subr.mxu0 %v450
        %791 = vmatpush1.msra.mxu0 %v449
        %792 = vmatprep.subr.mxu0 %v452
        %793 = vmatpush1.msra.mxu0 %v451
        %794 = vmatprep.subr.mxu0 %v454
        %795 = vmatpush1.msra.mxu0 %v453
        %796 = vmatprep.subr.mxu0 %v456
        %797 = vmatpush1.msra.mxu0 %v455
        %798 = vmatprep.subr.mxu0 %v458
        %799 = vmatpush1.msra.mxu0 %v457
        %800 = vmatprep.subr.mxu0 %v460
        %801 = vmatpush1.msra.mxu0 %v459
        %802 = vmatprep.subr.mxu0 %v462
        %803 = vmatpush1.msra.mxu0 %v461
        %804 = vmatprep.subr.mxu0 %v464
        %805 = vmatpush1.msra.mxu0 %v463
        %806 = vmatprep.subr.mxu0 %v466
        %807 = vmatpush1.msra.mxu0 %v465
        %808 = vmatprep.subr.mxu0 %v468
        %809 = vmatpush1.msra.mxu0 %v467
        %810 = vmatprep.subr.mxu0 %v470
        %811 = vmatpush1.msra.mxu0 %v469
        %812 = vmatprep.subr.mxu0 %v472
        %813 = vmatpush1.msra.mxu0 %v471
        %814 = vmatprep.subr.mxu0 %v474
        %815 = vmatpush1.msra.mxu0 %v473
        %816 = vmatprep.subr.mxu0 %v476
        %817 = vmatpush1.msra.mxu0 %v475
        %818 = vmatprep.subr.mxu0 %v478
        %819 = vmatpush1.msra.mxu0 %v477
        %820 = vmatprep.subr.mxu0 %v480
        %821 = vmatpush1.msra.mxu0 %v479
        %822 = vmatprep.subr.mxu0 %v482
        %823 = vmatpush1.msra.mxu0 %v481
        %824 = vmatprep.subr.mxu0 %v484
        %825 = vmatpush1.msra.mxu0 %v483
        %826 = vmatprep.subr.mxu0 %v486
        %827 = vmatpush1.msra.mxu0 %v485
        %828 = vmatprep.mubr.f32.mxu0 %v330
        %829 = vmatmul.mubr.f32.gmra.mrb[0].mxu0 %v329
        %v830 = vpop.f32.mrb[0].mxu0
        %v831 = vadd.f32 %v598, %v830
        %v832 = vpop.f32.mrb[0].mxu0
        %v833 = vadd.f32 %v600, %v832
        %834 = vmatprep.mubr.f32.mxu0 %v331
        %835 = vmatmul.mubr.f32.gmra.mrb[0].mxu0 %v330
        %v836 = vpop.f32.mrb[0].mxu0
        %v837 = vadd.f32 %v604, %v836
        %v838 = vpop.f32.mrb[0].mxu0
        %v839 = vadd.f32 %v606, %v838
        %840 = vmatprep.mubr.f32.mxu0 %v332
        %841 = vmatmul.mubr.f32.gmra.mrb[0].mxu0 %v331
        %v842 = vpop.f32.mrb[0].mxu0
        %v843 = vadd.f32 %v610, %v842
        %v844 = vpop.f32.mrb[0].mxu0
        %v845 = vadd.f32 %v612, %v844
        %846 = vmatprep.mubr.f32.mxu0 %v333
        %847 = vmatmul.mubr.f32.gmra.mrb[0].mxu0 %v332
        %v848 = vpop.f32.mrb[0].mxu0
        %v849 = vadd.f32 %v616, %v848
        %v850 = vpop.f32.mrb[0].mxu0
        %v851 = vadd.f32 %v618, %v850
        %852 = vmatprep.mubr.f32.mxu0 %v334
        %853 = vmatmul.mubr.f32.gmra.mrb[0].mxu0 %v333
        %v854 = vpop.f32.mrb[0].mxu0
        %v855 = vadd.f32 %v622, %v854
        %v856 = vpop.f32.mrb[0].mxu0
        %v857 = vadd.f32 %v624, %v856
        %858 = vmatprep.mubr.f32.mxu0 %v335
        %859 = vmatmul.mubr.f32.gmra.mrb[0].mxu0 %v334
        %v860 = vpop.f32.mrb[0].mxu0
        %v861 = vadd.f32 %v628, %v860
        %v862 = vpop.f32.mrb[0].mxu0
        %v863 = vadd.f32 %v630, %v862
        %864 = vmatprep.mubr.f32.mxu0 %v336
        %865 = vmatmul.mubr.f32.gmra.mrb[0].mxu0 %v335
        %v866 = vpop.f32.mrb[0].mxu0
        %v867 = vadd.f32 %v634, %v866
        %v868 = vpop.f32.mrb[0].mxu0
        %v869 = vadd.f32 %v636, %v868
        %870 = vmatprep.mubr.f32.mxu0 %v337
        %871 = vmatmul.mubr.f32.gmra.mrb[0].mxu0 %v336
        %v872 = vpop.f32.mrb[0].mxu0
        %v873 = vadd.f32 %v640, %v872
        %v874 = vpop.f32.mrb[0].mxu0
        %v875 = vadd.f32 %v642, %v874
        %876 = vmatprep.mubr.f32.mxu0 %v338
        %877 = vmatmul.mubr.f32.gmra.mrb[0].mxu0 %v337
        %v878 = vpop.f32.mrb[0].mxu0
        %v879 = vadd.f32 %v646, %v878
        %v880 = vpop.f32.mrb[0].mxu0
        %v881 = vadd.f32 %v648, %v880
        %882 = vmatprep.mubr.f32.mxu0 %v339
        %883 = vmatmul.mubr.f32.gmra.mrb[0].mxu0 %v338
        %v884 = vpop.f32.mrb[0].mxu0
        %v885 = vadd.f32 %v652, %v884
        %v886 = vpop.f32.mrb[0].mxu0
        %v887 = vadd.f32 %v654, %v886
        %888 = vmatprep.mubr.f32.mxu0 %v340
        %889 = vmatmul.mubr.f32.gmra.mrb[0].mxu0 %v339
        %v890 = vpop.f32.mrb[0].mxu0
        %v891 = vadd.f32 %v658, %v890
        %v892 = vpop.f32.mrb[0].mxu0
        %v893 = vadd.f32 %v660, %v892
        %894 = vmatprep.mubr.f32.mxu0 %v341
        %895 = vmatmul.mubr.f32.gmra.mrb[0].mxu0 %v340
        %v896 = vpop.f32.mrb[0].mxu0
        %v897 = vadd.f32 %v664, %v896
        %v898 = vpop.f32.mrb[0].mxu0
        %v899 = vadd.f32 %v666, %v898
        %900 = vmatprep.mubr.f32.mxu0 %v342
        %901 = vmatmul.mubr.f32.gmra.mrb[0].mxu0 %v341
        %v902 = vpop.f32.mrb[0].mxu0
        %v903 = vadd.f32 %v670, %v902
        %v904 = vpop.f32.mrb[0].mxu0
        %v905 = vadd.f32 %v672, %v904
        %906 = vmatprep.mubr.f32.mxu0 %v343
        %907 = vmatmul.mubr.f32.gmra.mrb[0].mxu0 %v342
        %v908 = vpop.f32.mrb[0].mxu0
        %v909 = vadd.f32 %v676, %v908
        %v910 = vpop.f32.mrb[0].mxu0
        %v911 = vadd.f32 %v678, %v910
        %912 = vmatprep.mubr.f32.mxu0 %v344
        %913 = vmatmul.mubr.f32.gmra.mrb[0].mxu0 %v343
        %v914 = vpop.f32.mrb[0].mxu0
        %v915 = vadd.f32 %v682, %v914
        %v916 = vpop.f32.mrb[0].mxu0
        %v917 = vadd.f32 %v684, %v916
        %918 = vmatprep.mubr.f32.mxu0 %v345
        %919 = vmatmul.mubr.f32.gmra.mrb[0].mxu0 %v344
        %v920 = vpop.f32.mrb[0].mxu0
        %v921 = vadd.f32 %v688, %v920
        %v922 = vpop.f32.mrb[0].mxu0
        %v923 = vadd.f32 %v690, %v922
        %924 = vmatprep.mubr.f32.mxu0 %v346
        %925 = vmatmul.mubr.f32.gmra.mrb[0].mxu0 %v345
        %v926 = vpop.f32.mrb[0].mxu0
        %v927 = vadd.f32 %v694, %v926
        %v928 = vpop.f32.mrb[0].mxu0
        %v929 = vadd.f32 %v696, %v928
        %930 = vmatprep.mubr.f32.mxu0 %v347
        %931 = vmatmul.mubr.f32.gmra.mrb[0].mxu0 %v346
        %v932 = vpop.f32.mrb[0].mxu0
        %v933 = vadd.f32 %v700, %v932
        %v934 = vpop.f32.mrb[0].mxu0
        %v935 = vadd.f32 %v702, %v934
        %936 = vmatprep.mubr.f32.mxu0 %v348
        %937 = vmatmul.mubr.f32.gmra.mrb[0].mxu0 %v347
        %v938 = vpop.f32.mrb[0].mxu0
        %v939 = vadd.f32 %v706, %v938
        %v940 = vpop.f32.mrb[0].mxu0
        %v941 = vadd.f32 %v708, %v940
        %942 = vmatprep.mubr.f32.mxu0 %v349
        %943 = vmatmul.mubr.f32.gmra.mrb[0].mxu0 %v348
        %v944 = vpop.f32.mrb[0].mxu0
        %v945 = vadd.f32 %v712, %v944
        %v946 = vpop.f32.mrb[0].mxu0
        %v947 = vadd.f32 %v714, %v946
        %948 = vmatprep.mubr.f32.mxu0 %v350
        %949 = vmatmul.mubr.f32.gmra.mrb[0].mxu0 %v349
        %v950 = vpop.f32.mrb[0].mxu0
        %v951 = vadd.f32 %v718, %v950
        %v952 = vpop.f32.mrb[0].mxu0
        %v953 = vadd.f32 %v720, %v952
        %954 = vmatprep.mubr.f32.mxu0 %v351
        %955 = vmatmul.mubr.f32.gmra.mrb[0].mxu0 %v350
        %v956 = vpop.f32.mrb[0].mxu0
        %v957 = vadd.f32 %v724, %v956
        %v958 = vpop.f32.mrb[0].mxu0
        %v959 = vadd.f32 %v726, %v958
        %960 = vmatprep.mubr.f32.mxu0 %v352
        %961 = vmatmul.mubr.f32.gmra.mrb[0].mxu0 %v351
        %v962 = vpop.f32.mrb[0].mxu0
        %v963 = vadd.f32 %v730, %v962
        %v964 = vpop.f32.mrb[0].mxu0
        %v965 = vadd.f32 %v732, %v964
        %966 = vmatprep.mubr.f32.mxu0 %v353
        %967 = vmatmul.mubr.f32.gmra.mrb[0].mxu0 %v352
        %v968 = vpop.f32.mrb[0].mxu0
        %v969 = vadd.f32 %v736, %v968
        %v970 = vpop.f32.mrb[0].mxu0
        %v971 = vadd.f32 %v738, %v970
        %972 = vmatprep.mubr.f32.mxu0 %v354
        %973 = vmatmul.mubr.f32.gmra.mrb[0].mxu0 %v353
        %v974 = vpop.f32.mrb[0].mxu0
        %v975 = vadd.f32 %v742, %v974
        %v976 = vpop.f32.mrb[0].mxu0
        %v977 = vadd.f32 %v744, %v976
        %978 = vmatprep.mubr.f32.mxu0 %v355
        %979 = vmatmul.mubr.f32.gmra.mrb[0].mxu0 %v354
        %v980 = vpop.f32.mrb[0].mxu0
        %v981 = vadd.f32 %v748, %v980
        %v982 = vpop.f32.mrb[0].mxu0
        %v983 = vadd.f32 %v750, %v982
        %984 = vmatprep.mubr.f32.mxu0 %v356
        %985 = vmatmul.mubr.f32.gmra.mrb[0].mxu0 %v355
        %v986 = vpop.f32.mrb[0].mxu0
        %v987 = vadd.f32 %v754, %v986
        %v988 = vpop.f32.mrb[0].mxu0
        %v989 = vadd.f32 %v756, %v988
        %990 = vmatprep.mubr.f32.mxu0 %v357
        %991 = vmatmul.mubr.f32.gmra.mrb[0].mxu0 %v356
        %v992 = vpop.f32.mrb[0].mxu0
        %v993 = vadd.f32 %v760, %v992
        %v994 = vpop.f32.mrb[0].mxu0
        %v995 = vadd.f32 %v762, %v994
        %996 = vdwg.mxu0
        %997 = vmatprep.subr.mxu0 %v488
        %998 = vmatpush1.msra.mxu0 %v487
        %999 = vmatprep.subr.mxu0 %v490
        %1000 = vmatpush1.msra.mxu0 %v489
        %1001 = vmatprep.subr.mxu0 %v492
        %1002 = vmatpush1.msra.mxu0 %v491
        %1003 = vmatprep.subr.mxu0 %v494
        %1004 = vmatpush1.msra.mxu0 %v493
        %1005 = vmatprep.subr.mxu0 %v496
        %1006 = vmatpush1.msra.mxu0 %v495
        %1007 = vmatprep.subr.mxu0 %v498
        %1008 = vmatpush1.msra.mxu0 %v497
        %1009 = vmatprep.subr.mxu0 %v500
        %1010 = vmatpush1.msra.mxu0 %v499
        %1011 = vmatprep.subr.mxu0 %v502
        %1012 = vmatpush1.msra.mxu0 %v501
        %1013 = vmatprep.subr.mxu0 %v504
        %1014 = vmatpush1.msra.mxu0 %v503
        %1015 = vmatprep.subr.mxu0 %v506
        %1016 = vmatpush1.msra.mxu0 %v505
        %1017 = vmatprep.subr.mxu0 %v508
        %1018 = vmatpush1.msra.mxu0 %v507
        %1019 = vmatprep.subr.mxu0 %v510
        %1020 = vmatpush1.msra.mxu0 %v509
        %1021 = vmatprep.subr.mxu0 %v512
        %1022 = vmatpush1.msra.mxu0 %v511
        %1023 = vmatprep.subr.mxu0 %v514
        %1024 = vmatpush1.msra.mxu0 %v513
        %1025 = vmatprep.subr.mxu0 %v516
        %1026 = vmatpush1.msra.mxu0 %v515
        %1027 = vmatprep.subr.mxu0 %v518
        %1028 = vmatpush1.msra.mxu0 %v517
        %1029 = vmatprep.subr.mxu0 0.0
        %1030 = vmatpush1.msra.mxu0 0.0
        %1031 = vmatprep.subr.mxu0 0.0
        %1032 = vmatpush1.msra.mxu0 0.0
        %1033 = vmatprep.subr.mxu0 0.0
        %1034 = vmatpush1.msra.mxu0 0.0
        %1035 = vmatprep.subr.mxu0 0.0
        %1036 = vmatpush1.msra.mxu0 0.0
        %1037 = vmatprep.subr.mxu0 0.0
        %1038 = vmatpush1.msra.mxu0 0.0
        %1039 = vmatprep.subr.mxu0 0.0
        %1040 = vmatpush1.msra.mxu0 0.0
        %1041 = vmatprep.subr.mxu0 0.0
        %1042 = vmatpush1.msra.mxu0 0.0
        %1043 = vmatprep.subr.mxu0 0.0
        %1044 = vmatpush1.msra.mxu0 0.0
        %1045 = vmatprep.subr.mxu0 0.0
        %1046 = vmatpush1.msra.mxu0 0.0
        %1047 = vmatprep.subr.mxu0 0.0
        %1048 = vmatpush1.msra.mxu0 0.0
        %1049 = vmatprep.subr.mxu0 0.0
        %1050 = vmatpush1.msra.mxu0 0.0
        %1051 = vmatprep.subr.mxu0 0.0
        %1052 = vmatpush1.msra.mxu0 0.0
        %1053 = vmatprep.subr.mxu0 0.0
        %1054 = vmatpush1.msra.mxu0 0.0
        %1055 = vmatprep.subr.mxu0 0.0
        %1056 = vmatpush1.msra.mxu0 0.0
        %1057 = vmatprep.subr.mxu0 0.0
        %1058 = vmatpush1.msra.mxu0 0.0
        %1059 = vmatprep.subr.mxu0 0.0
        %1060 = vmatpush1.msra.mxu0 0.0
        %1061 = vmatprep.mubr.f32.mxu0 0.0
        %1062 = vmatmul.mubr.f32.gmra.mrb[0].mxu0 %v331
        %v1063 = vpop.f32.mrb[0].mxu0
        %v1064 = vadd.f32 %v831, %v1063
        %v1065 = vpop.f32.mrb[0].mxu0
        %v1066 = vadd.f32 %v833, %v1065
        %1067 = vmatprep.mubr.f32.mxu0 0.0
        %1068 = vmatmul.mubr.f32.gmra.mrb[0].mxu0 %v332
        %v1069 = vpop.f32.mrb[0].mxu0
        %v1070 = vadd.f32 %v837, %v1069
        %v1071 = vpop.f32.mrb[0].mxu0
        %v1072 = vadd.f32 %v839, %v1071
        %1073 = vmatprep.mubr.f32.mxu0 0.0
        %1074 = vmatmul.mubr.f32.gmra.mrb[0].mxu0 %v333
        %v1075 = vpop.f32.mrb[0].mxu0
        %v1076 = vadd.f32 %v843, %v1075
        %v1077 = vpop.f32.mrb[0].mxu0
        %v1078 = vadd.f32 %v845, %v1077
        %1079 = vmatprep.mubr.f32.mxu0 0.0
        %1080 = vmatmul.mubr.f32.gmra.mrb[0].mxu0 %v334
        %v1081 = vpop.f32.mrb[0].mxu0
        %v1082 = vadd.f32 %v849, %v1081
        %v1083 = vpop.f32.mrb[0].mxu0
        %v1084 = vadd.f32 %v851, %v1083
        %1085 = vmatprep.mubr.f32.mxu0 0.0
        %1086 = vmatmul.mubr.f32.gmra.mrb[0].mxu0 %v335
        %v1087 = vpop.f32.mrb[0].mxu0
        %v1088 = vadd.f32 %v855, %v1087
        %v1089 = vpop.f32.mrb[0].mxu0
        %v1090 = vadd.f32 %v857, %v1089
        %1091 = vmatprep.mubr.f32.mxu0 0.0
        %1092 = vmatmul.mubr.f32.gmra.mrb[0].mxu0 %v336
        %v1093 = vpop.f32.mrb[0].mxu0
        %v1094 = vadd.f32 %v861, %v1093
        %v1095 = vpop.f32.mrb[0].mxu0
        %v1096 = vadd.f32 %v863, %v1095
        %1097 = vmatprep.mubr.f32.mxu0 0.0
        %1098 = vmatmul.mubr.f32.gmra.mrb[0].mxu0 %v337
        %v1099 = vpop.f32.mrb[0].mxu0
        %v1100 = vadd.f32 %v867, %v1099
        %v1101 = vpop.f32.mrb[0].mxu0
        %v1102 = vadd.f32 %v869, %v1101
        %1103 = vmatprep.mubr.f32.mxu0 0.0
        %1104 = vmatmul.mubr.f32.gmra.mrb[0].mxu0 %v338
        %v1105 = vpop.f32.mrb[0].mxu0
        %v1106 = vadd.f32 %v873, %v1105
        %v1107 = vpop.f32.mrb[0].mxu0
        %v1108 = vadd.f32 %v875, %v1107
        %1109 = vmatprep.mubr.f32.mxu0 0.0
        %1110 = vmatmul.mubr.f32.gmra.mrb[0].mxu0 %v339
        %v1111 = vpop.f32.mrb[0].mxu0
        %v1112 = vadd.f32 %v879, %v1111
        %v1113 = vpop.f32.mrb[0].mxu0
        %v1114 = vadd.f32 %v881, %v1113
        %1115 = vmatprep.mubr.f32.mxu0 0.0
        %1116 = vmatmul.mubr.f32.gmra.mrb[0].mxu0 %v340
        %v1117 = vpop.f32.mrb[0].mxu0
        %v1118 = vadd.f32 %v885, %v1117
        %v1119 = vpop.f32.mrb[0].mxu0
        %v1120 = vadd.f32 %v887, %v1119
        %1121 = vmatprep.mubr.f32.mxu0 0.0
        %1122 = vmatmul.mubr.f32.gmra.mrb[0].mxu0 %v341
        %v1123 = vpop.f32.mrb[0].mxu0
        %v1124 = vadd.f32 %v891, %v1123
        %v1125 = vpop.f32.mrb[0].mxu0
        %v1126 = vadd.f32 %v893, %v1125
        %1127 = vmatprep.mubr.f32.mxu0 0.0
        %1128 = vmatmul.mubr.f32.gmra.mrb[0].mxu0 %v342
        %v1129 = vpop.f32.mrb[0].mxu0
        %v1130 = vadd.f32 %v897, %v1129
        %v1131 = vpop.f32.mrb[0].mxu0
        %v1132 = vadd.f32 %v899, %v1131
        %1133 = vmatprep.mubr.f32.mxu0 0.0
        %1134 = vmatmul.mubr.f32.gmra.mrb[0].mxu0 %v343
        %v1135 = vpop.f32.mrb[0].mxu0
        %v1136 = vadd.f32 %v903, %v1135
        %v1137 = vpop.f32.mrb[0].mxu0
        %v1138 = vadd.f32 %v905, %v1137
        %1139 = vmatprep.mubr.f32.mxu0 0.0
        %1140 = vmatmul.mubr.f32.gmra.mrb[0].mxu0 %v344
        %v1141 = vpop.f32.mrb[0].mxu0
        %v1142 = vadd.f32 %v909, %v1141
        %v1143 = vpop.f32.mrb[0].mxu0
        %v1144 = vadd.f32 %v911, %v1143
        %1145 = vmatprep.mubr.f32.mxu0 0.0
        %1146 = vmatmul.mubr.f32.gmra.mrb[0].mxu0 %v345
        %v1147 = vpop.f32.mrb[0].mxu0
        %v1148 = vadd.f32 %v915, %v1147
        %v1149 = vpop.f32.mrb[0].mxu0
        %v1150 = vadd.f32 %v917, %v1149
        %1151 = vmatprep.mubr.f32.mxu0 0.0
        %1152 = vmatmul.mubr.f32.gmra.mrb[0].mxu0 %v346
        %v1153 = vpop.f32.mrb[0].mxu0
        %v1154 = vadd.f32 %v921, %v1153
        %v1155 = vpop.f32.mrb[0].mxu0
        %v1156 = vadd.f32 %v923, %v1155
        %1157 = vmatprep.mubr.f32.mxu0 0.0
        %1158 = vmatmul.mubr.f32.gmra.mrb[0].mxu0 %v347
        %v1159 = vpop.f32.mrb[0].mxu0
        %v1160 = vadd.f32 %v927, %v1159
        %v1161 = vpop.f32.mrb[0].mxu0
        %v1162 = vadd.f32 %v929, %v1161
        %1163 = vmatprep.mubr.f32.mxu0 0.0
        %1164 = vmatmul.mubr.f32.gmra.mrb[0].mxu0 %v348
        %v1165 = vpop.f32.mrb[0].mxu0
        %v1166 = vadd.f32 %v933, %v1165
        %v1167 = vpop.f32.mrb[0].mxu0
        %v1168 = vadd.f32 %v935, %v1167
        %1169 = vmatprep.mubr.f32.mxu0 0.0
        %1170 = vmatmul.mubr.f32.gmra.mrb[0].mxu0 %v349
        %v1171 = vpop.f32.mrb[0].mxu0
        %v1172 = vadd.f32 %v939, %v1171
        %v1173 = vpop.f32.mrb[0].mxu0
        %v1174 = vadd.f32 %v941, %v1173
        %1175 = vmatprep.mubr.f32.mxu0 0.0
        %1176 = vmatmul.mubr.f32.gmra.mrb[0].mxu0 %v350
        %v1177 = vpop.f32.mrb[0].mxu0
        %v1178 = vadd.f32 %v945, %v1177
        %v1179 = vpop.f32.mrb[0].mxu0
        %v1180 = vadd.f32 %v947, %v1179
        %1181 = vmatprep.mubr.f32.mxu0 0.0
        %1182 = vmatmul.mubr.f32.gmra.mrb[0].mxu0 %v351
        %v1183 = vpop.f32.mrb[0].mxu0
        %v1184 = vadd.f32 %v951, %v1183
        %v1185 = vpop.f32.mrb[0].mxu0
        %v1186 = vadd.f32 %v953, %v1185
        %1187 = vmatprep.mubr.f32.mxu0 0.0
        %1188 = vmatmul.mubr.f32.gmra.mrb[0].mxu0 %v352
        %v1189 = vpop.f32.mrb[0].mxu0
        %v1190 = vadd.f32 %v957, %v1189
        %v1191 = vpop.f32.mrb[0].mxu0
        %v1192 = vadd.f32 %v959, %v1191
        %1193 = vmatprep.mubr.f32.mxu0 0.0
        %1194 = vmatmul.mubr.f32.gmra.mrb[0].mxu0 %v353
        %v1195 = vpop.f32.mrb[0].mxu0
        %v1196 = vadd.f32 %v963, %v1195
        %v1197 = vpop.f32.mrb[0].mxu0
        %v1198 = vadd.f32 %v965, %v1197
        %1199 = vmatprep.mubr.f32.mxu0 0.0
        %1200 = vmatmul.mubr.f32.gmra.mrb[0].mxu0 %v354
        %v1201 = vpop.f32.mrb[0].mxu0
        %v1202 = vadd.f32 %v969, %v1201
        %v1203 = vpop.f32.mrb[0].mxu0
        %v1204 = vadd.f32 %v971, %v1203
        %1205 = vmatprep.mubr.f32.mxu0 0.0
        %1206 = vmatmul.mubr.f32.gmra.mrb[0].mxu0 %v355
        %v1207 = vpop.f32.mrb[0].mxu0
        %v1208 = vadd.f32 %v975, %v1207
        %v1209 = vpop.f32.mrb[0].mxu0
        %v1210 = vadd.f32 %v977, %v1209
        %1211 = vmatprep.mubr.f32.mxu0 0.0
        %1212 = vmatmul.mubr.f32.gmra.mrb[0].mxu0 %v356
        %v1213 = vpop.f32.mrb[0].mxu0
        %v1214 = vadd.f32 %v981, %v1213
        %v1215 = vpop.f32.mrb[0].mxu0
        %v1216 = vadd.f32 %v983, %v1215
        %1217 = vmatprep.mubr.f32.mxu0 0.0
        %1218 = vmatmul.mubr.f32.gmra.mrb[0].mxu0 %v357
        %v1219 = vpop.f32.mrb[0].mxu0
        %v1220 = vadd.f32 %v987, %v1219
        %v1221 = vpop.f32.mrb[0].mxu0
        %v1222 = vadd.f32 %v989, %v1221
        %1223 = vmatprep.mubr.f32.mxu0 0.0
        %1224 = vmatmul.mubr.f32.gmra.mrb[0].mxu0 %v358
        %v1225 = vpop.f32.mrb[0].mxu0
        %v1226 = vadd.f32 %v993, %v1225
        %v1227 = vpop.f32.mrb[0].mxu0
        %v1228 = vadd.f32 %v995, %v1227
        %1229 = vdwg.mxu0
        %v1230 = vmax.f32 %v1064, 0.0
        %v1231 = vmax.f32 %v1066, 0.0
        %v1232 = vmax.f32 %v1070, 0.0
        %v1233 = vmax.f32 %v1072, 0.0
        %v1234 = vmax.f32 %v1076, 0.0
        %v1235 = vmax.f32 %v1078, 0.0
        %v1236 = vmax.f32 %v1082, 0.0
        %v1237 = vmax.f32 %v1084, 0.0
        %v1238 = vmax.f32 %v1088, 0.0
        %v1239 = vmax.f32 %v1090, 0.0
        %v1240 = vmax.f32 %v1094, 0.0
        %v1241 = vmax.f32 %v1096, 0.0
        %v1242 = vmax.f32 %v1100, 0.0
        %v1243 = vmax.f32 %v1102, 0.0
        %v1244 = vmax.f32 %v1106, 0.0
        %v1245 = vmax.f32 %v1108, 0.0
        %v1246 = vmax.f32 %v1112, 0.0
        %v1247 = vmax.f32 %v1114, 0.0
        %v1248 = vmax.f32 %v1118, 0.0
        %v1249 = vmax.f32 %v1120, 0.0
        %v1250 = vmax.f32 %v1124, 0.0
        %v1251 = vmax.f32 %v1126, 0.0
        %v1252 = vmax.f32 %v1130, 0.0
        %v1253 = vmax.f32 %v1132, 0.0
        %v1254 = vmax.f32 %v1136, 0.0
        %v1255 = vmax.f32 %v1138, 0.0
        %v1256 = vmax.f32 %v1142, 0.0
        %v1257 = vmax.f32 %v1144, 0.0
        %v1258 = vmax.f32 %v1148, 0.0
        %v1259 = vmax.f32 %v1150, 0.0
        %v1260 = vmax.f32 %v1154, 0.0
        %v1261 = vmax.f32 %v1156, 0.0
        %v1262 = vmax.f32 %v1160, 0.0
        %v1263 = vmax.f32 %v1162, 0.0
        %v1264 = vmax.f32 %v1166, 0.0
        %v1265 = vmax.f32 %v1168, 0.0
        %v1266 = vmax.f32 %v1172, 0.0
        %v1267 = vmax.f32 %v1174, 0.0
        %v1268 = vmax.f32 %v1178, 0.0
        %v1269 = vmax.f32 %v1180, 0.0
        %v1270 = vmax.f32 %v1184, 0.0
        %v1271 = vmax.f32 %v1186, 0.0
        %v1272 = vmax.f32 %v1190, 0.0
        %v1273 = vmax.f32 %v1192, 0.0
        %v1274 = vmax.f32 %v1196, 0.0
        %v1275 = vmax.f32 %v1198, 0.0
        %v1276 = vmax.f32 %v1202, 0.0
        %v1277 = vmax.f32 %v1204, 0.0
        %v1278 = vmax.f32 %v1208, 0.0
        %v1279 = vmax.f32 %v1210, 0.0
        %v1280 = vmax.f32 %v1214, 0.0
        %v1281 = vmax.f32 %v1216, 0.0
        %v1282 = vmax.f32 %v1220, 0.0
        %v1283 = vmax.f32 %v1222, 0.0
        %v1284 = vmax.f32 %v1226, 0.0
        %v1285 = vmax.f32 %v1228, 0.0
        %v1286 = vmax.f32 %v1230, %v1232
        %v1287 = vmax.f32 %v1231, %v1233
        %v1288 = vmax.f32 %v1234, %v1236
        %v1289 = vmax.f32 %v1235, %v1237
        %v1290 = vmax.f32 %v1238, %v1240
        %v1291 = vmax.f32 %v1239, %v1241
        %v1292 = vmax.f32 %v1242, %v1244
        %v1293 = vmax.f32 %v1243, %v1245
        %v1294 = vmax.f32 %v1246, %v1248
        %v1295 = vmax.f32 %v1247, %v1249
        %v1296 = vmax.f32 %v1250, %v1252
        %v1297 = vmax.f32 %v1251, %v1253
        %v1298 = vmax.f32 %v1254, %v1256
        %v1299 = vmax.f32 %v1255, %v1257
        %v1300 = vmax.f32 %v1258, %v1260
        %v1301 = vmax.f32 %v1259, %v1261
        %v1302 = vmax.f32 %v1262, %v1264
        %v1303 = vmax.f32 %v1263, %v1265
        %v1304 = vmax.f32 %v1266, %v1268
        %v1305 = vmax.f32 %v1267, %v1269
        %v1306 = vmax.f32 %v1270, %v1272
        %v1307 = vmax.f32 %v1271, %v1273
        %v1308 = vmax.f32 %v1274, %v1276
        %v1309 = vmax.f32 %v1275, %v1277
        %v1310 = vmax.f32 %v1278, %v1280
        %v1311 = vmax.f32 %v1279, %v1281
        %v1312 = vmax.f32 %v1282, %v1284
        %v1313 = vmax.f32 %v1283, %v1285
        %v1314 = vld [vmem:[%s1 + $0x500] sm:$0xff]
        %v1315 = vld [vmem:[%s1 + $0x510] sm:$0xff]
        %v1316 = vld [vmem:[%s1 + $0x520] sm:$0xff]
        %v1317 = vld [vmem:[%s1 + $0x530] sm:$0xff]
        %v1318 = vld [vmem:[%s1 + $0x540] sm:$0xff]
        %v1319 = vld [vmem:[%s1 + $0x550] sm:$0xff]
        %v1320 = vld [vmem:[%s1 + $0x560] sm:$0xff]
        %v1321 = vld [vmem:[%s1 + $0x570] sm:$0xff]
        %v1322 = vld [vmem:[%s1 + $0x580] sm:$0xff]
        %v1323 = vld [vmem:[%s1 + $0x590] sm:$0xff]
        %v1324 = vld [vmem:[%s1 + $0x5a0] sm:$0xff]
        %v1325 = vld [vmem:[%s1 + $0x5b0] sm:$0xff]
        %v1326 = vld [vmem:[%s1 + $0x5c0] sm:$0xff]
        %v1327 = vld [vmem:[%s1 + $0x5d0] sm:$0xff]
        %v1328 = vld [vmem:[%s1 + $0x5e0] sm:$0xff]
        %v1329 = vld [vmem:[%s1 + $0x5f0] sm:$0xff]
        %v1330 = vld [vmem:[%s1 + $0x600] sm:$0xff]
        %v1331 = vld [vmem:[%s1 + $0x610] sm:$0xff]
        %v1332 = vld [vmem:[%s1 + $0x620] sm:$0xff]
        %v1333 = vld [vmem:[%s1 + $0x630] sm:$0xff]
        %v1334 = vld [vmem:[%s1 + $0x640] sm:$0xff]
        %vm1335 = vcmask 326656
        %v1337 = vsel %vm1335, %v1287, 0
        %v1340 = vsel %vm1335, %v1289, 0
        %v1343 = vsel %vm1335, %v1291, 0
        %v1346 = vsel %vm1335, %v1293, 0
        %v1349 = vsel %vm1335, %v1295, 0
        %v1352 = vsel %vm1335, %v1297, 0
        %v1355 = vsel %vm1335, %v1299, 0
        %v1358 = vsel %vm1335, %v1301, 0
        %v1361 = vsel %vm1335, %v1303, 0
        %v1364 = vsel %vm1335, %v1305, 0
        %v1367 = vsel %vm1335, %v1307, 0
        %v1370 = vsel %vm1335, %v1309, 0
        %v1373 = vsel %vm1335, %v1311, 0
        %v1376 = vsel %vm1335, %v1313, 0
        %1378 = vmatprep.subr.mxu0 0.0
        %1379 = vmatpush1.msra.mxu0 %v1314
        %1380 = vmatprep.subr.mxu0 0.0
        %1381 = vmatpush1.msra.mxu0 %v1315
        %1382 = vmatprep.subr.mxu0 0.0
        %1383 = vmatpush1.msra.mxu0 %v1316
        %1384 = vmatprep.subr.mxu0 0.0
        %1385 = vmatpush1.msra.mxu0 %v1317
        %1386 = vmatprep.subr.mxu0 0.0
        %1387 = vmatpush1.msra.mxu0 %v1318
        %1388 = vmatprep.subr.mxu0 0.0
        %1389 = vmatpush1.msra.mxu0 %v1319
        %1390 = vmatprep.subr.mxu0 0.0
        %1391 = vmatpush1.msra.mxu0 %v1320
        %1392 = vmatprep.subr.mxu0 0.0
        %1393 = vmatpush1.msra.mxu0 %v1321
        %1394 = vmatprep.subr.mxu0 0.0
        %1395 = vmatpush1.msra.mxu0 %v1322
        %1396 = vmatprep.subr.mxu0 0.0
        %1397 = vmatpush1.msra.mxu0 %v1323
        %1398 = vmatprep.subr.mxu0 0.0
        %1399 = vmatpush1.msra.mxu0 %v1324
        %1400 = vmatprep.subr.mxu0 0.0
        %1401 = vmatpush1.msra.mxu0 %v1325
        %1402 = vmatprep.subr.mxu0 0.0
        %1403 = vmatpush1.msra.mxu0 %v1326
        %1404 = vmatprep.subr.mxu0 0.0
        %1405 = vmatpush1.msra.mxu0 %v1327
        %1406 = vmatprep.subr.mxu0 0.0
        %1407 = vmatpush1.msra.mxu0 %v1328
        %1408 = vmatprep.subr.mxu0 0.0
        %1409 = vmatpush1.msra.mxu0 %v1329
        %1410 = vmatprep.subr.mxu0 0.0
        %1411 = vmatpush1.msra.mxu0 %v1330
        %1412 = vmatprep.subr.mxu0 0.0
        %1413 = vmatpush1.msra.mxu0 %v1331
        %1414 = vmatprep.subr.mxu0 0.0
        %1415 = vmatpush1.msra.mxu0 %v1332
        %1416 = vmatprep.subr.mxu0 0.0
        %1417 = vmatpush1.msra.mxu0 %v1333
        %1418 = vmatprep.subr.mxu0 0.0
        %1419 = vmatpush1.msra.mxu0 %v1334
        %1420 = vmatprep.subr.mxu0 0.0
        %1421 = vmatpush1.msra.mxu0 0.0
        %1422 = vmatprep.subr.mxu0 0.0
        %1423 = vmatpush1.msra.mxu0 0.0
        %1424 = vmatprep.subr.mxu0 0.0
        %1425 = vmatpush1.msra.mxu0 0.0
        %1426 = vmatprep.subr.mxu0 0.0
        %1427 = vmatpush1.msra.mxu0 0.0
        %1428 = vmatprep.subr.mxu0 0.0
        %1429 = vmatpush1.msra.mxu0 0.0
        %1430 = vmatprep.subr.mxu0 0.0
        %1431 = vmatpush1.msra.mxu0 0.0
        %1432 = vmatprep.subr.mxu0 0.0
        %1433 = vmatpush1.msra.mxu0 0.0
        %1434 = vmatprep.subr.mxu0 0.0
        %1435 = vmatpush1.msra.mxu0 0.0
        %1436 = vmatprep.subr.mxu0 0.0
        %1437 = vmatpush1.msra.mxu0 0.0
        %1438 = vmatprep.subr.mxu0 0.0
        %1439 = vmatpush1.msra.mxu0 0.0
        %1440 = vmatprep.subr.mxu0 0.0
        %1441 = vmatpush1.msra.mxu0 0.0
        %1442 = vmatprep.mubr.f32.mxu0 %v1337
        %1443 = vmatmul.mubr.f32.gmra.mrb[0].mxu0 %v1286
        %v1444 = vpop.f32.mrb[0].mxu0
        %v1445 = vadd.f32 0.0, %v1444
        %v1446 = vpop.f32.mrb[0].mxu0
        %1447 = vmatprep.mubr.f32.mxu0 %v1340
        %1448 = vmatmul.mubr.f32.gmra.mrb[0].mxu0 %v1288
        %v1449 = vpop.f32.mrb[0].mxu0
        %v1450 = vadd.f32 0.0, %v1449
        %v1451 = vpop.f32.mrb[0].mxu0
        %1452 = vmatprep.mubr.f32.mxu0 %v1343
        %1453 = vmatmul.mubr.f32.gmra.mrb[0].mxu0 %v1290
        %v1454 = vpop.f32.mrb[0].mxu0
        %v1455 = vadd.f32 0.0, %v1454
        %v1456 = vpop.f32.mrb[0].mxu0
        %1457 = vmatprep.mubr.f32.mxu0 %v1346
        %1458 = vmatmul.mubr.f32.gmra.mrb[0].mxu0 %v1292
        %v1459 = vpop.f32.mrb[0].mxu0
        %v1460 = vadd.f32 0.0, %v1459
        %v1461 = vpop.f32.mrb[0].mxu0
        %1462 = vmatprep.mubr.f32.mxu0 %v1349
        %1463 = vmatmul.mubr.f32.gmra.mrb[0].mxu0 %v1294
        %v1464 = vpop.f32.mrb[0].mxu0
        %v1465 = vadd.f32 0.0, %v1464
        %v1466 = vpop.f32.mrb[0].mxu0
        %1467 = vmatprep.mubr.f32.mxu0 %v1352
        %1468 = vmatmul.mubr.f32.gmra.mrb[0].mxu0 %v1296
        %v1469 = vpop.f32.mrb[0].mxu0
        %v1470 = vadd.f32 0.0, %v1469
        %v1471 = vpop.f32.mrb[0].mxu0
        %1472 = vmatprep.mubr.f32.mxu0 %v1355
        %1473 = vmatmul.mubr.f32.gmra.mrb[0].mxu0 %v1298
        %v1474 = vpop.f32.mrb[0].mxu0
        %v1475 = vadd.f32 0.0, %v1474
        %v1476 = vpop.f32.mrb[0].mxu0
        %1477 = vmatprep.mubr.f32.mxu0 %v1358
        %1478 = vmatmul.mubr.f32.gmra.mrb[0].mxu0 %v1300
        %v1479 = vpop.f32.mrb[0].mxu0
        %v1480 = vadd.f32 0.0, %v1479
        %v1481 = vpop.f32.mrb[0].mxu0
        %1482 = vmatprep.mubr.f32.mxu0 %v1361
        %1483 = vmatmul.mubr.f32.gmra.mrb[0].mxu0 %v1302
        %v1484 = vpop.f32.mrb[0].mxu0
        %v1485 = vadd.f32 0.0, %v1484
        %v1486 = vpop.f32.mrb[0].mxu0
        %1487 = vmatprep.mubr.f32.mxu0 %v1364
        %1488 = vmatmul.mubr.f32.gmra.mrb[0].mxu0 %v1304
        %v1489 = vpop.f32.mrb[0].mxu0
        %v1490 = vadd.f32 0.0, %v1489
        %v1491 = vpop.f32.mrb[0].mxu0
        %1492 = vmatprep.mubr.f32.mxu0 %v1367
        %1493 = vmatmul.mubr.f32.gmra.mrb[0].mxu0 %v1306
        %v1494 = vpop.f32.mrb[0].mxu0
        %v1495 = vadd.f32 0.0, %v1494
        %v1496 = vpop.f32.mrb[0].mxu0
        %1497 = vmatprep.mubr.f32.mxu0 %v1370
        %1498 = vmatmul.mubr.f32.gmra.mrb[0].mxu0 %v1308
        %v1499 = vpop.f32.mrb[0].mxu0
        %v1500 = vadd.f32 0.0, %v1499
        %v1501 = vpop.f32.mrb[0].mxu0
        %1502 = vmatprep.mubr.f32.mxu0 %v1373
        %1503 = vmatmul.mubr.f32.gmra.mrb[0].mxu0 %v1310
        %v1504 = vpop.f32.mrb[0].mxu0
        %v1505 = vadd.f32 0.0, %v1504
        %v1506 = vpop.f32.mrb[0].mxu0
        %1507 = vmatprep.mubr.f32.mxu0 %v1376
        %1508 = vmatmul.mubr.f32.gmra.mrb[0].mxu0 %v1312
        %v1509 = vpop.f32.mrb[0].mxu0
        %v1510 = vadd.f32 0.0, %v1509
        %v1511 = vpop.f32.mrb[0].mxu0
        %1512 = vdwg.mxu0
        %v1513 = vld [vmem:[%s1 + $0x650] sm:$0xff]
        %v1514 = vld [vmem:[%s1 + $0x660] sm:$0xff]
        %v1515 = vld [vmem:[%s1 + $0x670] sm:$0xff]
        %v1516 = vld [vmem:[%s1 + $0x680] sm:$0xff]
        %v1517 = vld [vmem:[%s1 + $0x690] sm:$0xff]
        %v1518 = vld [vmem:[%s1 + $0x6a0] sm:$0xff]
        %v1519 = vld [vmem:[%s1 + $0x6b0] sm:$0xff]
        %v1520 = vld [vmem:[%s1 + $0x6c0] sm:$0xff]
        %v1521 = vld [vmem:[%s1 + $0x6d0] sm:$0xff]
        %v1522 = vld [vmem:[%s1 + $0x6e0] sm:$0xff]
        %v1523 = vld [vmem:[%s1 + $0x6f0] sm:$0xff]
        %v1524 = vld [vmem:[%s1 + $0x700] sm:$0xff]
        %v1525 = vld [vmem:[%s1 + $0x710] sm:$0xff]
        %v1526 = vld [vmem:[%s1 + $0x720] sm:$0xff]
        %v1527 = vld [vmem:[%s1 + $0x730] sm:$0xff]
        %v1528 = vld [vmem:[%s1 + $0x740] sm:$0xff]
        %v1529 = vld [vmem:[%s1 + $0x750] sm:$0xff]
        %v1530 = vld [vmem:[%s1 + $0x760] sm:$0xff]
        %v1531 = vld [vmem:[%s1 + $0x770] sm:$0xff]
        %v1532 = vld [vmem:[%s1 + $0x780] sm:$0xff]
        %v1533 = vld [vmem:[%s1 + $0x790] sm:$0xff]
        %1534 = vmatprep.subr.mxu0 0.0
        %1535 = vmatpush1.msra.mxu0 %v1513
        %1536 = vmatprep.subr.mxu0 0.0
        %1537 = vmatpush1.msra.mxu0 %v1514
        %1538 = vmatprep.subr.mxu0 0.0
        %1539 = vmatpush1.msra.mxu0 %v1515
        %1540 = vmatprep.subr.mxu0 0.0
        %1541 = vmatpush1.msra.mxu0 %v1516
        %1542 = vmatprep.subr.mxu0 0.0
        %1543 = vmatpush1.msra.mxu0 %v1517
        %1544 = vmatprep.subr.mxu0 0.0
        %1545 = vmatpush1.msra.mxu0 %v1518
        %1546 = vmatprep.subr.mxu0 0.0
        %1547 = vmatpush1.msra.mxu0 %v1519
        %1548 = vmatprep.subr.mxu0 0.0
        %1549 = vmatpush1.msra.mxu0 %v1520
        %1550 = vmatprep.subr.mxu0 0.0
        %1551 = vmatpush1.msra.mxu0 %v1521
        %1552 = vmatprep.subr.mxu0 0.0
        %1553 = vmatpush1.msra.mxu0 %v1522
        %1554 = vmatprep.subr.mxu0 0.0
        %1555 = vmatpush1.msra.mxu0 %v1523
        %1556 = vmatprep.subr.mxu0 0.0
        %1557 = vmatpush1.msra.mxu0 %v1524
        %1558 = vmatprep.subr.mxu0 0.0
        %1559 = vmatpush1.msra.mxu0 %v1525
        %1560 = vmatprep.subr.mxu0 0.0
        %1561 = vmatpush1.msra.mxu0 %v1526
        %1562 = vmatprep.subr.mxu0 0.0
        %1563 = vmatpush1.msra.mxu0 %v1527
        %1564 = vmatprep.subr.mxu0 0.0
        %1565 = vmatpush1.msra.mxu0 %v1528
        %1566 = vmatprep.subr.mxu0 0.0
        %1567 = vmatpush1.msra.mxu0 %v1529
        %1568 = vmatprep.subr.mxu0 0.0
        %1569 = vmatpush1.msra.mxu0 %v1530
        %1570 = vmatprep.subr.mxu0 0.0
        %1571 = vmatpush1.msra.mxu0 %v1531
        %1572 = vmatprep.subr.mxu0 0.0
        %1573 = vmatpush1.msra.mxu0 %v1532
        %1574 = vmatprep.subr.mxu0 0.0
        %1575 = vmatpush1.msra.mxu0 %v1533
        %1576 = vmatprep.subr.mxu0 0.0
        %1577 = vmatpush1.msra.mxu0 0.0
        %1578 = vmatprep.subr.mxu0 0.0
        %1579 = vmatpush1.msra.mxu0 0.0
        %1580 = vmatprep.subr.mxu0 0.0
        %1581 = vmatpush1.msra.mxu0 0.0
        %1582 = vmatprep.subr.mxu0 0.0
        %1583 = vmatpush1.msra.mxu0 0.0
        %1584 = vmatprep.subr.mxu0 0.0
        %1585 = vmatpush1.msra.mxu0 0.0
        %1586 = vmatprep.subr.mxu0 0.0
        %1587 = vmatpush1.msra.mxu0 0.0
        %1588 = vmatprep.subr.mxu0 0.0
        %1589 = vmatpush1.msra.mxu0 0.0
        %1590 = vmatprep.subr.mxu0 0.0
        %1591 = vmatpush1.msra.mxu0 0.0
        %1592 = vmatprep.subr.mxu0 0.0
        %1593 = vmatpush1.msra.mxu0 0.0
        %1594 = vmatprep.subr.mxu0 0.0
        %1595 = vmatpush1.msra.mxu0 0.0
        %1596 = vmatprep.subr.mxu0 0.0
        %1597 = vmatpush1.msra.mxu0 0.0
        %1598 = vmatprep.mubr.f32.mxu0 %v1337
        %1599 = vmatmul.mubr.f32.gmra.mrb[0].mxu0 %v1286
        %v1600 = vpop.f32.mrb[0].mxu0
        %v1601 = vadd.f32 0.0, %v1600
        %v1602 = vpop.f32.mrb[0].mxu0
        %1603 = vmatprep.mubr.f32.mxu0 %v1340
        %1604 = vmatmul.mubr.f32.gmra.mrb[0].mxu0 %v1288
        %v1605 = vpop.f32.mrb[0].mxu0
        %v1606 = vadd.f32 0.0, %v1605
        %v1607 = vpop.f32.mrb[0].mxu0
        %1608 = vmatprep.mubr.f32.mxu0 %v1343
        %1609 = vmatmul.mubr.f32.gmra.mrb[0].mxu0 %v1290
        %v1610 = vpop.f32.mrb[0].mxu0
        %v1611 = vadd.f32 0.0, %v1610
        %v1612 = vpop.f32.mrb[0].mxu0
        %1613 = vmatprep.mubr.f32.mxu0 %v1346
        %1614 = vmatmul.mubr.f32.gmra.mrb[0].mxu0 %v1292
        %v1615 = vpop.f32.mrb[0].mxu0
        %v1616 = vadd.f32 0.0, %v1615
        %v1617 = vpop.f32.mrb[0].mxu0
        %1618 = vmatprep.mubr.f32.mxu0 %v1349
        %1619 = vmatmul.mubr.f32.gmra.mrb[0].mxu0 %v1294
        %v1620 = vpop.f32.mrb[0].mxu0
        %v1621 = vadd.f32 0.0, %v1620
        %v1622 = vpop.f32.mrb[0].mxu0
        %1623 = vmatprep.mubr.f32.mxu0 %v1352
        %1624 = vmatmul.mubr.f32.gmra.mrb[0].mxu0 %v1296
        %v1625 = vpop.f32.mrb[0].mxu0
        %v1626 = vadd.f32 0.0, %v1625
        %v1627 = vpop.f32.mrb[0].mxu0
        %1628 = vmatprep.mubr.f32.mxu0 %v1355
        %1629 = vmatmul.mubr.f32.gmra.mrb[0].mxu0 %v1298
        %v1630 = vpop.f32.mrb[0].mxu0
        %v1631 = vadd.f32 0.0, %v1630
        %v1632 = vpop.f32.mrb[0].mxu0
        %1633 = vmatprep.mubr.f32.mxu0 %v1358
        %1634 = vmatmul.mubr.f32.gmra.mrb[0].mxu0 %v1300
        %v1635 = vpop.f32.mrb[0].mxu0
        %v1636 = vadd.f32 0.0, %v1635
        %v1637 = vpop.f32.mrb[0].mxu0
        %1638 = vmatprep.mubr.f32.mxu0 %v1361
        %1639 = vmatmul.mubr.f32.gmra.mrb[0].mxu0 %v1302
        %v1640 = vpop.f32.mrb[0].mxu0
        %v1641 = vadd.f32 0.0, %v1640
        %v1642 = vpop.f32.mrb[0].mxu0
        %1643 = vmatprep.mubr.f32.mxu0 %v1364
        %1644 = vmatmul.mubr.f32.gmra.mrb[0].mxu0 %v1304
        %v1645 = vpop.f32.mrb[0].mxu0
        %v1646 = vadd.f32 0.0, %v1645
        %v1647 = vpop.f32.mrb[0].mxu0
        %1648 = vmatprep.mubr.f32.mxu0 %v1367
        %1649 = vmatmul.mubr.f32.gmra.mrb[0].mxu0 %v1306
        %v1650 = vpop.f32.mrb[0].mxu0
        %v1651 = vadd.f32 0.0, %v1650
        %v1652 = vpop.f32.mrb[0].mxu0
        %1653 = vmatprep.mubr.f32.mxu0 %v1370
        %1654 = vmatmul.mubr.f32.gmra.mrb[0].mxu0 %v1308
        %v1655 = vpop.f32.mrb[0].mxu0
        %v1656 = vadd.f32 0.0, %v1655
        %v1657 = vpop.f32.mrb[0].mxu0
        %1658 = vmatprep.mubr.f32.mxu0 %v1373
        %1659 = vmatmul.mubr.f32.gmra.mrb[0].mxu0 %v1310
        %v1660 = vpop.f32.mrb[0].mxu0
        %v1661 = vadd.f32 0.0, %v1660
        %v1662 = vpop.f32.mrb[0].mxu0
        %1663 = vmatprep.mubr.f32.mxu0 %v1376
        %1664 = vmatmul.mubr.f32.gmra.mrb[0].mxu0 %v1312
        %v1665 = vpop.f32.mrb[0].mxu0
        %v1666 = vadd.f32 0.0, %v1665
        %v1667 = vpop.f32.mrb[0].mxu0
        %1668 = vdwg.mxu0
        %v1669 = vmax.f32 %v1445, %v1601
        %v1670 = vmax.f32 %v1450, %v1606
        %v1671 = vmax.f32 %v1455, %v1611
        %v1672 = vmax.f32 %v1460, %v1616
        %v1673 = vmax.f32 %v1465, %v1621
        %v1674 = vmax.f32 %v1470, %v1626
        %v1675 = vmax.f32 %v1475, %v1631
        %v1676 = vmax.f32 %v1480, %v1636
        %v1677 = vmax.f32 %v1485, %v1641
        %v1678 = vmax.f32 %v1490, %v1646
        %v1679 = vmax.f32 %v1495, %v1651
        %v1680 = vmax.f32 %v1500, %v1656
        %v1681 = vmax.f32 %v1505, %v1661
        %v1682 = vmax.f32 %v1510, %v1666
        %v1683 = vld [vmem:[%s1 + $0x7a0] sm:$0xff]
        %v1684 = vld [vmem:[%s1 + $0x7a8] sm:$0xff]
        %v1685 = vld [vmem:[%s1 + $0x7b0] sm:$0xff]
        %v1686 = vld [vmem:[%s1 + $0x7b8] sm:$0xff]
        %v1687 = vld [vmem:[%s1 + $0x7c0] sm:$0xff]
        %v1688 = vld [vmem:[%s1 + $0x7c8] sm:$0xff]
        %v1689 = vld [vmem:[%s1 + $0x7d0] sm:$0xff]
        %v1690 = vld [vmem:[%s1 + $0x7d8] sm:$0xff]
        %v1691 = vld [vmem:[%s1 + $0x7e0] sm:$0xff]
        %v1692 = vld [vmem:[%s1 + $0x7e8] sm:$0xff]
        %v1693 = vld [vmem:[%s1 + $0x7f0] sm:$0xff]
        %v1694 = vld [vmem:[%s1 + $0x7f8] sm:$0xff]
        %v1695 = vld [vmem:[%s1 + $0x800] sm:$0xff]
        %v1696 = vld [vmem:[%s1 + $0x808] sm:$0xff]
        %v1697 = vld [vmem:[%s1 + $0x810] sm:$0xff]
        %v1698 = vld [vmem:[%s1 + $0x818] sm:$0xff]
        %v1699 = vld [vmem:[%s1 + $0x820] sm:$0xff]
        %v1700 = vld [vmem:[%s1 + $0x828] sm:$0xff]
        %v1701 = vld [vmem:[%s1 + $0x830] sm:$0xff]
        %v1702 = vld [vmem:[%s1 + $0x838] sm:$0xff]
        %v1703 = vld [vmem:[%s1 + $0x840] sm:$0xff]
        %v1704 = vld [vmem:[%s1 + $0x848] sm:$0xff]
        %v1705 = vld [vmem:[%s1 + $0x850] sm:$0xff]
        %v1706 = vld [vmem:[%s1 + $0x858] sm:$0xff]
        %v1707 = vld [vmem:[%s1 + $0x860] sm:$0xff]
        %v1708 = vld [vmem:[%s1 + $0x868] sm:$0xff]
        %v1709 = vld [vmem:[%s1 + $0x870] sm:$0xff]
        %v1710 = vld [vmem:[%s1 + $0x878] sm:$0xff]
        %v1711 = vld [vmem:[%s1 + $0x880] sm:$0xff]
        %v1712 = vld [vmem:[%s1 + $0x888] sm:$0xff]
        %v1713 = vld [vmem:[%s1 + $0x890] sm:$0xff]
        %v1714 = vld [vmem:[%s1 + $0x898] sm:$0xff]
        %v1715 = vld [vmem:[%s1 + $0x8a0] sm:$0xff]
        %v1716 = vld [vmem:[%s1 + $0x8a8] sm:$0xff]
        %v1717 = vld [vmem:[%s1 + $0x8b0] sm:$0xff]
        %v1718 = vld [vmem:[%s1 + $0x8b8] sm:$0xff]
        %v1719 = vld [vmem:[%s1 + $0x8c0] sm:$0xff]
        %v1720 = vld [vmem:[%s1 + $0x8c8] sm:$0xff]
        %v1721 = vld [vmem:[%s1 + $0x8d0] sm:$0xff]
        %v1722 = vld [vmem:[%s1 + $0x8d8] sm:$0xff]
        %v1723 = vld [vmem:[%s1 + $0x8e0] sm:$0xff]
        %v1724 = vld [vmem:[%s1 + $0x8e8] sm:$0xff]
        %v1725 = vld [vmem:[%s1 + $0x8f0] sm:$0xff]
        %v1726 = vld [vmem:[%s1 + $0x8f8] sm:$0xff]
        %v1727 = vld [vmem:[%s1 + $0x900] sm:$0xff]
        %v1728 = vld [vmem:[%s1 + $0x908] sm:$0xff]
        %v1729 = vld [vmem:[%s1 + $0x910] sm:$0xff]
        %v1730 = vld [vmem:[%s1 + $0x918] sm:$0xff]
        %v1731 = vld [vmem:[%s1 + $0x920] sm:$0xff]
        %v1732 = vld [vmem:[%s1 + $0x928] sm:$0xff]
        %v1733 = vld [vmem:[%s1 + $0x930] sm:$0xff]
        %v1734 = vld [vmem:[%s1 + $0x938] sm:$0xff]
        %v1735 = vld [vmem:[%s1 + $0x940] sm:$0xff]
        %v1736 = vld [vmem:[%s1 + $0x948] sm:$0xff]
        %v1737 = vld [vmem:[%s1 + $0x950] sm:$0xff]
        %v1738 = vld [vmem:[%s1 + $0x958] sm:$0xff]
        %v1739 = vld [vmem:[%s1 + $0x960] sm:$0xff]
        %v1740 = vld [vmem:[%s1 + $0x968] sm:$0xff]
        %v1741 = vld [vmem:[%s1 + $0x970] sm:$0xff]
        %v1742 = vld [vmem:[%s1 + $0x978] sm:$0xff]
        %v1743 = vld [vmem:[%s1 + $0x980] sm:$0xff]
        %v1744 = vld [vmem:[%s1 + $0x988] sm:$0xff]
        %v1745 = vld [vmem:[%s1 + $0x990] sm:$0xff]
        %v1746 = vld [vmem:[%s1 + $0x998] sm:$0xff]
        %v1747 = vld [vmem:[%s1 + $0x9a0] sm:$0xff]
        %v1748 = vld [vmem:[%s1 + $0x9a8] sm:$0xff]
        %v1749 = vld [vmem:[%s1 + $0x9b0] sm:$0xff]
        %v1750 = vld [vmem:[%s1 + $0x9b8] sm:$0xff]
        %v1751 = vld [vmem:[%s1 + $0x9c0] sm:$0xff]
        %v1752 = vld [vmem:[%s1 + $0x9c8] sm:$0xff]
        %v1753 = vld [vmem:[%s1 + $0x9d0] sm:$0xff]
        %v1754 = vld [vmem:[%s1 + $0x9d8] sm:$0xff]
        %v1755 = vld [vmem:[%s1 + $0x9e0] sm:$0xff]
        %v1756 = vld [vmem:[%s1 + $0x9e8] sm:$0xff]
        %v1757 = vld [vmem:[%s1 + $0x9f0] sm:$0xff]
        %v1758 = vld [vmem:[%s1 + $0x9f8] sm:$0xff]
        %v1759 = vld [vmem:[%s1 + $0xa00] sm:$0xff]
        %v1760 = vld [vmem:[%s1 + $0xa08] sm:$0xff]
        %v1761 = vld [vmem:[%s1 + $0xa10] sm:$0xff]
        %v1762 = vld [vmem:[%s1 + $0xa18] sm:$0xff]
        %v1763 = vld [vmem:[%s1 + $0xa20] sm:$0xff]
        %v1764 = vld [vmem:[%s1 + $0xa28] sm:$0xff]
        %v1765 = vld [vmem:[%s1 + $0xa30] sm:$0xff]
        %v1766 = vld [vmem:[%s1 + $0xa38] sm:$0xff]
        %v1767 = vld [vmem:[%s1 + $0xa40] sm:$0xff]
        %v1768 = vld [vmem:[%s1 + $0xa48] sm:$0xff]
        %v1769 = vld [vmem:[%s1 + $0xa50] sm:$0xff]
        %v1770 = vld [vmem:[%s1 + $0xa58] sm:$0xff]
        %v1771 = vld [vmem:[%s1 + $0xa60] sm:$0xff]
        %v1772 = vld [vmem:[%s1 + $0xa68] sm:$0xff]
        %v1773 = vld [vmem:[%s1 + $0xa70] sm:$0xff]
        %v1774 = vld [vmem:[%s1 + $0xa78] sm:$0xff]
        %v1775 = vld [vmem:[%s1 + $0xa80] sm:$0xff]
        %v1776 = vld [vmem:[%s1 + $0xa88] sm:$0xff]
        %v1777 = vld [vmem:[%s1 + $0xa90] sm:$0xff]
        %v1778 = vld [vmem:[%s1 + $0xa98] sm:$0xff]
        %v1779 = vld [vmem:[%s1 + $0xaa0] sm:$0xff]
        %v1780 = vld [vmem:[%s1 + $0xaa8] sm:$0xff]
        %v1781 = vld [vmem:[%s1 + $0xab0] sm:$0xff]
        %v1782 = vld [vmem:[%s1 + $0xab8] sm:$0xff]
        %v1783 = vld [vmem:[%s1 + $0xac0] sm:$0xff]
        %v1784 = vld [vmem:[%s1 + $0xac8] sm:$0xff]
        %v1785 = vld [vmem:[%s1 + $0xad0] sm:$0xff]
        %v1786 = vld [vmem:[%s1 + $0xad8] sm:$0xff]
        %v1787 = vld [vmem:[%s1 + $0xae0] sm:$0xff]
        %v1788 = vld [vmem:[%s1 + $0xae8] sm:$0xff]
        %v1789 = vld [vmem:[%s1 + $0xaf0] sm:$0xff]
        %v1790 = vld [vmem:[%s1 + $0xaf8] sm:$0xff]
        %v1791 = vld [vmem:[%s1 + $0xb00] sm:$0xff]
        %v1792 = vld [vmem:[%s1 + $0xb08] sm:$0xff]
        %v1793 = vld [vmem:[%s1 + $0xb10] sm:$0xff]
        %v1794 = vld [vmem:[%s1 + $0xb18] sm:$0xff]
        %v1795 = vld [vmem:[%s1 + $0xb20] sm:$0xff]
        %v1796 = vld [vmem:[%s1 + $0xb28] sm:$0xff]
        %v1797 = vld [vmem:[%s1 + $0xb30] sm:$0xff]
        %v1798 = vld [vmem:[%s1 + $0xb38] sm:$0xff]
        %v1799 = vld [vmem:[%s1 + $0xb40] sm:$0xff]
        %v1800 = vld [vmem:[%s1 + $0xb48] sm:$0xff]
        %v1801 = vld [vmem:[%s1 + $0xb50] sm:$0xff]
        %v1802 = vld [vmem:[%s1 + $0xb58] sm:$0xff]
        %v1803 = vld [vmem:[%s1 + $0xb60] sm:$0xff]
        %v1804 = vld [vmem:[%s1 + $0xb68] sm:$0xff]
        %v1805 = vld [vmem:[%s1 + $0xb70] sm:$0xff]
        %v1806 = vld [vmem:[%s1 + $0xb78] sm:$0xff]
        %v1807 = vld [vmem:[%s1 + $0xb80] sm:$0xff]
        %v1808 = vld [vmem:[%s1 + $0xb88] sm:$0xff]
        %v1809 = vld [vmem:[%s1 + $0xb90] sm:$0xff]
        %v1810 = vld [vmem:[%s1 + $0xb98] sm:$0xff]
        %v1811 = vld [vmem:[%s1 + $0xba0] sm:$0xff]
        %v1812 = vld [vmem:[%s1 + $0xba8] sm:$0xff]
        %v1813 = vld [vmem:[%s1 + $0xbb0] sm:$0xff]
        %v1814 = vld [vmem:[%s1 + $0xbb8] sm:$0xff]
        %v1815 = vld [vmem:[%s1 + $0xbc0] sm:$0xff]
        %v1816 = vld [vmem:[%s1 + $0xbc8] sm:$0xff]
        %v1817 = vld [vmem:[%s1 + $0xbd0] sm:$0xff]
        %v1818 = vld [vmem:[%s1 + $0xbd8] sm:$0xff]
        %v1819 = vld [vmem:[%s1 + $0xbe0] sm:$0xff]
        %v1820 = vld [vmem:[%s1 + $0xbe8] sm:$0xff]
        %v1821 = vld [vmem:[%s1 + $0xbf0] sm:$0xff]
        %v1822 = vld [vmem:[%s1 + $0xbf8] sm:$0xff]
        %v1823 = vld [vmem:[%s1 + $0xc00] sm:$0xff]
        %v1824 = vld [vmem:[%s1 + $0xc08] sm:$0xff]
        %v1825 = vld [vmem:[%s1 + $0xc10] sm:$0xff]
        %v1826 = vld [vmem:[%s1 + $0xc18] sm:$0xff]
        %v1827 = vld [vmem:[%s1 + $0xc20] sm:$0xff]
        %v1828 = vld [vmem:[%s1 + $0xc28] sm:$0xff]
        %v1829 = vld [vmem:[%s1 + $0xc30] sm:$0xff]
        %v1830 = vld [vmem:[%s1 + $0xc38] sm:$0xff]
        %v1831 = vld [vmem:[%s1 + $0xc40] sm:$0xff]
        %v1832 = vld [vmem:[%s1 + $0xc48] sm:$0xff]
        %v1833 = vld [vmem:[%s1 + $0xc50] sm:$0xff]
        %v1834 = vld [vmem:[%s1 + $0xc58] sm:$0xff]
        %v1835 = vld [vmem:[%s1 + $0xc60] sm:$0xff]
        %v1836 = vld [vmem:[%s1 + $0xc68] sm:$0xff]
        %v1837 = vld [vmem:[%s1 + $0xc70] sm:$0xff]
        %v1838 = vld [vmem:[%s1 + $0xc78] sm:$0xff]
        %v1839 = vld [vmem:[%s1 + $0xc80] sm:$0xff]
        %v1840 = vld [vmem:[%s1 + $0xc88] sm:$0xff]
        %v1841 = vld [vmem:[%s1 + $0xc90] sm:$0xff]
        %v1842 = vld [vmem:[%s1 + $0xc98] sm:$0xff]
        %s1843 = scalar_lea.vmem %s2, 1
        %v1844 = vld [vmem:[%s1843] ss:$8 sm:$0x3]
        %v1846 = vlaneseq
        %v1847 = vshrl.u32 %v1846, 7
        %v1848 = vsub.s32 0, %v1847
        %v1849 = vrot.slane %v1844, %v1848
        %v1850 = vlaneseq
        %v1851 = vshrl.u32 %v1850, 7
        %v1852 = vsub.s32 1, %v1851
        %v1853 = vrot.slane %v1844, %v1852
        %1856 = vmatprep.subr.mxu0 %v1684
        %1857 = vmatpush1.msra.mxu0 %v1683
        %1858 = vmatprep.subr.mxu0 %v1686
        %1859 = vmatpush1.msra.mxu0 %v1685
        %1860 = vmatprep.subr.mxu0 %v1688
        %1861 = vmatpush1.msra.mxu0 %v1687
        %1862 = vmatprep.subr.mxu0 %v1690
        %1863 = vmatpush1.msra.mxu0 %v1689
        %1864 = vmatprep.subr.mxu0 %v1692
        %1865 = vmatpush1.msra.mxu0 %v1691
        %1866 = vmatprep.subr.mxu0 %v1694
        %1867 = vmatpush1.msra.mxu0 %v1693
        %1868 = vmatprep.subr.mxu0 %v1696
        %1869 = vmatpush1.msra.mxu0 %v1695
        %1870 = vmatprep.subr.mxu0 %v1698
        %1871 = vmatpush1.msra.mxu0 %v1697
        %1872 = vmatprep.subr.mxu0 %v1700
        %1873 = vmatpush1.msra.mxu0 %v1699
        %1874 = vmatprep.subr.mxu0 %v1702
        %1875 = vmatpush1.msra.mxu0 %v1701
        %1876 = vmatprep.subr.mxu0 %v1704
        %1877 = vmatpush1.msra.mxu0 %v1703
        %1878 = vmatprep.subr.mxu0 %v1706
        %1879 = vmatpush1.msra.mxu0 %v1705
        %1880 = vmatprep.subr.mxu0 %v1708
        %1881 = vmatpush1.msra.mxu0 %v1707
        %1882 = vmatprep.subr.mxu0 %v1710
        %1883 = vmatpush1.msra.mxu0 %v1709
        %1884 = vmatprep.subr.mxu0 %v1712
        %1885 = vmatpush1.msra.mxu0 %v1711
        %1886 = vmatprep.subr.mxu0 %v1714
        %1887 = vmatpush1.msra.mxu0 %v1713
        %1888 = vmatprep.subr.mxu0 %v1716
        %1889 = vmatpush1.msra.mxu0 %v1715
        %1890 = vmatprep.subr.mxu0 %v1718
        %1891 = vmatpush1.msra.mxu0 %v1717
        %1892 = vmatprep.subr.mxu0 %v1720
        %1893 = vmatpush1.msra.mxu0 %v1719
        %1894 = vmatprep.subr.mxu0 %v1722
        %1895 = vmatpush1.msra.mxu0 %v1721
        %1896 = vmatprep.subr.mxu0 %v1724
        %1897 = vmatpush1.msra.mxu0 %v1723
        %1898 = vmatprep.subr.mxu0 %v1726
        %1899 = vmatpush1.msra.mxu0 %v1725
        %1900 = vmatprep.subr.mxu0 %v1728
        %1901 = vmatpush1.msra.mxu0 %v1727
        %1902 = vmatprep.subr.mxu0 %v1730
        %1903 = vmatpush1.msra.mxu0 %v1729
        %1904 = vmatprep.subr.mxu0 %v1732
        %1905 = vmatpush1.msra.mxu0 %v1731
        %1906 = vmatprep.subr.mxu0 %v1734
        %1907 = vmatpush1.msra.mxu0 %v1733
        %1908 = vmatprep.subr.mxu0 %v1736
        %1909 = vmatpush1.msra.mxu0 %v1735
        %1910 = vmatprep.subr.mxu0 %v1738
        %1911 = vmatpush1.msra.mxu0 %v1737
        %1912 = vmatprep.subr.mxu0 %v1740
        %1913 = vmatpush1.msra.mxu0 %v1739
        %1914 = vmatprep.subr.mxu0 %v1742
        %1915 = vmatpush1.msra.mxu0 %v1741
        %1916 = vmatprep.subr.mxu0 %v1744
        %1917 = vmatpush1.msra.mxu0 %v1743
        %1918 = vmatprep.subr.mxu0 %v1746
        %1919 = vmatpush1.msra.mxu0 %v1745
        %1920 = vmatprep.mubr.f32.mxu0 %v1670
        %1921 = vmatmul.mubr.f32.gmra.mrb[0].mxu0 %v1669
        %v1922 = vpop.f32.mrb[0].mxu0
        %v1923 = vadd.f32 %v1849, %v1922
        %v1924 = vpop.f32.mrb[0].mxu0
        %v1925 = vadd.f32 %v1853, %v1924
        %1926 = vmatprep.mubr.f32.mxu0 %v1671
        %1927 = vmatmul.mubr.f32.gmra.mrb[0].mxu0 %v1670
        %v1928 = vpop.f32.mrb[0].mxu0
        %v1929 = vadd.f32 %v1849, %v1928
        %v1930 = vpop.f32.mrb[0].mxu0
        %v1931 = vadd.f32 %v1853, %v1930
        %1932 = vmatprep.mubr.f32.mxu0 %v1672
        %1933 = vmatmul.mubr.f32.gmra.mrb[0].mxu0 %v1671
        %v1934 = vpop.f32.mrb[0].mxu0
        %v1935 = vadd.f32 %v1849, %v1934
        %v1936 = vpop.f32.mrb[0].mxu0
        %v1937 = vadd.f32 %v1853, %v1936
        %1938 = vmatprep.mubr.f32.mxu0 %v1673
        %1939 = vmatmul.mubr.f32.gmra.mrb[0].mxu0 %v1672
        %v1940 = vpop.f32.mrb[0].mxu0
        %v1941 = vadd.f32 %v1849, %v1940
        %v1942 = vpop.f32.mrb[0].mxu0
        %v1943 = vadd.f32 %v1853, %v1942
        %1944 = vmatprep.mubr.f32.mxu0 %v1674
        %1945 = vmatmul.mubr.f32.gmra.mrb[0].mxu0 %v1673
        %v1946 = vpop.f32.mrb[0].mxu0
        %v1947 = vadd.f32 %v1849, %v1946
        %v1948 = vpop.f32.mrb[0].mxu0
        %v1949 = vadd.f32 %v1853, %v1948
        %1950 = vmatprep.mubr.f32.mxu0 %v1675
        %1951 = vmatmul.mubr.f32.gmra.mrb[0].mxu0 %v1674
        %v1952 = vpop.f32.mrb[0].mxu0
        %v1953 = vadd.f32 %v1849, %v1952
        %v1954 = vpop.f32.mrb[0].mxu0
        %v1955 = vadd.f32 %v1853, %v1954
        %1956 = vmatprep.mubr.f32.mxu0 %v1676
        %1957 = vmatmul.mubr.f32.gmra.mrb[0].mxu0 %v1675
        %v1958 = vpop.f32.mrb[0].mxu0
        %v1959 = vadd.f32 %v1849, %v1958
        %v1960 = vpop.f32.mrb[0].mxu0
        %v1961 = vadd.f32 %v1853, %v1960
        %1962 = vmatprep.mubr.f32.mxu0 %v1677
        %1963 = vmatmul.mubr.f32.gmra.mrb[0].mxu0 %v1676
        %v1964 = vpop.f32.mrb[0].mxu0
        %v1965 = vadd.f32 %v1849, %v1964
        %v1966 = vpop.f32.mrb[0].mxu0
        %v1967 = vadd.f32 %v1853, %v1966
        %1968 = vmatprep.mubr.f32.mxu0 %v1678
        %1969 = vmatmul.mubr.f32.gmra.mrb[0].mxu0 %v1677
        %v1970 = vpop.f32.mrb[0].mxu0
        %v1971 = vadd.f32 %v1849, %v1970
        %v1972 = vpop.f32.mrb[0].mxu0
        %v1973 = vadd.f32 %v1853, %v1972
        %1974 = vmatprep.mubr.f32.mxu0 %v1679
        %1975 = vmatmul.mubr.f32.gmra.mrb[0].mxu0 %v1678
        %v1976 = vpop.f32.mrb[0].mxu0
        %v1977 = vadd.f32 %v1849, %v1976
        %v1978 = vpop.f32.mrb[0].mxu0
        %v1979 = vadd.f32 %v1853, %v1978
        %1980 = vdwg.mxu0
        %1981 = vmatprep.subr.mxu0 %v1748
        %1982 = vmatpush1.msra.mxu0 %v1747
        %1983 = vmatprep.subr.mxu0 %v1750
        %1984 = vmatpush1.msra.mxu0 %v1749
        %1985 = vmatprep.subr.mxu0 %v1752
        %1986 = vmatpush1.msra.mxu0 %v1751
        %1987 = vmatprep.subr.mxu0 %v1754
        %1988 = vmatpush1.msra.mxu0 %v1753
        %1989 = vmatprep.subr.mxu0 %v1756
        %1990 = vmatpush1.msra.mxu0 %v1755
        %1991 = vmatprep.subr.mxu0 %v1758
        %1992 = vmatpush1.msra.mxu0 %v1757
        %1993 = vmatprep.subr.mxu0 %v1760
        %1994 = vmatpush1.msra.mxu0 %v1759
        %1995 = vmatprep.subr.mxu0 %v1762
        %1996 = vmatpush1.msra.mxu0 %v1761
        %1997 = vmatprep.subr.mxu0 %v1764
        %1998 = vmatpush1.msra.mxu0 %v1763
        %1999 = vmatprep.subr.mxu0 %v1766
        %2000 = vmatpush1.msra.mxu0 %v1765
        %2001 = vmatprep.subr.mxu0 %v1768
        %2002 = vmatpush1.msra.mxu0 %v1767
        %2003 = vmatprep.subr.mxu0 %v1770
        %2004 = vmatpush1.msra.mxu0 %v1769
        %2005 = vmatprep.subr.mxu0 %v1772
        %2006 = vmatpush1.msra.mxu0 %v1771
        %2007 = vmatprep.subr.mxu0 %v1774
        %2008 = vmatpush1.msra.mxu0 %v1773
        %2009 = vmatprep.subr.mxu0 %v1776
        %2010 = vmatpush1.msra.mxu0 %v1775
        %2011 = vmatprep.subr.mxu0 %v1778
        %2012 = vmatpush1.msra.mxu0 %v1777
        %2013 = vmatprep.subr.mxu0 %v1780
        %2014 = vmatpush1.msra.mxu0 %v1779
        %2015 = vmatprep.subr.mxu0 %v1782
        %2016 = vmatpush1.msra.mxu0 %v1781
        %2017 = vmatprep.subr.mxu0 %v1784
        %2018 = vmatpush1.msra.mxu0 %v1783
        %2019 = vmatprep.subr.mxu0 %v1786
        %2020 = vmatpush1.msra.mxu0 %v1785
        %2021 = vmatprep.subr.mxu0 %v1788
        %2022 = vmatpush1.msra.mxu0 %v1787
        %2023 = vmatprep.subr.mxu0 %v1790
        %2024 = vmatpush1.msra.mxu0 %v1789
        %2025 = vmatprep.subr.mxu0 %v1792
        %2026 = vmatpush1.msra.mxu0 %v1791
        %2027 = vmatprep.subr.mxu0 %v1794
        %2028 = vmatpush1.msra.mxu0 %v1793
        %2029 = vmatprep.subr.mxu0 %v1796
        %2030 = vmatpush1.msra.mxu0 %v1795
        %2031 = vmatprep.subr.mxu0 %v1798
        %2032 = vmatpush1.msra.mxu0 %v1797
        %2033 = vmatprep.subr.mxu0 %v1800
        %2034 = vmatpush1.msra.mxu0 %v1799
        %2035 = vmatprep.subr.mxu0 %v1802
        %2036 = vmatpush1.msra.mxu0 %v1801
        %2037 = vmatprep.subr.mxu0 %v1804
        %2038 = vmatpush1.msra.mxu0 %v1803
        %2039 = vmatprep.subr.mxu0 %v1806
        %2040 = vmatpush1.msra.mxu0 %v1805
        %2041 = vmatprep.subr.mxu0 %v1808
        %2042 = vmatpush1.msra.mxu0 %v1807
        %2043 = vmatprep.subr.mxu0 %v1810
        %2044 = vmatpush1.msra.mxu0 %v1809
        %2045 = vmatprep.mubr.f32.mxu0 %v1672
        %2046 = vmatmul.mubr.f32.gmra.mrb[0].mxu0 %v1671
        %v2047 = vpop.f32.mrb[0].mxu0
        %v2048 = vadd.f32 %v1923, %v2047
        %v2049 = vpop.f32.mrb[0].mxu0
        %v2050 = vadd.f32 %v1925, %v2049
        %2051 = vmatprep.mubr.f32.mxu0 %v1673
        %2052 = vmatmul.mubr.f32.gmra.mrb[0].mxu0 %v1672
        %v2053 = vpop.f32.mrb[0].mxu0
        %v2054 = vadd.f32 %v1929, %v2053
        %v2055 = vpop.f32.mrb[0].mxu0
        %v2056 = vadd.f32 %v1931, %v2055
        %2057 = vmatprep.mubr.f32.mxu0 %v1674
        %2058 = vmatmul.mubr.f32.gmra.mrb[0].mxu0 %v1673
        %v2059 = vpop.f32.mrb[0].mxu0
        %v2060 = vadd.f32 %v1935, %v2059
        %v2061 = vpop.f32.mrb[0].mxu0
        %v2062 = vadd.f32 %v1937, %v2061
        %2063 = vmatprep.mubr.f32.mxu0 %v1675
        %2064 = vmatmul.mubr.f32.gmra.mrb[0].mxu0 %v1674
        %v2065 = vpop.f32.mrb[0].mxu0
        %v2066 = vadd.f32 %v1941, %v2065
        %v2067 = vpop.f32.mrb[0].mxu0
        %v2068 = vadd.f32 %v1943, %v2067
        %2069 = vmatprep.mubr.f32.mxu0 %v1676
        %2070 = vmatmul.mubr.f32.gmra.mrb[0].mxu0 %v1675
        %v2071 = vpop.f32.mrb[0].mxu0
        %v2072 = vadd.f32 %v1947, %v2071
        %v2073 = vpop.f32.mrb[0].mxu0
        %v2074 = vadd.f32 %v1949, %v2073
        %2075 = vmatprep.mubr.f32.mxu0 %v1677
        %2076 = vmatmul.mubr.f32.gmra.mrb[0].mxu0 %v1676
        %v2077 = vpop.f32.mrb[0].mxu0
        %v2078 = vadd.f32 %v1953, %v2077
        %v2079 = vpop.f32.mrb[0].mxu0
        %v2080 = vadd.f32 %v1955, %v2079
        %2081 = vmatprep.mubr.f32.mxu0 %v1678
        %2082 = vmatmul.mubr.f32.gmra.mrb[0].mxu0 %v1677
        %v2083 = vpop.f32.mrb[0].mxu0
        %v2084 = vadd.f32 %v1959, %v2083
        %v2085 = vpop.f32.mrb[0].mxu0
        %v2086 = vadd.f32 %v1961, %v2085
        %2087 = vmatprep.mubr.f32.mxu0 %v1679
        %2088 = vmatmul.mubr.f32.gmra.mrb[0].mxu0 %v1678
        %v2089 = vpop.f32.mrb[0].mxu0
        %v2090 = vadd.f32 %v1965, %v2089
        %v2091 = vpop.f32.mrb[0].mxu0
        %v2092 = vadd.f32 %v1967, %v2091
        %2093 = vmatprep.mubr.f32.mxu0 %v1680
        %2094 = vmatmul.mubr.f32.gmra.mrb[0].mxu0 %v1679
        %v2095 = vpop.f32.mrb[0].mxu0
        %v2096 = vadd.f32 %v1971, %v2095
        %v2097 = vpop.f32.mrb[0].mxu0
        %v2098 = vadd.f32 %v1973, %v2097
        %2099 = vmatprep.mubr.f32.mxu0 %v1681
        %2100 = vmatmul.mubr.f32.gmra.mrb[0].mxu0 %v1680
        %v2101 = vpop.f32.mrb[0].mxu0
        %v2102 = vadd.f32 %v1977, %v2101
        %v2103 = vpop.f32.mrb[0].mxu0
        %v2104 = vadd.f32 %v1979, %v2103
        %2105 = vdwg.mxu0
        %2106 = vmatprep.subr.mxu0 %v1812
        %2107 = vmatpush1.msra.mxu0 %v1811
        %2108 = vmatprep.subr.mxu0 %v1814
        %2109 = vmatpush1.msra.mxu0 %v1813
        %2110 = vmatprep.subr.mxu0 %v1816
        %2111 = vmatpush1.msra.mxu0 %v1815
        %2112 = vmatprep.subr.mxu0 %v1818
        %2113 = vmatpush1.msra.mxu0 %v1817
        %2114 = vmatprep.subr.mxu0 %v1820
        %2115 = vmatpush1.msra.mxu0 %v1819
        %2116 = vmatprep.subr.mxu0 %v1822
        %2117 = vmatpush1.msra.mxu0 %v1821
        %2118 = vmatprep.subr.mxu0 %v1824
        %2119 = vmatpush1.msra.mxu0 %v1823
        %2120 = vmatprep.subr.mxu0 %v1826
        %2121 = vmatpush1.msra.mxu0 %v1825
        %2122 = vmatprep.subr.mxu0 %v1828
        %2123 = vmatpush1.msra.mxu0 %v1827
        %2124 = vmatprep.subr.mxu0 %v1830
        %2125 = vmatpush1.msra.mxu0 %v1829
        %2126 = vmatprep.subr.mxu0 %v1832
        %2127 = vmatpush1.msra.mxu0 %v1831
        %2128 = vmatprep.subr.mxu0 %v1834
        %2129 = vmatpush1.msra.mxu0 %v1833
        %2130 = vmatprep.subr.mxu0 %v1836
        %2131 = vmatpush1.msra.mxu0 %v1835
        %2132 = vmatprep.subr.mxu0 %v1838
        %2133 = vmatpush1.msra.mxu0 %v1837
        %2134 = vmatprep.subr.mxu0 %v1840
        %2135 = vmatpush1.msra.mxu0 %v1839
        %2136 = vmatprep.subr.mxu0 %v1842
        %2137 = vmatpush1.msra.mxu0 %v1841
        %2138 = vmatprep.subr.mxu0 0.0
        %2139 = vmatpush1.msra.mxu0 0.0
        %2140 = vmatprep.subr.mxu0 0.0
        %2141 = vmatpush1.msra.mxu0 0.0
        %2142 = vmatprep.subr.mxu0 0.0
        %2143 = vmatpush1.msra.mxu0 0.0
        %2144 = vmatprep.subr.mxu0 0.0
        %2145 = vmatpush1.msra.mxu0 0.0
        %2146 = vmatprep.subr.mxu0 0.0
        %2147 = vmatpush1.msra.mxu0 0.0
        %2148 = vmatprep.subr.mxu0 0.0
        %2149 = vmatpush1.msra.mxu0 0.0
        %2150 = vmatprep.subr.mxu0 0.0
        %2151 = vmatpush1.msra.mxu0 0.0
        %2152 = vmatprep.subr.mxu0 0.0
        %2153 = vmatpush1.msra.mxu0 0.0
        %2154 = vmatprep.subr.mxu0 0.0
        %2155 = vmatpush1.msra.mxu0 0.0
        %2156 = vmatprep.subr.mxu0 0.0
        %2157 = vmatpush1.msra.mxu0 0.0
        %2158 = vmatprep.subr.mxu0 0.0
        %2159 = vmatpush1.msra.mxu0 0.0
        %2160 = vmatprep.subr.mxu0 0.0
        %2161 = vmatpush1.msra.mxu0 0.0
        %2162 = vmatprep.subr.mxu0 0.0
        %2163 = vmatpush1.msra.mxu0 0.0
        %2164 = vmatprep.subr.mxu0 0.0
        %2165 = vmatpush1.msra.mxu0 0.0
        %2166 = vmatprep.subr.mxu0 0.0
        %2167 = vmatpush1.msra.mxu0 0.0
        %2168 = vmatprep.subr.mxu0 0.0
        %2169 = vmatpush1.msra.mxu0 0.0
        %2170 = vmatprep.mubr.f32.mxu0 0.0
        %2171 = vmatmul.mubr.f32.gmra.mrb[0].mxu0 %v1673
        %v2172 = vpop.f32.mrb[0].mxu0
        %v2173 = vadd.f32 %v2048, %v2172
        %v2174 = vpop.f32.mrb[0].mxu0
        %v2175 = vadd.f32 %v2050, %v2174
        %2176 = vmatprep.mubr.f32.mxu0 0.0
        %2177 = vmatmul.mubr.f32.gmra.mrb[0].mxu0 %v1674
        %v2178 = vpop.f32.mrb[0].mxu0
        %v2179 = vadd.f32 %v2054, %v2178
        %v2180 = vpop.f32.mrb[0].mxu0
        %v2181 = vadd.f32 %v2056, %v2180
        %2182 = vmatprep.mubr.f32.mxu0 0.0
        %2183 = vmatmul.mubr.f32.gmra.mrb[0].mxu0 %v1675
        %v2184 = vpop.f32.mrb[0].mxu0
        %v2185 = vadd.f32 %v2060, %v2184
        %v2186 = vpop.f32.mrb[0].mxu0
        %v2187 = vadd.f32 %v2062, %v2186
        %2188 = vmatprep.mubr.f32.mxu0 0.0
        %2189 = vmatmul.mubr.f32.gmra.mrb[0].mxu0 %v1676
        %v2190 = vpop.f32.mrb[0].mxu0
        %v2191 = vadd.f32 %v2066, %v2190
        %v2192 = vpop.f32.mrb[0].mxu0
        %v2193 = vadd.f32 %v2068, %v2192
        %2194 = vmatprep.mubr.f32.mxu0 0.0
        %2195 = vmatmul.mubr.f32.gmra.mrb[0].mxu0 %v1677
        %v2196 = vpop.f32.mrb[0].mxu0
        %v2197 = vadd.f32 %v2072, %v2196
        %v2198 = vpop.f32.mrb[0].mxu0
        %v2199 = vadd.f32 %v2074, %v2198
        %2200 = vmatprep.mubr.f32.mxu0 0.0
        %2201 = vmatmul.mubr.f32.gmra.mrb[0].mxu0 %v1678
        %v2202 = vpop.f32.mrb[0].mxu0
        %v2203 = vadd.f32 %v2078, %v2202
        %v2204 = vpop.f32.mrb[0].mxu0
        %v2205 = vadd.f32 %v2080, %v2204
        %2206 = vmatprep.mubr.f32.mxu0 0.0
        %2207 = vmatmul.mubr.f32.gmra.mrb[0].mxu0 %v1679
        %v2208 = vpop.f32.mrb[0].mxu0
        %v2209 = vadd.f32 %v2084, %v2208
        %v2210 = vpop.f32.mrb[0].mxu0
        %v2211 = vadd.f32 %v2086, %v2210
        %2212 = vmatprep.mubr.f32.mxu0 0.0
        %2213 = vmatmul.mubr.f32.gmra.mrb[0].mxu0 %v1680
        %v2214 = vpop.f32.mrb[0].mxu0
        %v2215 = vadd.f32 %v2090, %v2214
        %v2216 = vpop.f32.mrb[0].mxu0
        %v2217 = vadd.f32 %v2092, %v2216
        %2218 = vmatprep.mubr.f32.mxu0 0.0
        %2219 = vmatmul.mubr.f32.gmra.mrb[0].mxu0 %v1681
        %v2220 = vpop.f32.mrb[0].mxu0
        %v2221 = vadd.f32 %v2096, %v2220
        %v2222 = vpop.f32.mrb[0].mxu0
        %v2223 = vadd.f32 %v2098, %v2222
        %2224 = vmatprep.mubr.f32.mxu0 0.0
        %2225 = vmatmul.mubr.f32.gmra.mrb[0].mxu0 %v1682
        %v2226 = vpop.f32.mrb[0].mxu0
        %v2227 = vadd.f32 %v2102, %v2226
        %v2228 = vpop.f32.mrb[0].mxu0
        %v2229 = vadd.f32 %v2104, %v2228
        %2230 = vdwg.mxu0
        %v2231 = vmax.f32 %v2173, 0.0
        %v2232 = vmax.f32 %v2175, 0.0
        %v2233 = vmax.f32 %v2179, 0.0
        %v2234 = vmax.f32 %v2181, 0.0
        %v2235 = vmax.f32 %v2185, 0.0
        %v2236 = vmax.f32 %v2187, 0.0
        %v2237 = vmax.f32 %v2191, 0.0
        %v2238 = vmax.f32 %v2193, 0.0
        %v2239 = vmax.f32 %v2197, 0.0
        %v2240 = vmax.f32 %v2199, 0.0
        %v2241 = vmax.f32 %v2203, 0.0
        %v2242 = vmax.f32 %v2205, 0.0
        %v2243 = vmax.f32 %v2209, 0.0
        %v2244 = vmax.f32 %v2211, 0.0
        %v2245 = vmax.f32 %v2215, 0.0
        %v2246 = vmax.f32 %v2217, 0.0
        %v2247 = vmax.f32 %v2221, 0.0
        %v2248 = vmax.f32 %v2223, 0.0
        %v2249 = vmax.f32 %v2227, 0.0
        %v2250 = vmax.f32 %v2229, 0.0
        %v2251 = vmax.f32 %v2231, %v2233
        %v2252 = vmax.f32 %v2232, %v2234
        %v2253 = vmax.f32 %v2235, %v2237
        %v2254 = vmax.f32 %v2236, %v2238
        %v2255 = vmax.f32 %v2239, %v2241
        %v2256 = vmax.f32 %v2240, %v2242
        %v2257 = vmax.f32 %v2243, %v2245
        %v2258 = vmax.f32 %v2244, %v2246
        %v2259 = vmax.f32 %v2247, %v2249
        %v2260 = vmax.f32 %v2248, %v2250
        %v2261 = vld [vmem:[%s1 + $0xca0] sm:$0xff]
        %v2262 = vld [vmem:[%s1 + $0xcb0] sm:$0xff]
        %v2263 = vld [vmem:[%s1 + $0xcc0] sm:$0xff]
        %v2264 = vld [vmem:[%s1 + $0xcd0] sm:$0xff]
        %v2265 = vld [vmem:[%s1 + $0xce0] sm:$0xff]
        %v2266 = vld [vmem:[%s1 + $0xcf0] sm:$0xff]
        %v2267 = vld [vmem:[%s1 + $0xd00] sm:$0xff]
        %v2268 = vld [vmem:[%s1 + $0xd10] sm:$0xff]
        %v2269 = vld [vmem:[%s1 + $0xd20] sm:$0xff]
        %v2270 = vld [vmem:[%s1 + $0xd30] sm:$0xff]
        %v2271 = vld [vmem:[%s1 + $0xd40] sm:$0xff]
        %v2272 = vld [vmem:[%s1 + $0xd50] sm:$0xff]
        %v2273 = vld [vmem:[%s1 + $0xd60] sm:$0xff]
        %v2274 = vld [vmem:[%s1 + $0xd70] sm:$0xff]
        %v2275 = vld [vmem:[%s1 + $0xd80] sm:$0xff]
        %v2276 = vld [vmem:[%s1 + $0xd90] sm:$0xff]
        %v2277 = vld [vmem:[%s1 + $0xda0] sm:$0xff]
        %v2278 = vld [vmem:[%s1 + $0xdb0] sm:$0xff]
        %v2279 = vld [vmem:[%s1 + $0xdc0] sm:$0xff]
        %v2280 = vld [vmem:[%s1 + $0xdd0] sm:$0xff]
        %vm2281 = vcmask 261120
        %v2283 = vsel %vm2281, %v2252, 0
        %v2286 = vsel %vm2281, %v2254, 0
        %v2289 = vsel %vm2281, %v2256, 0
        %v2292 = vsel %vm2281, %v2258, 0
        %v2295 = vsel %vm2281, %v2260, 0
        %2297 = vmatprep.subr.mxu0 0.0
        %2298 = vmatpush1.msra.mxu0 %v2261
        %2299 = vmatprep.subr.mxu0 0.0
        %2300 = vmatpush1.msra.mxu0 %v2262
        %2301 = vmatprep.subr.mxu0 0.0
        %2302 = vmatpush1.msra.mxu0 %v2263
        %2303 = vmatprep.subr.mxu0 0.0
        %2304 = vmatpush1.msra.mxu0 %v2264
        %2305 = vmatprep.subr.mxu0 0.0
        %2306 = vmatpush1.msra.mxu0 %v2265
        %2307 = vmatprep.subr.mxu0 0.0
        %2308 = vmatpush1.msra.mxu0 %v2266
        %2309 = vmatprep.subr.mxu0 0.0
        %2310 = vmatpush1.msra.mxu0 %v2267
        %2311 = vmatprep.subr.mxu0 0.0
        %2312 = vmatpush1.msra.mxu0 %v2268
        %2313 = vmatprep.subr.mxu0 0.0
        %2314 = vmatpush1.msra.mxu0 %v2269
        %2315 = vmatprep.subr.mxu0 0.0
        %2316 = vmatpush1.msra.mxu0 %v2270
        %2317 = vmatprep.subr.mxu0 0.0
        %2318 = vmatpush1.msra.mxu0 %v2271
        %2319 = vmatprep.subr.mxu0 0.0
        %2320 = vmatpush1.msra.mxu0 %v2272
        %2321 = vmatprep.subr.mxu0 0.0
        %2322 = vmatpush1.msra.mxu0 %v2273
        %2323 = vmatprep.subr.mxu0 0.0
        %2324 = vmatpush1.msra.mxu0 %v2274
        %2325 = vmatprep.subr.mxu0 0.0
        %2326 = vmatpush1.msra.mxu0 %v2275
        %2327 = vmatprep.subr.mxu0 0.0
        %2328 = vmatpush1.msra.mxu0 %v2276
        %2329 = vmatprep.subr.mxu0 0.0
        %2330 = vmatpush1.msra.mxu0 %v2277
        %2331 = vmatprep.subr.mxu0 0.0
        %2332 = vmatpush1.msra.mxu0 %v2278
        %2333 = vmatprep.subr.mxu0 0.0
        %2334 = vmatpush1.msra.mxu0 %v2279
        %2335 = vmatprep.subr.mxu0 0.0
        %2336 = vmatpush1.msra.mxu0 %v2280
        %2337 = vmatprep.subr.mxu0 0.0
        %2338 = vmatpush1.msra.mxu0 0.0
        %2339 = vmatprep.subr.mxu0 0.0
        %2340 = vmatpush1.msra.mxu0 0.0
        %2341 = vmatprep.subr.mxu0 0.0
        %2342 = vmatpush1.msra.mxu0 0.0
        %2343 = vmatprep.subr.mxu0 0.0
        %2344 = vmatpush1.msra.mxu0 0.0
        %2345 = vmatprep.subr.mxu0 0.0
        %2346 = vmatpush1.msra.mxu0 0.0
        %2347 = vmatprep.subr.mxu0 0.0
        %2348 = vmatpush1.msra.mxu0 0.0
        %2349 = vmatprep.subr.mxu0 0.0
        %2350 = vmatpush1.msra.mxu0 0.0
        %2351 = vmatprep.subr.mxu0 0.0
        %2352 = vmatpush1.msra.mxu0 0.0
        %2353 = vmatprep.subr.mxu0 0.0
        %2354 = vmatpush1.msra.mxu0 0.0
        %2355 = vmatprep.subr.mxu0 0.0
        %2356 = vmatpush1.msra.mxu0 0.0
        %2357 = vmatprep.subr.mxu0 0.0
        %2358 = vmatpush1.msra.mxu0 0.0
        %2359 = vmatprep.subr.mxu0 0.0
        %2360 = vmatpush1.msra.mxu0 0.0
        %2361 = vmatprep.mubr.f32.mxu0 %v2283
        %2362 = vmatmul.mubr.f32.gmra.mrb[0].mxu0 %v2251
        %v2363 = vpop.f32.mrb[0].mxu0
        %v2364 = vadd.f32 0.0, %v2363
        %v2365 = vpop.f32.mrb[0].mxu0
        %2366 = vmatprep.mubr.f32.mxu0 %v2286
        %2367 = vmatmul.mubr.f32.gmra.mrb[0].mxu0 %v2253
        %v2368 = vpop.f32.mrb[0].mxu0
        %v2369 = vadd.f32 0.0, %v2368
        %v2370 = vpop.f32.mrb[0].mxu0
        %2371 = vmatprep.mubr.f32.mxu0 %v2289
        %2372 = vmatmul.mubr.f32.gmra.mrb[0].mxu0 %v2255
        %v2373 = vpop.f32.mrb[0].mxu0
        %v2374 = vadd.f32 0.0, %v2373
        %v2375 = vpop.f32.mrb[0].mxu0
        %2376 = vmatprep.mubr.f32.mxu0 %v2292
        %2377 = vmatmul.mubr.f32.gmra.mrb[0].mxu0 %v2257
        %v2378 = vpop.f32.mrb[0].mxu0
        %v2379 = vadd.f32 0.0, %v2378
        %v2380 = vpop.f32.mrb[0].mxu0
        %2381 = vmatprep.mubr.f32.mxu0 %v2295
        %2382 = vmatmul.mubr.f32.gmra.mrb[0].mxu0 %v2259
        %v2383 = vpop.f32.mrb[0].mxu0
        %v2384 = vadd.f32 0.0, %v2383
        %v2385 = vpop.f32.mrb[0].mxu0
        %2386 = vdwg.mxu0
        %v2387 = vld [vmem:[%s1 + $0xde0] sm:$0xff]
        %v2388 = vld [vmem:[%s1 + $0xdf0] sm:$0xff]
        %v2389 = vld [vmem:[%s1 + $0xe00] sm:$0xff]
        %v2390 = vld [vmem:[%s1 + $0xe10] sm:$0xff]
        %v2391 = vld [vmem:[%s1 + $0xe20] sm:$0xff]
        %v2392 = vld [vmem:[%s1 + $0xe30] sm:$0xff]
        %v2393 = vld [vmem:[%s1 + $0xe40] sm:$0xff]
        %v2394 = vld [vmem:[%s1 + $0xe50] sm:$0xff]
        %v2395 = vld [vmem:[%s1 + $0xe60] sm:$0xff]
        %v2396 = vld [vmem:[%s1 + $0xe70] sm:$0xff]
        %v2397 = vld [vmem:[%s1 + $0xe80] sm:$0xff]
        %v2398 = vld [vmem:[%s1 + $0xe90] sm:$0xff]
        %v2399 = vld [vmem:[%s1 + $0xea0] sm:$0xff]
        %v2400 = vld [vmem:[%s1 + $0xeb0] sm:$0xff]
        %v2401 = vld [vmem:[%s1 + $0xec0] sm:$0xff]
        %v2402 = vld [vmem:[%s1 + $0xed0] sm:$0xff]
        %v2403 = vld [vmem:[%s1 + $0xee0] sm:$0xff]
        %v2404 = vld [vmem:[%s1 + $0xef0] sm:$0xff]
        %v2405 = vld [vmem:[%s1 + $0xf00] sm:$0xff]
        %v2406 = vld [vmem:[%s1 + $0xf10] sm:$0xff]
        %2407 = vmatprep.subr.mxu0 0.0
        %2408 = vmatpush1.msra.mxu0 %v2387
        %2409 = vmatprep.subr.mxu0 0.0
        %2410 = vmatpush1.msra.mxu0 %v2388
        %2411 = vmatprep.subr.mxu0 0.0
        %2412 = vmatpush1.msra.mxu0 %v2389
        %2413 = vmatprep.subr.mxu0 0.0
        %2414 = vmatpush1.msra.mxu0 %v2390
        %2415 = vmatprep.subr.mxu0 0.0
        %2416 = vmatpush1.msra.mxu0 %v2391
        %2417 = vmatprep.subr.mxu0 0.0
        %2418 = vmatpush1.msra.mxu0 %v2392
        %2419 = vmatprep.subr.mxu0 0.0
        %2420 = vmatpush1.msra.mxu0 %v2393
        %2421 = vmatprep.subr.mxu0 0.0
        %2422 = vmatpush1.msra.mxu0 %v2394
        %2423 = vmatprep.subr.mxu0 0.0
        %2424 = vmatpush1.msra.mxu0 %v2395
        %2425 = vmatprep.subr.mxu0 0.0
        %2426 = vmatpush1.msra.mxu0 %v2396
        %2427 = vmatprep.subr.mxu0 0.0
        %2428 = vmatpush1.msra.mxu0 %v2397
        %2429 = vmatprep.subr.mxu0 0.0
        %2430 = vmatpush1.msra.mxu0 %v2398
        %2431 = vmatprep.subr.mxu0 0.0
        %2432 = vmatpush1.msra.mxu0 %v2399
        %2433 = vmatprep.subr.mxu0 0.0
        %2434 = vmatpush1.msra.mxu0 %v2400
        %2435 = vmatprep.subr.mxu0 0.0
        %2436 = vmatpush1.msra.mxu0 %v2401
        %2437 = vmatprep.subr.mxu0 0.0
        %2438 = vmatpush1.msra.mxu0 %v2402
        %2439 = vmatprep.subr.mxu0 0.0
        %2440 = vmatpush1.msra.mxu0 %v2403
        %2441 = vmatprep.subr.mxu0 0.0
        %2442 = vmatpush1.msra.mxu0 %v2404
        %2443 = vmatprep.subr.mxu0 0.0
        %2444 = vmatpush1.msra.mxu0 %v2405
        %2445 = vmatprep.subr.mxu0 0.0
        %2446 = vmatpush1.msra.mxu0 %v2406
        %2447 = vmatprep.subr.mxu0 0.0
        %2448 = vmatpush1.msra.mxu0 0.0
        %2449 = vmatprep.subr.mxu0 0.0
        %2450 = vmatpush1.msra.mxu0 0.0
        %2451 = vmatprep.subr.mxu0 0.0
        %2452 = vmatpush1.msra.mxu0 0.0
        %2453 = vmatprep.subr.mxu0 0.0
        %2454 = vmatpush1.msra.mxu0 0.0
        %2455 = vmatprep.subr.mxu0 0.0
        %2456 = vmatpush1.msra.mxu0 0.0
        %2457 = vmatprep.subr.mxu0 0.0
        %2458 = vmatpush1.msra.mxu0 0.0
        %2459 = vmatprep.subr.mxu0 0.0
        %2460 = vmatpush1.msra.mxu0 0.0
        %2461 = vmatprep.subr.mxu0 0.0
        %2462 = vmatpush1.msra.mxu0 0.0
        %2463 = vmatprep.subr.mxu0 0.0
        %2464 = vmatpush1.msra.mxu0 0.0
        %2465 = vmatprep.subr.mxu0 0.0
        %2466 = vmatpush1.msra.mxu0 0.0
        %2467 = vmatprep.subr.mxu0 0.0
        %2468 = vmatpush1.msra.mxu0 0.0
        %2469 = vmatprep.subr.mxu0 0.0
        %2470 = vmatpush1.msra.mxu0 0.0
        %2471 = vmatprep.mubr.f32.mxu0 %v2283
        %2472 = vmatmul.mubr.f32.gmra.mrb[0].mxu0 %v2251
        %v2473 = vpop.f32.mrb[0].mxu0
        %v2474 = vadd.f32 0.0, %v2473
        %v2475 = vpop.f32.mrb[0].mxu0
        %2476 = vmatprep.mubr.f32.mxu0 %v2286
        %2477 = vmatmul.mubr.f32.gmra.mrb[0].mxu0 %v2253
        %v2478 = vpop.f32.mrb[0].mxu0
        %v2479 = vadd.f32 0.0, %v2478
        %v2480 = vpop.f32.mrb[0].mxu0
        %2481 = vmatprep.mubr.f32.mxu0 %v2289
        %2482 = vmatmul.mubr.f32.gmra.mrb[0].mxu0 %v2255
        %v2483 = vpop.f32.mrb[0].mxu0
        %v2484 = vadd.f32 0.0, %v2483
        %v2485 = vpop.f32.mrb[0].mxu0
        %2486 = vmatprep.mubr.f32.mxu0 %v2292
        %2487 = vmatmul.mubr.f32.gmra.mrb[0].mxu0 %v2257
        %v2488 = vpop.f32.mrb[0].mxu0
        %v2489 = vadd.f32 0.0, %v2488
        %v2490 = vpop.f32.mrb[0].mxu0
        %2491 = vmatprep.mubr.f32.mxu0 %v2295
        %2492 = vmatmul.mubr.f32.gmra.mrb[0].mxu0 %v2259
        %v2493 = vpop.f32.mrb[0].mxu0
        %v2494 = vadd.f32 0.0, %v2493
        %v2495 = vpop.f32.mrb[0].mxu0
        %2496 = vdwg.mxu0
        %v2497 = vmax.f32 %v2364, %v2474
        %v2498 = vmax.f32 %v2369, %v2479
        %v2499 = vmax.f32 %v2374, %v2484
        %v2500 = vmax.f32 %v2379, %v2489
        %v2501 = vmax.f32 %v2384, %v2494
        %v2502 = vld [vmem:[%s1 + $0xf20] sm:$0xff]
        %v2503 = vld [vmem:[%s1 + $0xf30] sm:$0xff]
        %v2504 = vld [vmem:[%s1 + $0xf40] sm:$0xff]
        %v2505 = vld [vmem:[%s1 + $0xf50] sm:$0xff]
        %v2506 = vld [vmem:[%s1 + $0xf60] sm:$0xff]
        %v2507 = vld [vmem:[%s1 + $0xf70] sm:$0xff]
        %v2508 = vld [vmem:[%s1 + $0xf80] sm:$0xff]
        %v2509 = vld [vmem:[%s1 + $0xf90] sm:$0xff]
        %v2510 = vld [vmem:[%s1 + $0xfa0] sm:$0xff]
        %v2511 = vld [vmem:[%s1 + $0xfb0] sm:$0xff]
        %v2512 = vld [vmem:[%s1 + $0xfc0] sm:$0xff]
        %v2513 = vld [vmem:[%s1 + $0xfd0] sm:$0xff]
        %v2514 = vld [vmem:[%s1 + $0xfe0] sm:$0xff]
        %v2515 = vld [vmem:[%s1 + $0xff0] sm:$0xff]
        %v2516 = vld [vmem:[%s1 + $0x1000] sm:$0xff]
        %v2517 = vld [vmem:[%s1 + $0x1010] sm:$0xff]
        %v2518 = vld [vmem:[%s1 + $0x1020] sm:$0xff]
        %v2519 = vld [vmem:[%s1 + $0x1030] sm:$0xff]
        %v2520 = vld [vmem:[%s1 + $0x1040] sm:$0xff]
        %v2521 = vld [vmem:[%s1 + $0x1050] sm:$0xff]
        %v2522 = vld [vmem:[%s1 + $0x1060] sm:$0xff]
        %v2523 = vld [vmem:[%s1 + $0x1070] sm:$0xff]
        %v2524 = vld [vmem:[%s1 + $0x1080] sm:$0xff]
        %v2525 = vld [vmem:[%s1 + $0x1090] sm:$0xff]
        %v2526 = vld [vmem:[%s1 + $0x10a0] sm:$0xff]
        %v2527 = vld [vmem:[%s1 + $0x10b0] sm:$0xff]
        %v2528 = vld [vmem:[%s1 + $0x10c0] sm:$0xff]
        %v2529 = vld [vmem:[%s1 + $0x10d0] sm:$0xff]
        %v2530 = vld [vmem:[%s1 + $0x10e0] sm:$0xff]
        %v2531 = vld [vmem:[%s1 + $0x10f0] sm:$0xff]
        %v2532 = vld [vmem:[%s1 + $0x1100] sm:$0xff]
        %v2533 = vld [vmem:[%s1 + $0x1110] sm:$0xff]
        %v2534 = vld [vmem:[%s1 + $0x1120] sm:$0xff]
        %v2535 = vld [vmem:[%s1 + $0x1130] sm:$0xff]
        %v2536 = vld [vmem:[%s1 + $0x1140] sm:$0xff]
        %v2537 = vld [vmem:[%s1 + $0x1150] sm:$0xff]
        %v2538 = vld [vmem:[%s1 + $0x1160] sm:$0xff]
        %v2539 = vld [vmem:[%s1 + $0x1170] sm:$0xff]
        %v2540 = vld [vmem:[%s1 + $0x1180] sm:$0xff]
        %v2541 = vld [vmem:[%s1 + $0x1190] sm:$0xff]
        %v2542 = vld [vmem:[%s1 + $0x11a0] sm:$0xff]
        %v2543 = vld [vmem:[%s1 + $0x11b0] sm:$0xff]
        %v2544 = vld [vmem:[%s1 + $0x11c0] sm:$0xff]
        %v2545 = vld [vmem:[%s1 + $0x11d0] sm:$0xff]
        %v2546 = vld [vmem:[%s1 + $0x11e0] sm:$0xff]
        %v2547 = vld [vmem:[%s1 + $0x11f0] sm:$0xff]
        %v2548 = vld [vmem:[%s1 + $0x1200] sm:$0xff]
        %v2549 = vld [vmem:[%s1 + $0x1210] sm:$0xff]
        %v2550 = vld [vmem:[%s1 + $0x1220] sm:$0xff]
        %v2551 = vld [vmem:[%s1 + $0x1230] sm:$0xff]
        %v2552 = vld [vmem:[%s1 + $0x1240] sm:$0xff]
        %v2553 = vld [vmem:[%s1 + $0x1250] sm:$0xff]
        %v2554 = vld [vmem:[%s1 + $0x1260] sm:$0xff]
        %v2555 = vld [vmem:[%s1 + $0x1270] sm:$0xff]
        %v2556 = vld [vmem:[%s1 + $0x1280] sm:$0xff]
        %v2557 = vld [vmem:[%s1 + $0x1290] sm:$0xff]
        %v2558 = vld [vmem:[%s1 + $0x12a0] sm:$0xff]
        %v2559 = vld [vmem:[%s1 + $0x12b0] sm:$0xff]
        %v2560 = vld [vmem:[%s1 + $0x12c0] sm:$0xff]
        %v2561 = vld [vmem:[%s1 + $0x12d0] sm:$0xff]
        %v2562 = vld [vmem:[%s1 + $0x12e0] sm:$0xff]
        %v2563 = vld [vmem:[%s1 + $0x12f0] sm:$0xff]
        %v2564 = vld [vmem:[%s1 + $0x1300] sm:$0xff]
        %v2565 = vld [vmem:[%s1 + $0x1310] sm:$0xff]
        %v2566 = vld [vmem:[%s1 + $0x1320] sm:$0xff]
        %v2567 = vld [vmem:[%s1 + $0x1330] sm:$0xff]
        %v2568 = vld [vmem:[%s1 + $0x1340] sm:$0xff]
        %v2569 = vld [vmem:[%s1 + $0x1350] sm:$0xff]
        %v2570 = vld [vmem:[%s1 + $0x1360] sm:$0xff]
        %v2571 = vld [vmem:[%s1 + $0x1370] sm:$0xff]
        %v2572 = vld [vmem:[%s1 + $0x1380] sm:$0xff]
        %v2573 = vld [vmem:[%s1 + $0x1390] sm:$0xff]
        %v2574 = vld [vmem:[%s1 + $0x13a0] sm:$0xff]
        %v2575 = vld [vmem:[%s1 + $0x13b0] sm:$0xff]
        %v2576 = vld [vmem:[%s1 + $0x13c0] sm:$0xff]
        %v2577 = vld [vmem:[%s1 + $0x13d0] sm:$0xff]
        %v2578 = vld [vmem:[%s1 + $0x13e0] sm:$0xff]
        %v2579 = vld [vmem:[%s1 + $0x13f0] sm:$0xff]
        %v2580 = vld [vmem:[%s1 + $0x1400] sm:$0xff]
        %v2581 = vld [vmem:[%s1 + $0x1410] sm:$0xff]
        %s2582 = scalar_lea.vmem %s2, 2
        %v2583 = vld [vmem:[%s2582] ss:$8 sm:$0x3]
        %v2585 = vlaneseq
        %v2586 = vshrl.u32 %v2585, 7
        %v2587 = vsub.s32 0, %v2586
        %v2588 = vrot.slane %v2583, %v2587
        %2590 = vmatprep.subr.mxu0 0.0
        %2591 = vmatpush1.msra.mxu0 %v2502
        %2592 = vmatprep.subr.mxu0 0.0
        %2593 = vmatpush1.msra.mxu0 %v2503
        %2594 = vmatprep.subr.mxu0 0.0
        %2595 = vmatpush1.msra.mxu0 %v2504
        %2596 = vmatprep.subr.mxu0 0.0
        %2597 = vmatpush1.msra.mxu0 %v2505
        %2598 = vmatprep.subr.mxu0 0.0
        %2599 = vmatpush1.msra.mxu0 %v2506
        %2600 = vmatprep.subr.mxu0 0.0
        %2601 = vmatpush1.msra.mxu0 %v2507
        %2602 = vmatprep.subr.mxu0 0.0
        %2603 = vmatpush1.msra.mxu0 %v2508
        %2604 = vmatprep.subr.mxu0 0.0
        %2605 = vmatpush1.msra.mxu0 %v2509
        %2606 = vmatprep.subr.mxu0 0.0
        %2607 = vmatpush1.msra.mxu0 %v2510
        %2608 = vmatprep.subr.mxu0 0.0
        %2609 = vmatpush1.msra.mxu0 %v2511
        %2610 = vmatprep.subr.mxu0 0.0
        %2611 = vmatpush1.msra.mxu0 %v2512
        %2612 = vmatprep.subr.mxu0 0.0
        %2613 = vmatpush1.msra.mxu0 %v2513
        %2614 = vmatprep.subr.mxu0 0.0
        %2615 = vmatpush1.msra.mxu0 %v2514
        %2616 = vmatprep.subr.mxu0 0.0
        %2617 = vmatpush1.msra.mxu0 %v2515
        %2618 = vmatprep.subr.mxu0 0.0
        %2619 = vmatpush1.msra.mxu0 %v2516
        %2620 = vmatprep.subr.mxu0 0.0
        %2621 = vmatpush1.msra.mxu0 %v2517
        %2622 = vmatprep.subr.mxu0 0.0
        %2623 = vmatpush1.msra.mxu0 %v2518
        %2624 = vmatprep.subr.mxu0 0.0
        %2625 = vmatpush1.msra.mxu0 %v2519
        %2626 = vmatprep.subr.mxu0 0.0
        %2627 = vmatpush1.msra.mxu0 %v2520
        %2628 = vmatprep.subr.mxu0 0.0
        %2629 = vmatpush1.msra.mxu0 %v2521
        %2630 = vmatprep.subr.mxu0 0.0
        %2631 = vmatpush1.msra.mxu0 %v2522
        %2632 = vmatprep.subr.mxu0 0.0
        %2633 = vmatpush1.msra.mxu0 %v2523
        %2634 = vmatprep.subr.mxu0 0.0
        %2635 = vmatpush1.msra.mxu0 %v2524
        %2636 = vmatprep.subr.mxu0 0.0
        %2637 = vmatpush1.msra.mxu0 %v2525
        %2638 = vmatprep.subr.mxu0 0.0
        %2639 = vmatpush1.msra.mxu0 %v2526
        %2640 = vmatprep.subr.mxu0 0.0
        %2641 = vmatpush1.msra.mxu0 %v2527
        %2642 = vmatprep.subr.mxu0 0.0
        %2643 = vmatpush1.msra.mxu0 %v2528
        %2644 = vmatprep.subr.mxu0 0.0
        %2645 = vmatpush1.msra.mxu0 %v2529
        %2646 = vmatprep.subr.mxu0 0.0
        %2647 = vmatpush1.msra.mxu0 %v2530
        %2648 = vmatprep.subr.mxu0 0.0
        %2649 = vmatpush1.msra.mxu0 %v2531
        %2650 = vmatprep.subr.mxu0 0.0
        %2651 = vmatpush1.msra.mxu0 %v2532
        %2652 = vmatprep.subr.mxu0 0.0
        %2653 = vmatpush1.msra.mxu0 %v2533
        %2654 = vmatprep.mubr.f32.mxu0 %v2498
        %2655 = vmatmul.mubr.f32.gmra.mrb[0].mxu0 %v2497
        %v2656 = vpop.f32.mrb[0].mxu0
        %v2657 = vadd.f32 %v2588, %v2656
        %v2658 = vpop.f32.mrb[0].mxu0
        %2659 = vdwg.mxu0
        %2660 = vmatprep.subr.mxu0 0.0
        %2661 = vmatpush1.msra.mxu0 %v2534
        %2662 = vmatprep.subr.mxu0 0.0
        %2663 = vmatpush1.msra.mxu0 %v2535
        %2664 = vmatprep.subr.mxu0 0.0
        %2665 = vmatpush1.msra.mxu0 %v2536
        %2666 = vmatprep.subr.mxu0 0.0
        %2667 = vmatpush1.msra.mxu0 %v2537
        %2668 = vmatprep.subr.mxu0 0.0
        %2669 = vmatpush1.msra.mxu0 %v2538
        %2670 = vmatprep.subr.mxu0 0.0
        %2671 = vmatpush1.msra.mxu0 %v2539
        %2672 = vmatprep.subr.mxu0 0.0
        %2673 = vmatpush1.msra.mxu0 %v2540
        %2674 = vmatprep.subr.mxu0 0.0
        %2675 = vmatpush1.msra.mxu0 %v2541
        %2676 = vmatprep.subr.mxu0 0.0
        %2677 = vmatpush1.msra.mxu0 %v2542
        %2678 = vmatprep.subr.mxu0 0.0
        %2679 = vmatpush1.msra.mxu0 %v2543
        %2680 = vmatprep.subr.mxu0 0.0
        %2681 = vmatpush1.msra.mxu0 %v2544
        %2682 = vmatprep.subr.mxu0 0.0
        %2683 = vmatpush1.msra.mxu0 %v2545
        %2684 = vmatprep.subr.mxu0 0.0
        %2685 = vmatpush1.msra.mxu0 %v2546
        %2686 = vmatprep.subr.mxu0 0.0
        %2687 = vmatpush1.msra.mxu0 %v2547
        %2688 = vmatprep.subr.mxu0 0.0
        %2689 = vmatpush1.msra.mxu0 %v2548
        %2690 = vmatprep.subr.mxu0 0.0
        %2691 = vmatpush1.msra.mxu0 %v2549
        %2692 = vmatprep.subr.mxu0 0.0
        %2693 = vmatpush1.msra.mxu0 %v2550
        %2694 = vmatprep.subr.mxu0 0.0
        %2695 = vmatpush1.msra.mxu0 %v2551
        %2696 = vmatprep.subr.mxu0 0.0
        %2697 = vmatpush1.msra.mxu0 %v2552
        %2698 = vmatprep.subr.mxu0 0.0
        %2699 = vmatpush1.msra.mxu0 %v2553
        %2700 = vmatprep.subr.mxu0 0.0
        %2701 = vmatpush1.msra.mxu0 %v2554
        %2702 = vmatprep.subr.mxu0 0.0
        %2703 = vmatpush1.msra.mxu0 %v2555
        %2704 = vmatprep.subr.mxu0 0.0
        %2705 = vmatpush1.msra.mxu0 %v2556
        %2706 = vmatprep.subr.mxu0 0.0
        %2707 = vmatpush1.msra.mxu0 %v2557
        %2708 = vmatprep.subr.mxu0 0.0
        %2709 = vmatpush1.msra.mxu0 %v2558
        %2710 = vmatprep.subr.mxu0 0.0
        %2711 = vmatpush1.msra.mxu0 %v2559
        %2712 = vmatprep.subr.mxu0 0.0
        %2713 = vmatpush1.msra.mxu0 %v2560
        %2714 = vmatprep.subr.mxu0 0.0
        %2715 = vmatpush1.msra.mxu0 %v2561
        %2716 = vmatprep.subr.mxu0 0.0
        %2717 = vmatpush1.msra.mxu0 %v2562
        %2718 = vmatprep.subr.mxu0 0.0
        %2719 = vmatpush1.msra.mxu0 %v2563
        %2720 = vmatprep.subr.mxu0 0.0
        %2721 = vmatpush1.msra.mxu0 %v2564
        %2722 = vmatprep.subr.mxu0 0.0
        %2723 = vmatpush1.msra.mxu0 %v2565
        %2724 = vmatprep.mubr.f32.mxu0 %v2500
        %2725 = vmatmul.mubr.f32.gmra.mrb[0].mxu0 %v2499
        %v2726 = vpop.f32.mrb[0].mxu0
        %v2727 = vadd.f32 %v2657, %v2726
        %v2728 = vpop.f32.mrb[0].mxu0
        %2729 = vdwg.mxu0
        %2730 = vmatprep.subr.mxu0 0.0
        %2731 = vmatpush1.msra.mxu0 %v2566
        %2732 = vmatprep.subr.mxu0 0.0
        %2733 = vmatpush1.msra.mxu0 %v2567
        %2734 = vmatprep.subr.mxu0 0.0
        %2735 = vmatpush1.msra.mxu0 %v2568
        %2736 = vmatprep.subr.mxu0 0.0
        %2737 = vmatpush1.msra.mxu0 %v2569
        %2738 = vmatprep.subr.mxu0 0.0
        %2739 = vmatpush1.msra.mxu0 %v2570
        %2740 = vmatprep.subr.mxu0 0.0
        %2741 = vmatpush1.msra.mxu0 %v2571
        %2742 = vmatprep.subr.mxu0 0.0
        %2743 = vmatpush1.msra.mxu0 %v2572
        %2744 = vmatprep.subr.mxu0 0.0
        %2745 = vmatpush1.msra.mxu0 %v2573
        %2746 = vmatprep.subr.mxu0 0.0
        %2747 = vmatpush1.msra.mxu0 %v2574
        %2748 = vmatprep.subr.mxu0 0.0
        %2749 = vmatpush1.msra.mxu0 %v2575
        %2750 = vmatprep.subr.mxu0 0.0
        %2751 = vmatpush1.msra.mxu0 %v2576
        %2752 = vmatprep.subr.mxu0 0.0
        %2753 = vmatpush1.msra.mxu0 %v2577
        %2754 = vmatprep.subr.mxu0 0.0
        %2755 = vmatpush1.msra.mxu0 %v2578
        %2756 = vmatprep.subr.mxu0 0.0
        %2757 = vmatpush1.msra.mxu0 %v2579
        %2758 = vmatprep.subr.mxu0 0.0
        %2759 = vmatpush1.msra.mxu0 %v2580
        %2760 = vmatprep.subr.mxu0 0.0
        %2761 = vmatpush1.msra.mxu0 %v2581
        %2762 = vmatprep.subr.mxu0 0.0
        %2763 = vmatpush1.msra.mxu0 0.0
        %2764 = vmatprep.subr.mxu0 0.0
        %2765 = vmatpush1.msra.mxu0 0.0
        %2766 = vmatprep.subr.mxu0 0.0
        %2767 = vmatpush1.msra.mxu0 0.0
        %2768 = vmatprep.subr.mxu0 0.0
        %2769 = vmatpush1.msra.mxu0 0.0
        %2770 = vmatprep.subr.mxu0 0.0
        %2771 = vmatpush1.msra.mxu0 0.0
        %2772 = vmatprep.subr.mxu0 0.0
        %2773 = vmatpush1.msra.mxu0 0.0
        %2774 = vmatprep.subr.mxu0 0.0
        %2775 = vmatpush1.msra.mxu0 0.0
        %2776 = vmatprep.subr.mxu0 0.0
        %2777 = vmatpush1.msra.mxu0 0.0
        %2778 = vmatprep.subr.mxu0 0.0
        %2779 = vmatpush1.msra.mxu0 0.0
        %2780 = vmatprep.subr.mxu0 0.0
        %2781 = vmatpush1.msra.mxu0 0.0
        %2782 = vmatprep.subr.mxu0 0.0
        %2783 = vmatpush1.msra.mxu0 0.0
        %2784 = vmatprep.subr.mxu0 0.0
        %2785 = vmatpush1.msra.mxu0 0.0
        %2786 = vmatprep.subr.mxu0 0.0
        %2787 = vmatpush1.msra.mxu0 0.0
        %2788 = vmatprep.subr.mxu0 0.0
        %2789 = vmatpush1.msra.mxu0 0.0
        %2790 = vmatprep.subr.mxu0 0.0
        %2791 = vmatpush1.msra.mxu0 0.0
        %2792 = vmatprep.subr.mxu0 0.0
        %2793 = vmatpush1.msra.mxu0 0.0
        %2794 = vmatprep.mubr.f32.mxu0 0.0
        %2795 = vmatmul.mubr.f32.gmra.mrb[0].mxu0 %v2501
        %v2796 = vpop.f32.mrb[0].mxu0
        %v2797 = vadd.f32 %v2727, %v2796
        %v2798 = vpop.f32.mrb[0].mxu0
        %2799 = vdwg.mxu0
        %v2800 = vmax.f32 %v2797, 0.0
        %v2801 = vld [vmem:[%s1 + $0x1420] sm:$0xff]
        %v2802 = vld [vmem:[%s1 + $0x1430] sm:$0xff]
        %v2803 = vld [vmem:[%s1 + $0x1440] sm:$0xff]
        %v2804 = vld [vmem:[%s1 + $0x1450] sm:$0xff]
        %v2805 = vld [vmem:[%s1 + $0x1460] sm:$0xff]
        %v2806 = vld [vmem:[%s1 + $0x1470] sm:$0xff]
        %v2807 = vld [vmem:[%s1 + $0x1480] sm:$0xff]
        %v2808 = vld [vmem:[%s1 + $0x1490] sm:$0xff]
        %v2809 = vld [vmem:[%s1 + $0x14a0] sm:$0xff]
        %v2810 = vld [vmem:[%s1 + $0x14b0] sm:$0xff]
        %v2811 = vld [vmem:[%s1 + $0x14c0] sm:$0xff]
        %v2812 = vld [vmem:[%s1 + $0x14d0] sm:$0xff]
        %v2813 = vld [vmem:[%s1 + $0x14e0] sm:$0xff]
        %v2814 = vld [vmem:[%s1 + $0x14f0] sm:$0xff]
        %v2815 = vld [vmem:[%s1 + $0x1500] sm:$0xff]
        %v2816 = vld [vmem:[%s1 + $0x1510] sm:$0xff]
        %s2817 = scalar_lea.vmem %s2, 3
        %v2818 = vld [vmem:[%s2817] ss:$8 sm:$0x3]
        %v2820 = vlaneseq
        %v2821 = vshrl.u32 %v2820, 7
        %v2822 = vsub.s32 0, %v2821
        %v2823 = vrot.slane %v2818, %v2822
        %2825 = vmatprep.subr.mxu0 0.0
        %2826 = vmatpush1.msra.mxu0 %v2801
        %2827 = vmatprep.subr.mxu0 0.0
        %2828 = vmatpush1.msra.mxu0 %v2802
        %2829 = vmatprep.subr.mxu0 0.0
        %2830 = vmatpush1.msra.mxu0 %v2803
        %2831 = vmatprep.subr.mxu0 0.0
        %2832 = vmatpush1.msra.mxu0 %v2804
        %2833 = vmatprep.subr.mxu0 0.0
        %2834 = vmatpush1.msra.mxu0 %v2805
        %2835 = vmatprep.subr.mxu0 0.0
        %2836 = vmatpush1.msra.mxu0 %v2806
        %2837 = vmatprep.subr.mxu0 0.0
        %2838 = vmatpush1.msra.mxu0 %v2807
        %2839 = vmatprep.subr.mxu0 0.0
        %2840 = vmatpush1.msra.mxu0 %v2808
        %2841 = vmatprep.subr.mxu0 0.0
        %2842 = vmatpush1.msra.mxu0 %v2809
        %2843 = vmatprep.subr.mxu0 0.0
        %2844 = vmatpush1.msra.mxu0 %v2810
        %2845 = vmatprep.subr.mxu0 0.0
        %2846 = vmatpush1.msra.mxu0 %v2811
        %2847 = vmatprep.subr.mxu0 0.0
        %2848 = vmatpush1.msra.mxu0 %v2812
        %2849 = vmatprep.subr.mxu0 0.0
        %2850 = vmatpush1.msra.mxu0 %v2813
        %2851 = vmatprep.subr.mxu0 0.0
        %2852 = vmatpush1.msra.mxu0 %v2814
        %2853 = vmatprep.subr.mxu0 0.0
        %2854 = vmatpush1.msra.mxu0 %v2815
        %2855 = vmatprep.subr.mxu0 0.0
        %2856 = vmatpush1.msra.mxu0 %v2816
        %2857 = vmatprep.subr.mxu0 0.0
        %2858 = vmatpush1.msra.mxu0 0.0
        %2859 = vmatprep.subr.mxu0 0.0
        %2860 = vmatpush1.msra.mxu0 0.0
        %2861 = vmatprep.subr.mxu0 0.0
        %2862 = vmatpush1.msra.mxu0 0.0
        %2863 = vmatprep.subr.mxu0 0.0
        %2864 = vmatpush1.msra.mxu0 0.0
        %2865 = vmatprep.subr.mxu0 0.0
        %2866 = vmatpush1.msra.mxu0 0.0
        %2867 = vmatprep.subr.mxu0 0.0
        %2868 = vmatpush1.msra.mxu0 0.0
        %2869 = vmatprep.subr.mxu0 0.0
        %2870 = vmatpush1.msra.mxu0 0.0
        %2871 = vmatprep.subr.mxu0 0.0
        %2872 = vmatpush1.msra.mxu0 0.0
        %2873 = vmatprep.subr.mxu0 0.0
        %2874 = vmatpush1.msra.mxu0 0.0
        %2875 = vmatprep.subr.mxu0 0.0
        %2876 = vmatpush1.msra.mxu0 0.0
        %2877 = vmatprep.subr.mxu0 0.0
        %2878 = vmatpush1.msra.mxu0 0.0
        %2879 = vmatprep.subr.mxu0 0.0
        %2880 = vmatpush1.msra.mxu0 0.0
        %2881 = vmatprep.subr.mxu0 0.0
        %2882 = vmatpush1.msra.mxu0 0.0
        %2883 = vmatprep.subr.mxu0 0.0
        %2884 = vmatpush1.msra.mxu0 0.0
        %2885 = vmatprep.subr.mxu0 0.0
        %2886 = vmatpush1.msra.mxu0 0.0
        %2887 = vmatprep.subr.mxu0 0.0
        %2888 = vmatpush1.msra.mxu0 0.0
        %2889 = vmatprep.mubr.f32.mxu0 0.0
        %2890 = vmatmul.mubr.f32.gmra.mrb[0].mxu0 %v2800
        %v2891 = vpop.f32.mrb[0].mxu0
        %v2892 = vadd.f32 %v2823, %v2891
        %v2893 = vpop.f32.mrb[0].mxu0
        %2894 = vdwg.mxu0
        %v2895 = vmax.f32 %v2892, 0.0
        %v2896 = vld [vmem:[%s1 + $0x1520] sm:$0xff]
        %v2897 = vld [vmem:[%s1 + $0x1530] sm:$0xff]
        %v2898 = vld [vmem:[%s1 + $0x1540] sm:$0xff]
        %v2899 = vld [vmem:[%s1 + $0x1550] sm:$0xff]
        %v2900 = vld [vmem:[%s1 + $0x1560] sm:$0xff]
        %v2901 = vld [vmem:[%s1 + $0x1570] sm:$0xff]
        %v2902 = vld [vmem:[%s1 + $0x1580] sm:$0xff]
        %v2903 = vld [vmem:[%s1 + $0x1590] sm:$0xff]
        %v2904 = vld [vmem:[%s1 + $0x15a0] sm:$0xff]
        %v2905 = vld [vmem:[%s1 + $0x15b0] sm:$0xff]
        %v2906 = vld [vmem:[%s1 + $0x15c0] sm:$0xff]
        %v2907 = vld [vmem:[%s1 + $0x15d0] sm:$0xff]
        %v2908 = vld [vmem:[%s1 + $0x15e0] sm:$0xff]
        %v2909 = vld [vmem:[%s1 + $0x15f0] sm:$0xff]
        %v2910 = vld [vmem:[%s1 + $0x1600] sm:$0xff]
        %v2911 = vld [vmem:[%s1 + $0x1610] sm:$0xff]
        %s2912 = scalar_lea.vmem %s2, 4
        %v2913 = vld [vmem:[%s2912] ss:$8 sm:$0x3]
        %v2915 = vlaneseq
        %v2916 = vshrl.u32 %v2915, 7
        %v2917 = vsub.s32 0, %v2916
        %v2918 = vrot.slane %v2913, %v2917
        %2920 = vmatprep.subr.mxu0 0.0
        %2921 = vmatpush1.msra.mxu0 %v2896
        %2922 = vmatprep.subr.mxu0 0.0
        %2923 = vmatpush1.msra.mxu0 %v2897
        %2924 = vmatprep.subr.mxu0 0.0
        %2925 = vmatpush1.msra.mxu0 %v2898
        %2926 = vmatprep.subr.mxu0 0.0
        %2927 = vmatpush1.msra.mxu0 %v2899
        %2928 = vmatprep.subr.mxu0 0.0
        %2929 = vmatpush1.msra.mxu0 %v2900
        %2930 = vmatprep.subr.mxu0 0.0
        %2931 = vmatpush1.msra.mxu0 %v2901
        %2932 = vmatprep.subr.mxu0 0.0
        %2933 = vmatpush1.msra.mxu0 %v2902
        %2934 = vmatprep.subr.mxu0 0.0
        %2935 = vmatpush1.msra.mxu0 %v2903
        %2936 = vmatprep.subr.mxu0 0.0
        %2937 = vmatpush1.msra.mxu0 %v2904
        %2938 = vmatprep.subr.mxu0 0.0
        %2939 = vmatpush1.msra.mxu0 %v2905
        %2940 = vmatprep.subr.mxu0 0.0
        %2941 = vmatpush1.msra.mxu0 %v2906
        %2942 = vmatprep.subr.mxu0 0.0
        %2943 = vmatpush1.msra.mxu0 %v2907
        %2944 = vmatprep.subr.mxu0 0.0
        %2945 = vmatpush1.msra.mxu0 %v2908
        %2946 = vmatprep.subr.mxu0 0.0
        %2947 = vmatpush1.msra.mxu0 %v2909
        %2948 = vmatprep.subr.mxu0 0.0
        %2949 = vmatpush1.msra.mxu0 %v2910
        %2950 = vmatprep.subr.mxu0 0.0
        %2951 = vmatpush1.msra.mxu0 %v2911
        %2952 = vmatprep.subr.mxu0 0.0
        %2953 = vmatpush1.msra.mxu0 0.0
        %2954 = vmatprep.subr.mxu0 0.0
        %2955 = vmatpush1.msra.mxu0 0.0
        %2956 = vmatprep.subr.mxu0 0.0
        %2957 = vmatpush1.msra.mxu0 0.0
        %2958 = vmatprep.subr.mxu0 0.0
        %2959 = vmatpush1.msra.mxu0 0.0
        %2960 = vmatprep.subr.mxu0 0.0
        %2961 = vmatpush1.msra.mxu0 0.0
        %2962 = vmatprep.subr.mxu0 0.0
        %2963 = vmatpush1.msra.mxu0 0.0
        %2964 = vmatprep.subr.mxu0 0.0
        %2965 = vmatpush1.msra.mxu0 0.0
        %2966 = vmatprep.subr.mxu0 0.0
        %2967 = vmatpush1.msra.mxu0 0.0
        %2968 = vmatprep.subr.mxu0 0.0
        %2969 = vmatpush1.msra.mxu0 0.0
        %2970 = vmatprep.subr.mxu0 0.0
        %2971 = vmatpush1.msra.mxu0 0.0
        %2972 = vmatprep.subr.mxu0 0.0
        %2973 = vmatpush1.msra.mxu0 0.0
        %2974 = vmatprep.subr.mxu0 0.0
        %2975 = vmatpush1.msra.mxu0 0.0
        %2976 = vmatprep.subr.mxu0 0.0
        %2977 = vmatpush1.msra.mxu0 0.0
        %2978 = vmatprep.subr.mxu0 0.0
        %2979 = vmatpush1.msra.mxu0 0.0
        %2980 = vmatprep.subr.mxu0 0.0
        %2981 = vmatpush1.msra.mxu0 0.0
        %2982 = vmatprep.subr.mxu0 0.0
        %2983 = vmatpush1.msra.mxu0 0.0
        %2984 = vmatprep.mubr.f32.mxu0 0.0
        %2985 = vmatmul.mubr.f32.gmra.mrb[0].mxu0 %v2895
        %v2986 = vpop.f32.mrb[0].mxu0
        %v2987 = vadd.f32 %v2918, %v2986
        %v2988 = vpop.f32.mrb[0].mxu0
        %2989 = vdwg.mxu0
        %2990 = vst [vmem:[%s326] sm:$0xff] %v2987
        %p2991 = scmp.lt.s32.totalorder %s14, 2
        %s2992 = scalar_select %p2991, %s14, 2
        %s2993 = smul.addr %s2992, 8
        %s2994 = scalar_lea.vmem %s3, %s2993
        // Predicated region
        $region71: #{net_forward.1} parent=65 // pred_check
          %p2995 = pneg %p100
        $region72: #{net_forward.1} parent=65 // pred_check_branch
          %2997 = sbr.rel (%p2995) target = $region74
        $region73: #{net_forward.1} parent=65 // pred_region
          _
        $region74: #{net_forward.1} parent=65 // pred_fallthru
          _
      $region66: #{net_forward.1} parent=5 // pred_fallthru
        _
      %p2998 = scmp.le.s32.totalorder 2, %s9
      // Predicated region
      $region75: #{net_forward.1} parent=5 // pred_check
        %p2999 = pneg %p2998
      $region76: #{net_forward.1} parent=5 // pred_check_branch
        %3001 = sbr.rel (%p2999) target = $region78
      $region77: #{net_forward.1} parent=5 // pred_region
        %s3002 = ssub.s32 %s9, 2
        // Predicated region
        $region79: #{net_forward.1} parent=77 // pred_check
          %p3003 = pneg %p106
        $region80: #{net_forward.1} parent=77 // pred_check_branch
          %3005 = sbr.rel (%p3003) target = $region82
        $region81: #{net_forward.1} parent=77 // pred_region
          %p3006 = scmp.lt.s32.totalorder %s15, 2
          %s3007 = scalar_select %p3006, %s15, 2
          %s3008 = smul.addr %s3007, 8
          %s3009 = scalar_lea.vmem %s3, %s3008
        $region82: #{net_forward.1} parent=77 // pred_fallthru
          _
      $region78: #{net_forward.1} parent=5 // pred_fallthru
        _
    $region6: #{net_forward.1} parent=1 // loop_footer
      %s13 = sadd.s32 1, %s9
    $region7: #{net_forward.1} parent=1 // loop_footer_branch
      %8 = sbr.rel target = $region3
    $region8: #{net_forward.1} parent=1 // loop_exit
      _

</llo_original>
